<compile_context>
chip_gen: v7x
topology: tpu7x:2x2x1
jax: 0.10.0
libtpu: 0.0.40
codegen_flags: <defaults>
</compile_context>

<pallas_src>
import functools
import math

import jax
import jax.numpy as jnp
from jax.experimental import pallas as pl
from jax.experimental.pallas import tpu as pltpu


# ------------------------------ Fused kernel ------------------------------- #

def _fused_attn_kernel(x_ref, wqkv_ref, wproj_ref, bproj_ref, o_ref, *,
                       num_heads, batch, seq):
    # x_ref:     (B*N, C)   activations, batch*seq flattened on the row (M) axis
    # wqkv_ref:  (C, 3C)    transposed qkv weight, softmax scale folded into q cols
    # wproj_ref: (C, C)     transposed proj weight
    # bproj_ref: (1, C)     proj bias
    # o_ref:     (B*N, C)
    x = x_ref[...]
    rows, C = x.shape
    H = num_heads
    D = C // H
    in_dtype = x.dtype

    # Packed QKV matmul over all B*N rows: one MXU pass, lane-dense 3C output,
    # f32 accumulation, operands stay in the input dtype.
    qkv = jnp.dot(x, wqkv_ref[...],
                  preferred_element_type=jnp.float32).astype(in_dtype)       # (B*N, 3C)

    wproj = wproj_ref[...]                                                    # (C, C)
    bias = bproj_ref[...].astype(jnp.float32)                                 # (1, C)
    # f32 accumulator initialized with the (broadcast) bias -- hoisted out of loop.
    acc = jnp.broadcast_to(bias, (rows, C))                                   # (B*N, C)

    # Static head loop; each head processes ALL batches via a batched dot_general
    # (leading batch dim), so there is no per-(b,h) grid step, no k.T and no
    # head-concat on the lane axis.
    for h in range(H):
        q = qkv[:, h * D:(h + 1) * D].reshape(batch, seq, D)                  # (B, N, D)
        k = qkv[:, C + h * D:C + (h + 1) * D].reshape(batch, seq, D)
        v = qkv[:, 2 * C + h * D:2 * C + (h + 1) * D].reshape(batch, seq, D)

        # Scores: contraction on D of BOTH operands (no explicit transpose).
        s = jnp.einsum("bnd,bmd->bnm", q, k,
                       preferred_element_type=jnp.float32)                    # (B, N, N)
        s = s - jnp.max(s, axis=-1, keepdims=True)
        p = jnp.exp(s)
        l = jnp.sum(p, axis=-1, keepdims=True)                                # (B, N, 1)

        o_h = jnp.einsum("bnm,bmd->bnd", p.astype(in_dtype), v,
                         preferred_element_type=jnp.float32)                  # (B, N, D)
        # Normalize the small (N, D) output instead of the (N, N) weights; exact
        # divide so the result matches the reference tightly.
        o_h = (o_h / l).reshape(rows, D).astype(in_dtype)                     # (B*N, D)

        # Per-head output projection: D-row (sublane-aligned) slice of the proj
        # weight, accumulated into the f32 output -- replaces the lane concat.
        acc = acc + jnp.dot(o_h, wproj[h * D:(h + 1) * D, :],
                            preferred_element_type=jnp.float32)

    o_ref[...] = acc.astype(o_ref.dtype)


# ------------------------------ Host wrapper ------------------------------- #

def attention_forward(x, params, num_heads):
    """Full forward pass of the PyTorch Attention module (dropout p=0 -> identity).

    `mask` of the original module is unused in the non-xformers branch.
    """
    B, N, C = x.shape
    D = C // num_heads
    scale = D ** (-0.5)
    C3 = 3 * C
    BN = B * N

    w_qkv_t = params["w_qkv_t"]             # (C, 3C)
    w_proj_t = params["w_proj_t"]           # (C, C)
    b_proj = params["b_proj"].reshape(1, C)

    # Fold the softmax scale into the q-columns of the qkv weight (one-time,
    # runtime-free constant transform; removes the in-kernel q*scale multiply).
    col_scale = jnp.concatenate(
        [jnp.full((C,), scale, w_qkv_t.dtype),
         jnp.ones((2 * C,), w_qkv_t.dtype)])
    w_qkv_scaled = w_qkv_t * col_scale[None, :]

    # Flatten batch*seq on the row axis (free host-side reshape) so the QKV / proj
    # matmuls run with M = B*N rows in a single grid step.
    x2 = x.reshape(BN, C)

    kern = functools.partial(_fused_attn_kernel,
                             num_heads=num_heads, batch=B, seq=N)

    out = pl.pallas_call(
        kern,
        out_shape=jax.ShapeDtypeStruct((BN, C), x.dtype),
        grid_spec=pltpu.PrefetchScalarGridSpec(
            num_scalar_prefetch=0,
            grid=(1,),
            in_specs=[
                pl.BlockSpec((BN, C), lambda i: (0, 0)),     # activations
                pl.BlockSpec((C, C3), lambda i: (0, 0)),     # qkv weight (scale folded)
                pl.BlockSpec((C, C), lambda i: (0, 0)),      # proj weight
                pl.BlockSpec((1, C), lambda i: (0, 0)),      # proj bias
            ],
            out_specs=pl.BlockSpec((BN, C), lambda i: (0, 0)),
        ),
        compiler_params=pltpu.CompilerParams(
            dimension_semantics=("arbitrary",),
            # Explicit scoped-VMEM budget (tiny here; generous headroom, still well
            # below physical VMEM on v5e/v6e/v7x).
            vmem_limit_bytes=32 * 1024 * 1024,
        ),
    )(x2, w_qkv_scaled, w_proj_t, b_proj)
    return out.reshape(B, N, C)


# ------------------------------ Param init --------------------------------- #

def init_params(key, dim):
    k1, k2, k3 = jax.random.split(key, 3)
    # nn.Linear default init ~ U(-1/sqrt(fan_in), 1/sqrt(fan_in)); deterministic here.
    bound = 1.0 / math.sqrt(dim)
    w_qkv = jax.random.uniform(k1, (3 * dim, dim), jnp.float32, -bound, bound)
    w_proj = jax.random.uniform(k2, (dim, dim), jnp.float32, -bound, bound)
    b_proj = jax.random.uniform(k3, (dim,), jnp.float32, -bound, bound)
    # Store transposed weights so kernels do x @ W^T as a plain row-major matmul.
    return {"w_qkv_t": w_qkv.T, "w_proj_t": w_proj.T, "b_proj": b_proj}


# --------------------------------- Main ------------------------------------ #

if __name__ == "__main__":
    B, N, C, H = 2, 16, 64, 8          # head_dim = 8
    key = jax.random.PRNGKey(0)
    kx, kp = jax.random.split(key)

    x = jax.random.normal(kx, (B, N, C), jnp.float32)
    params = init_params(kp, C)

    out = attention_forward(x, params, num_heads=H)
    out = jax.block_until_ready(out)

    # Cross-check against a pure-JAX reference of the same math (scale applied to
    # the scores, exactly as in the PyTorch module).
    qkv = (x @ params["w_qkv_t"]).reshape(B, N, 3, H, C // H).transpose(2, 0, 3, 1, 4)
    q, k, v = qkv[0], qkv[1], qkv[2]
    s = jnp.einsum("bhnd,bhmd->bhnm", q, k) * ((C // H) ** -0.5)
    p = jax.nn.softmax(s, axis=-1)
    ref = jnp.einsum("bhnm,bhmd->bhnd", p, v).transpose(0, 2, 1, 3).reshape(B, N, C)
    ref = ref @ params["w_proj_t"] + params["b_proj"]

    assert not bool(jnp.any(jnp.isnan(out))), "NaNs in kernel output"
    assert jnp.allclose(out, ref, atol=1e-3, rtol=1e-3), "mismatch vs reference"

    print("KERNEL_OK")
</pallas_src>

<mosaic_0001>
module attributes {stable_mosaic.version = 11 : i64} {
  func.func @_fused_attn_kernel(%arg0: i32, %arg1: memref<32x64xf32, #tpu.memory_space<vmem>>, %arg2: memref<64x192xf32, #tpu.memory_space<vmem>>, %arg3: memref<64x64xf32, #tpu.memory_space<vmem>>, %arg4: memref<1x64xf32, #tpu.memory_space<vmem>>, %arg5: memref<32x64xf32, #tpu.memory_space<vmem>>) attributes {dimension_semantics = [#tpu.dimension_semantics<arbitrary>], iteration_bounds = array<i64: 1>, scalar_prefetch = 0 : i64, scratch_operands = 0 : i64, tpu.core_type = #tpu.core_type<tc>, window_params = [{pipeline_mode = #tpu.pipeline_mode<synchronous>, transform_indices = @transform_0, window_bounds = array<i64: 32, 64>}, {pipeline_mode = #tpu.pipeline_mode<synchronous>, transform_indices = @transform_1, window_bounds = array<i64: 64, 192>}, {pipeline_mode = #tpu.pipeline_mode<synchronous>, transform_indices = @transform_2, window_bounds = array<i64: 64, 64>}, {pipeline_mode = #tpu.pipeline_mode<synchronous>, transform_indices = @transform_3, window_bounds = array<i64: 1, 64>}, {pipeline_mode = #tpu.pipeline_mode<synchronous>, transform_indices = @transform_4, window_bounds = array<i64: 32, 64>}]} {
    %c0 = arith.constant 0 : index
    %c0_0 = arith.constant 0 : index
    %0 = vector.load %arg1[%c0, %c0_0] : memref<32x64xf32, #tpu.memory_space<vmem>>, vector<32x64xf32>
    %c0_1 = arith.constant 0 : index
    %c0_2 = arith.constant 0 : index
    %1 = vector.load %arg2[%c0_1, %c0_2] : memref<64x192xf32, #tpu.memory_space<vmem>>, vector<64x192xf32>
    %cst = arith.constant dense<0.000000e+00> : vector<32x192xf32>
    %2 = tpu.matmul %0, %1, %cst {dimension_numbers = #tpu.dot_dimension_numbers<[1], [0], [0], [1], [0, 0, 1, 1], [], []>} : vector<32x64xf32>, vector<64x192xf32>, vector<32x192xf32> -> vector<32x192xf32>
    %c0_3 = arith.constant 0 : index
    %c0_4 = arith.constant 0 : index
    %3 = vector.load %arg3[%c0_3, %c0_4] : memref<64x64xf32, #tpu.memory_space<vmem>>, vector<64x64xf32>
    %c0_5 = arith.constant 0 : index
    %c0_6 = arith.constant 0 : index
    %4 = vector.load %arg4[%c0_5, %c0_6] : memref<1x64xf32, #tpu.memory_space<vmem>>, vector<1x64xf32>
    %5 = vector.shape_cast %4 : vector<1x64xf32> to vector<1x64xf32>
    %6 = vector.broadcast %5 : vector<1x64xf32> to vector<32x64xf32>
    %7 = vector.extract_strided_slice %2 {offsets = [0, 0], sizes = [32, 8], strides = [1, 1]} : vector<32x192xf32> to vector<32x8xf32>
    %8 = vector.shape_cast %7 : vector<32x8xf32> to vector<2x16x8xf32>
    %9 = vector.extract_strided_slice %2 {offsets = [0, 64], sizes = [32, 8], strides = [1, 1]} : vector<32x192xf32> to vector<32x8xf32>
    %10 = vector.shape_cast %9 : vector<32x8xf32> to vector<2x16x8xf32>
    %11 = vector.extract_strided_slice %2 {offsets = [0, 128], sizes = [32, 8], strides = [1, 1]} : vector<32x192xf32> to vector<32x8xf32>
    %12 = vector.shape_cast %11 : vector<32x8xf32> to vector<2x16x8xf32>
    "tpu.trace_start"() <{level = 10 : i32, message = "bnd,bmd->bnm"}> : () -> ()
    %cst_7 = arith.constant dense<0.000000e+00> : vector<2x16x16xf32>
    %13 = tpu.matmul %8, %10, %cst_7 {dimension_numbers = #tpu.dot_dimension_numbers<[2], [2], [1], [1], [0, 0, 0, 1, 1, 1], [0], [0]>} : vector<2x16x8xf32>, vector<2x16x8xf32>, vector<2x16x16xf32> -> vector<2x16x16xf32>
    "tpu.trace_stop"() : () -> ()
    %cst_8 = arith.constant dense<0xFF800000> : vector<2x16xf32>
    %14 = vector.multi_reduction <maximumf>, %13, %cst_8 [2] : vector<2x16x16xf32> to vector<2x16xf32>
    %15 = vector.shape_cast %14 : vector<2x16xf32> to vector<2x16x1xf32>
    %16 = vector.broadcast %15 : vector<2x16x1xf32> to vector<2x16x16xf32>
    %17 = arith.subf %13, %16 : vector<2x16x16xf32>
    %18 = math.exp %17 : vector<2x16x16xf32>
    %cst_9 = arith.constant dense<0.000000e+00> : vector<2x16xf32>
    %19 = vector.multi_reduction <add>, %18, %cst_9 [2] : vector<2x16x16xf32> to vector<2x16xf32>
    %20 = vector.shape_cast %19 : vector<2x16xf32> to vector<2x16x1xf32>
    "tpu.trace_start"() <{level = 10 : i32, message = "bnm,bmd->bnd"}> : () -> ()
    %cst_10 = arith.constant dense<0.000000e+00> : vector<2x16x8xf32>
    %21 = tpu.matmul %18, %12, %cst_10 {dimension_numbers = #tpu.dot_dimension_numbers<[2], [1], [1], [2], [0, 0, 0, 1, 1, 2], [0], [0]>} : vector<2x16x16xf32>, vector<2x16x8xf32>, vector<2x16x8xf32> -> vector<2x16x8xf32>
    "tpu.trace_stop"() : () -> ()
    %22 = vector.broadcast %20 : vector<2x16x1xf32> to vector<2x16x8xf32>
    %23 = arith.divf %21, %22 : vector<2x16x8xf32>
    %24 = vector.shape_cast %23 : vector<2x16x8xf32> to vector<32x8xf32>
    %25 = vector.extract_strided_slice %3 {offsets = [0, 0], sizes = [8, 64], strides = [1, 1]} : vector<64x64xf32> to vector<8x64xf32>
    %cst_11 = arith.constant dense<0.000000e+00> : vector<32x64xf32>
    %26 = tpu.matmul %24, %25, %cst_11 {dimension_numbers = #tpu.dot_dimension_numbers<[1], [0], [0], [1], [0, 0, 1, 1], [], []>} : vector<32x8xf32>, vector<8x64xf32>, vector<32x64xf32> -> vector<32x64xf32>
    %27 = arith.addf %6, %26 : vector<32x64xf32>
    %28 = vector.extract_strided_slice %2 {offsets = [0, 8], sizes = [32, 8], strides = [1, 1]} : vector<32x192xf32> to vector<32x8xf32>
    %29 = vector.shape_cast %28 : vector<32x8xf32> to vector<2x16x8xf32>
    %30 = vector.extract_strided_slice %2 {offsets = [0, 72], sizes = [32, 8], strides = [1, 1]} : vector<32x192xf32> to vector<32x8xf32>
    %31 = vector.shape_cast %30 : vector<32x8xf32> to vector<2x16x8xf32>
    %32 = vector.extract_strided_slice %2 {offsets = [0, 136], sizes = [32, 8], strides = [1, 1]} : vector<32x192xf32> to vector<32x8xf32>
    %33 = vector.shape_cast %32 : vector<32x8xf32> to vector<2x16x8xf32>
    "tpu.trace_start"() <{level = 10 : i32, message = "bnd,bmd->bnm"}> : () -> ()
    %cst_12 = arith.constant dense<0.000000e+00> : vector<2x16x16xf32>
    %34 = tpu.matmul %29, %31, %cst_12 {dimension_numbers = #tpu.dot_dimension_numbers<[2], [2], [1], [1], [0, 0, 0, 1, 1, 1], [0], [0]>} : vector<2x16x8xf32>, vector<2x16x8xf32>, vector<2x16x16xf32> -> vector<2x16x16xf32>
    "tpu.trace_stop"() : () -> ()
    %cst_13 = arith.constant dense<0xFF800000> : vector<2x16xf32>
    %35 = vector.multi_reduction <maximumf>, %34, %cst_13 [2] : vector<2x16x16xf32> to vector<2x16xf32>
    %36 = vector.shape_cast %35 : vector<2x16xf32> to vector<2x16x1xf32>
    %37 = vector.broadcast %36 : vector<2x16x1xf32> to vector<2x16x16xf32>
    %38 = arith.subf %34, %37 : vector<2x16x16xf32>
    %39 = math.exp %38 : vector<2x16x16xf32>
    %cst_14 = arith.constant dense<0.000000e+00> : vector<2x16xf32>
    %40 = vector.multi_reduction <add>, %39, %cst_14 [2] : vector<2x16x16xf32> to vector<2x16xf32>
    %41 = vector.shape_cast %40 : vector<2x16xf32> to vector<2x16x1xf32>
    "tpu.trace_start"() <{level = 10 : i32, message = "bnm,bmd->bnd"}> : () -> ()
    %cst_15 = arith.constant dense<0.000000e+00> : vector<2x16x8xf32>
    %42 = tpu.matmul %39, %33, %cst_15 {dimension_numbers = #tpu.dot_dimension_numbers<[2], [1], [1], [2], [0, 0, 0, 1, 1, 2], [0], [0]>} : vector<2x16x16xf32>, vector<2x16x8xf32>, vector<2x16x8xf32> -> vector<2x16x8xf32>
    "tpu.trace_stop"() : () -> ()
    %43 = vector.broadcast %41 : vector<2x16x1xf32> to vector<2x16x8xf32>
    %44 = arith.divf %42, %43 : vector<2x16x8xf32>
    %45 = vector.shape_cast %44 : vector<2x16x8xf32> to vector<32x8xf32>
    %46 = vector.extract_strided_slice %3 {offsets = [8, 0], sizes = [8, 64], strides = [1, 1]} : vector<64x64xf32> to vector<8x64xf32>
    %cst_16 = arith.constant dense<0.000000e+00> : vector<32x64xf32>
    %47 = tpu.matmul %45, %46, %cst_16 {dimension_numbers = #tpu.dot_dimension_numbers<[1], [0], [0], [1], [0, 0, 1, 1], [], []>} : vector<32x8xf32>, vector<8x64xf32>, vector<32x64xf32> -> vector<32x64xf32>
    %48 = arith.addf %27, %47 : vector<32x64xf32>
    %49 = vector.extract_strided_slice %2 {offsets = [0, 16], sizes = [32, 8], strides = [1, 1]} : vector<32x192xf32> to vector<32x8xf32>
    %50 = vector.shape_cast %49 : vector<32x8xf32> to vector<2x16x8xf32>
    %51 = vector.extract_strided_slice %2 {offsets = [0, 80], sizes = [32, 8], strides = [1, 1]} : vector<32x192xf32> to vector<32x8xf32>
    %52 = vector.shape_cast %51 : vector<32x8xf32> to vector<2x16x8xf32>
    %53 = vector.extract_strided_slice %2 {offsets = [0, 144], sizes = [32, 8], strides = [1, 1]} : vector<32x192xf32> to vector<32x8xf32>
    %54 = vector.shape_cast %53 : vector<32x8xf32> to vector<2x16x8xf32>
    "tpu.trace_start"() <{level = 10 : i32, message = "bnd,bmd->bnm"}> : () -> ()
    %cst_17 = arith.constant dense<0.000000e+00> : vector<2x16x16xf32>
    %55 = tpu.matmul %50, %52, %cst_17 {dimension_numbers = #tpu.dot_dimension_numbers<[2], [2], [1], [1], [0, 0, 0, 1, 1, 1], [0], [0]>} : vector<2x16x8xf32>, vector<2x16x8xf32>, vector<2x16x16xf32> -> vector<2x16x16xf32>
    "tpu.trace_stop"() : () -> ()
    %cst_18 = arith.constant dense<0xFF800000> : vector<2x16xf32>
    %56 = vector.multi_reduction <maximumf>, %55, %cst_18 [2] : vector<2x16x16xf32> to vector<2x16xf32>
    %57 = vector.shape_cast %56 : vector<2x16xf32> to vector<2x16x1xf32>
    %58 = vector.broadcast %57 : vector<2x16x1xf32> to vector<2x16x16xf32>
    %59 = arith.subf %55, %58 : vector<2x16x16xf32>
    %60 = math.exp %59 : vector<2x16x16xf32>
    %cst_19 = arith.constant dense<0.000000e+00> : vector<2x16xf32>
    %61 = vector.multi_reduction <add>, %60, %cst_19 [2] : vector<2x16x16xf32> to vector<2x16xf32>
    %62 = vector.shape_cast %61 : vector<2x16xf32> to vector<2x16x1xf32>
    "tpu.trace_start"() <{level = 10 : i32, message = "bnm,bmd->bnd"}> : () -> ()
    %cst_20 = arith.constant dense<0.000000e+00> : vector<2x16x8xf32>
    %63 = tpu.matmul %60, %54, %cst_20 {dimension_numbers = #tpu.dot_dimension_numbers<[2], [1], [1], [2], [0, 0, 0, 1, 1, 2], [0], [0]>} : vector<2x16x16xf32>, vector<2x16x8xf32>, vector<2x16x8xf32> -> vector<2x16x8xf32>
    "tpu.trace_stop"() : () -> ()
    %64 = vector.broadcast %62 : vector<2x16x1xf32> to vector<2x16x8xf32>
    %65 = arith.divf %63, %64 : vector<2x16x8xf32>
    %66 = vector.shape_cast %65 : vector<2x16x8xf32> to vector<32x8xf32>
    %67 = vector.extract_strided_slice %3 {offsets = [16, 0], sizes = [8, 64], strides = [1, 1]} : vector<64x64xf32> to vector<8x64xf32>
    %cst_21 = arith.constant dense<0.000000e+00> : vector<32x64xf32>
    %68 = tpu.matmul %66, %67, %cst_21 {dimension_numbers = #tpu.dot_dimension_numbers<[1], [0], [0], [1], [0, 0, 1, 1], [], []>} : vector<32x8xf32>, vector<8x64xf32>, vector<32x64xf32> -> vector<32x64xf32>
    %69 = arith.addf %48, %68 : vector<32x64xf32>
    %70 = vector.extract_strided_slice %2 {offsets = [0, 24], sizes = [32, 8], strides = [1, 1]} : vector<32x192xf32> to vector<32x8xf32>
    %71 = vector.shape_cast %70 : vector<32x8xf32> to vector<2x16x8xf32>
    %72 = vector.extract_strided_slice %2 {offsets = [0, 88], sizes = [32, 8], strides = [1, 1]} : vector<32x192xf32> to vector<32x8xf32>
    %73 = vector.shape_cast %72 : vector<32x8xf32> to vector<2x16x8xf32>
    %74 = vector.extract_strided_slice %2 {offsets = [0, 152], sizes = [32, 8], strides = [1, 1]} : vector<32x192xf32> to vector<32x8xf32>
    %75 = vector.shape_cast %74 : vector<32x8xf32> to vector<2x16x8xf32>
    "tpu.trace_start"() <{level = 10 : i32, message = "bnd,bmd->bnm"}> : () -> ()
    %cst_22 = arith.constant dense<0.000000e+00> : vector<2x16x16xf32>
    %76 = tpu.matmul %71, %73, %cst_22 {dimension_numbers = #tpu.dot_dimension_numbers<[2], [2], [1], [1], [0, 0, 0, 1, 1, 1], [0], [0]>} : vector<2x16x8xf32>, vector<2x16x8xf32>, vector<2x16x16xf32> -> vector<2x16x16xf32>
    "tpu.trace_stop"() : () -> ()
    %cst_23 = arith.constant dense<0xFF800000> : vector<2x16xf32>
    %77 = vector.multi_reduction <maximumf>, %76, %cst_23 [2] : vector<2x16x16xf32> to vector<2x16xf32>
    %78 = vector.shape_cast %77 : vector<2x16xf32> to vector<2x16x1xf32>
    %79 = vector.broadcast %78 : vector<2x16x1xf32> to vector<2x16x16xf32>
    %80 = arith.subf %76, %79 : vector<2x16x16xf32>
    %81 = math.exp %80 : vector<2x16x16xf32>
    %cst_24 = arith.constant dense<0.000000e+00> : vector<2x16xf32>
    %82 = vector.multi_reduction <add>, %81, %cst_24 [2] : vector<2x16x16xf32> to vector<2x16xf32>
    %83 = vector.shape_cast %82 : vector<2x16xf32> to vector<2x16x1xf32>
    "tpu.trace_start"() <{level = 10 : i32, message = "bnm,bmd->bnd"}> : () -> ()
    %cst_25 = arith.constant dense<0.000000e+00> : vector<2x16x8xf32>
    %84 = tpu.matmul %81, %75, %cst_25 {dimension_numbers = #tpu.dot_dimension_numbers<[2], [1], [1], [2], [0, 0, 0, 1, 1, 2], [0], [0]>} : vector<2x16x16xf32>, vector<2x16x8xf32>, vector<2x16x8xf32> -> vector<2x16x8xf32>
    "tpu.trace_stop"() : () -> ()
    %85 = vector.broadcast %83 : vector<2x16x1xf32> to vector<2x16x8xf32>
    %86 = arith.divf %84, %85 : vector<2x16x8xf32>
    %87 = vector.shape_cast %86 : vector<2x16x8xf32> to vector<32x8xf32>
    %88 = vector.extract_strided_slice %3 {offsets = [24, 0], sizes = [8, 64], strides = [1, 1]} : vector<64x64xf32> to vector<8x64xf32>
    %cst_26 = arith.constant dense<0.000000e+00> : vector<32x64xf32>
    %89 = tpu.matmul %87, %88, %cst_26 {dimension_numbers = #tpu.dot_dimension_numbers<[1], [0], [0], [1], [0, 0, 1, 1], [], []>} : vector<32x8xf32>, vector<8x64xf32>, vector<32x64xf32> -> vector<32x64xf32>
    %90 = arith.addf %69, %89 : vector<32x64xf32>
    %91 = vector.extract_strided_slice %2 {offsets = [0, 32], sizes = [32, 8], strides = [1, 1]} : vector<32x192xf32> to vector<32x8xf32>
    %92 = vector.shape_cast %91 : vector<32x8xf32> to vector<2x16x8xf32>
    %93 = vector.extract_strided_slice %2 {offsets = [0, 96], sizes = [32, 8], strides = [1, 1]} : vector<32x192xf32> to vector<32x8xf32>
    %94 = vector.shape_cast %93 : vector<32x8xf32> to vector<2x16x8xf32>
    %95 = vector.extract_strided_slice %2 {offsets = [0, 160], sizes = [32, 8], strides = [1, 1]} : vector<32x192xf32> to vector<32x8xf32>
    %96 = vector.shape_cast %95 : vector<32x8xf32> to vector<2x16x8xf32>
    "tpu.trace_start"() <{level = 10 : i32, message = "bnd,bmd->bnm"}> : () -> ()
    %cst_27 = arith.constant dense<0.000000e+00> : vector<2x16x16xf32>
    %97 = tpu.matmul %92, %94, %cst_27 {dimension_numbers = #tpu.dot_dimension_numbers<[2], [2], [1], [1], [0, 0, 0, 1, 1, 1], [0], [0]>} : vector<2x16x8xf32>, vector<2x16x8xf32>, vector<2x16x16xf32> -> vector<2x16x16xf32>
    "tpu.trace_stop"() : () -> ()
    %cst_28 = arith.constant dense<0xFF800000> : vector<2x16xf32>
    %98 = vector.multi_reduction <maximumf>, %97, %cst_28 [2] : vector<2x16x16xf32> to vector<2x16xf32>
    %99 = vector.shape_cast %98 : vector<2x16xf32> to vector<2x16x1xf32>
    %100 = vector.broadcast %99 : vector<2x16x1xf32> to vector<2x16x16xf32>
    %101 = arith.subf %97, %100 : vector<2x16x16xf32>
    %102 = math.exp %101 : vector<2x16x16xf32>
    %cst_29 = arith.constant dense<0.000000e+00> : vector<2x16xf32>
    %103 = vector.multi_reduction <add>, %102, %cst_29 [2] : vector<2x16x16xf32> to vector<2x16xf32>
    %104 = vector.shape_cast %103 : vector<2x16xf32> to vector<2x16x1xf32>
    "tpu.trace_start"() <{level = 10 : i32, message = "bnm,bmd->bnd"}> : () -> ()
    %cst_30 = arith.constant dense<0.000000e+00> : vector<2x16x8xf32>
    %105 = tpu.matmul %102, %96, %cst_30 {dimension_numbers = #tpu.dot_dimension_numbers<[2], [1], [1], [2], [0, 0, 0, 1, 1, 2], [0], [0]>} : vector<2x16x16xf32>, vector<2x16x8xf32>, vector<2x16x8xf32> -> vector<2x16x8xf32>
    "tpu.trace_stop"() : () -> ()
    %106 = vector.broadcast %104 : vector<2x16x1xf32> to vector<2x16x8xf32>
    %107 = arith.divf %105, %106 : vector<2x16x8xf32>
    %108 = vector.shape_cast %107 : vector<2x16x8xf32> to vector<32x8xf32>
    %109 = vector.extract_strided_slice %3 {offsets = [32, 0], sizes = [8, 64], strides = [1, 1]} : vector<64x64xf32> to vector<8x64xf32>
    %cst_31 = arith.constant dense<0.000000e+00> : vector<32x64xf32>
    %110 = tpu.matmul %108, %109, %cst_31 {dimension_numbers = #tpu.dot_dimension_numbers<[1], [0], [0], [1], [0, 0, 1, 1], [], []>} : vector<32x8xf32>, vector<8x64xf32>, vector<32x64xf32> -> vector<32x64xf32>
    %111 = arith.addf %90, %110 : vector<32x64xf32>
    %112 = vector.extract_strided_slice %2 {offsets = [0, 40], sizes = [32, 8], strides = [1, 1]} : vector<32x192xf32> to vector<32x8xf32>
    %113 = vector.shape_cast %112 : vector<32x8xf32> to vector<2x16x8xf32>
    %114 = vector.extract_strided_slice %2 {offsets = [0, 104], sizes = [32, 8], strides = [1, 1]} : vector<32x192xf32> to vector<32x8xf32>
    %115 = vector.shape_cast %114 : vector<32x8xf32> to vector<2x16x8xf32>
    %116 = vector.extract_strided_slice %2 {offsets = [0, 168], sizes = [32, 8], strides = [1, 1]} : vector<32x192xf32> to vector<32x8xf32>
    %117 = vector.shape_cast %116 : vector<32x8xf32> to vector<2x16x8xf32>
    "tpu.trace_start"() <{level = 10 : i32, message = "bnd,bmd->bnm"}> : () -> ()
    %cst_32 = arith.constant dense<0.000000e+00> : vector<2x16x16xf32>
    %118 = tpu.matmul %113, %115, %cst_32 {dimension_numbers = #tpu.dot_dimension_numbers<[2], [2], [1], [1], [0, 0, 0, 1, 1, 1], [0], [0]>} : vector<2x16x8xf32>, vector<2x16x8xf32>, vector<2x16x16xf32> -> vector<2x16x16xf32>
    "tpu.trace_stop"() : () -> ()
    %cst_33 = arith.constant dense<0xFF800000> : vector<2x16xf32>
    %119 = vector.multi_reduction <maximumf>, %118, %cst_33 [2] : vector<2x16x16xf32> to vector<2x16xf32>
    %120 = vector.shape_cast %119 : vector<2x16xf32> to vector<2x16x1xf32>
    %121 = vector.broadcast %120 : vector<2x16x1xf32> to vector<2x16x16xf32>
    %122 = arith.subf %118, %121 : vector<2x16x16xf32>
    %123 = math.exp %122 : vector<2x16x16xf32>
    %cst_34 = arith.constant dense<0.000000e+00> : vector<2x16xf32>
    %124 = vector.multi_reduction <add>, %123, %cst_34 [2] : vector<2x16x16xf32> to vector<2x16xf32>
    %125 = vector.shape_cast %124 : vector<2x16xf32> to vector<2x16x1xf32>
    "tpu.trace_start"() <{level = 10 : i32, message = "bnm,bmd->bnd"}> : () -> ()
    %cst_35 = arith.constant dense<0.000000e+00> : vector<2x16x8xf32>
    %126 = tpu.matmul %123, %117, %cst_35 {dimension_numbers = #tpu.dot_dimension_numbers<[2], [1], [1], [2], [0, 0, 0, 1, 1, 2], [0], [0]>} : vector<2x16x16xf32>, vector<2x16x8xf32>, vector<2x16x8xf32> -> vector<2x16x8xf32>
    "tpu.trace_stop"() : () -> ()
    %127 = vector.broadcast %125 : vector<2x16x1xf32> to vector<2x16x8xf32>
    %128 = arith.divf %126, %127 : vector<2x16x8xf32>
    %129 = vector.shape_cast %128 : vector<2x16x8xf32> to vector<32x8xf32>
    %130 = vector.extract_strided_slice %3 {offsets = [40, 0], sizes = [8, 64], strides = [1, 1]} : vector<64x64xf32> to vector<8x64xf32>
    %cst_36 = arith.constant dense<0.000000e+00> : vector<32x64xf32>
    %131 = tpu.matmul %129, %130, %cst_36 {dimension_numbers = #tpu.dot_dimension_numbers<[1], [0], [0], [1], [0, 0, 1, 1], [], []>} : vector<32x8xf32>, vector<8x64xf32>, vector<32x64xf32> -> vector<32x64xf32>
    %132 = arith.addf %111, %131 : vector<32x64xf32>
    %133 = vector.extract_strided_slice %2 {offsets = [0, 48], sizes = [32, 8], strides = [1, 1]} : vector<32x192xf32> to vector<32x8xf32>
    %134 = vector.shape_cast %133 : vector<32x8xf32> to vector<2x16x8xf32>
    %135 = vector.extract_strided_slice %2 {offsets = [0, 112], sizes = [32, 8], strides = [1, 1]} : vector<32x192xf32> to vector<32x8xf32>
    %136 = vector.shape_cast %135 : vector<32x8xf32> to vector<2x16x8xf32>
    %137 = vector.extract_strided_slice %2 {offsets = [0, 176], sizes = [32, 8], strides = [1, 1]} : vector<32x192xf32> to vector<32x8xf32>
    %138 = vector.shape_cast %137 : vector<32x8xf32> to vector<2x16x8xf32>
    "tpu.trace_start"() <{level = 10 : i32, message = "bnd,bmd->bnm"}> : () -> ()
    %cst_37 = arith.constant dense<0.000000e+00> : vector<2x16x16xf32>
    %139 = tpu.matmul %134, %136, %cst_37 {dimension_numbers = #tpu.dot_dimension_numbers<[2], [2], [1], [1], [0, 0, 0, 1, 1, 1], [0], [0]>} : vector<2x16x8xf32>, vector<2x16x8xf32>, vector<2x16x16xf32> -> vector<2x16x16xf32>
    "tpu.trace_stop"() : () -> ()
    %cst_38 = arith.constant dense<0xFF800000> : vector<2x16xf32>
    %140 = vector.multi_reduction <maximumf>, %139, %cst_38 [2] : vector<2x16x16xf32> to vector<2x16xf32>
    %141 = vector.shape_cast %140 : vector<2x16xf32> to vector<2x16x1xf32>
    %142 = vector.broadcast %141 : vector<2x16x1xf32> to vector<2x16x16xf32>
    %143 = arith.subf %139, %142 : vector<2x16x16xf32>
    %144 = math.exp %143 : vector<2x16x16xf32>
    %cst_39 = arith.constant dense<0.000000e+00> : vector<2x16xf32>
    %145 = vector.multi_reduction <add>, %144, %cst_39 [2] : vector<2x16x16xf32> to vector<2x16xf32>
    %146 = vector.shape_cast %145 : vector<2x16xf32> to vector<2x16x1xf32>
    "tpu.trace_start"() <{level = 10 : i32, message = "bnm,bmd->bnd"}> : () -> ()
    %cst_40 = arith.constant dense<0.000000e+00> : vector<2x16x8xf32>
    %147 = tpu.matmul %144, %138, %cst_40 {dimension_numbers = #tpu.dot_dimension_numbers<[2], [1], [1], [2], [0, 0, 0, 1, 1, 2], [0], [0]>} : vector<2x16x16xf32>, vector<2x16x8xf32>, vector<2x16x8xf32> -> vector<2x16x8xf32>
    "tpu.trace_stop"() : () -> ()
    %148 = vector.broadcast %146 : vector<2x16x1xf32> to vector<2x16x8xf32>
    %149 = arith.divf %147, %148 : vector<2x16x8xf32>
    %150 = vector.shape_cast %149 : vector<2x16x8xf32> to vector<32x8xf32>
    %151 = vector.extract_strided_slice %3 {offsets = [48, 0], sizes = [8, 64], strides = [1, 1]} : vector<64x64xf32> to vector<8x64xf32>
    %cst_41 = arith.constant dense<0.000000e+00> : vector<32x64xf32>
    %152 = tpu.matmul %150, %151, %cst_41 {dimension_numbers = #tpu.dot_dimension_numbers<[1], [0], [0], [1], [0, 0, 1, 1], [], []>} : vector<32x8xf32>, vector<8x64xf32>, vector<32x64xf32> -> vector<32x64xf32>
    %153 = arith.addf %132, %152 : vector<32x64xf32>
    %154 = vector.extract_strided_slice %2 {offsets = [0, 56], sizes = [32, 8], strides = [1, 1]} : vector<32x192xf32> to vector<32x8xf32>
    %155 = vector.shape_cast %154 : vector<32x8xf32> to vector<2x16x8xf32>
    %156 = vector.extract_strided_slice %2 {offsets = [0, 120], sizes = [32, 8], strides = [1, 1]} : vector<32x192xf32> to vector<32x8xf32>
    %157 = vector.shape_cast %156 : vector<32x8xf32> to vector<2x16x8xf32>
    %158 = vector.extract_strided_slice %2 {offsets = [0, 184], sizes = [32, 8], strides = [1, 1]} : vector<32x192xf32> to vector<32x8xf32>
    %159 = vector.shape_cast %158 : vector<32x8xf32> to vector<2x16x8xf32>
    "tpu.trace_start"() <{level = 10 : i32, message = "bnd,bmd->bnm"}> : () -> ()
    %cst_42 = arith.constant dense<0.000000e+00> : vector<2x16x16xf32>
    %160 = tpu.matmul %155, %157, %cst_42 {dimension_numbers = #tpu.dot_dimension_numbers<[2], [2], [1], [1], [0, 0, 0, 1, 1, 1], [0], [0]>} : vector<2x16x8xf32>, vector<2x16x8xf32>, vector<2x16x16xf32> -> vector<2x16x16xf32>
    "tpu.trace_stop"() : () -> ()
    %cst_43 = arith.constant dense<0xFF800000> : vector<2x16xf32>
    %161 = vector.multi_reduction <maximumf>, %160, %cst_43 [2] : vector<2x16x16xf32> to vector<2x16xf32>
    %162 = vector.shape_cast %161 : vector<2x16xf32> to vector<2x16x1xf32>
    %163 = vector.broadcast %162 : vector<2x16x1xf32> to vector<2x16x16xf32>
    %164 = arith.subf %160, %163 : vector<2x16x16xf32>
    %165 = math.exp %164 : vector<2x16x16xf32>
    %cst_44 = arith.constant dense<0.000000e+00> : vector<2x16xf32>
    %166 = vector.multi_reduction <add>, %165, %cst_44 [2] : vector<2x16x16xf32> to vector<2x16xf32>
    %167 = vector.shape_cast %166 : vector<2x16xf32> to vector<2x16x1xf32>
    "tpu.trace_start"() <{level = 10 : i32, message = "bnm,bmd->bnd"}> : () -> ()
    %cst_45 = arith.constant dense<0.000000e+00> : vector<2x16x8xf32>
    %168 = tpu.matmul %165, %159, %cst_45 {dimension_numbers = #tpu.dot_dimension_numbers<[2], [1], [1], [2], [0, 0, 0, 1, 1, 2], [0], [0]>} : vector<2x16x16xf32>, vector<2x16x8xf32>, vector<2x16x8xf32> -> vector<2x16x8xf32>
    "tpu.trace_stop"() : () -> ()
    %169 = vector.broadcast %167 : vector<2x16x1xf32> to vector<2x16x8xf32>
    %170 = arith.divf %168, %169 : vector<2x16x8xf32>
    %171 = vector.shape_cast %170 : vector<2x16x8xf32> to vector<32x8xf32>
    %172 = vector.extract_strided_slice %3 {offsets = [56, 0], sizes = [8, 64], strides = [1, 1]} : vector<64x64xf32> to vector<8x64xf32>
    %cst_46 = arith.constant dense<0.000000e+00> : vector<32x64xf32>
    %173 = tpu.matmul %171, %172, %cst_46 {dimension_numbers = #tpu.dot_dimension_numbers<[1], [0], [0], [1], [0, 0, 1, 1], [], []>} : vector<32x8xf32>, vector<8x64xf32>, vector<32x64xf32> -> vector<32x64xf32>
    %174 = arith.addf %153, %173 : vector<32x64xf32>
    %c0_47 = arith.constant 0 : index
    %c0_48 = arith.constant 0 : index
    %175 = vector.load %arg5[%c0_47, %c0_48] : memref<32x64xf32, #tpu.memory_space<vmem>>, vector<32x64xf32>
    tpu.vector_store %arg5[%c0_47, %c0_48], %174 {strides = array<i32>} : memref<32x64xf32, #tpu.memory_space<vmem>>, vector<32x64xf32>,
    return
  }
  func.func @transform_0(%arg0: i32) -> (i32, i32) {
    %c0_i32 = arith.constant 0 : i32
    %c0_i32_0 = arith.constant 0 : i32
    %c0_i32_1 = arith.constant 0 : i32
    return %c0_i32, %c0_i32_0 : i32, i32
  }
  func.func @transform_1(%arg0: i32) -> (i32, i32) {
    %c0_i32 = arith.constant 0 : i32
    %c0_i32_0 = arith.constant 0 : i32
    %c0_i32_1 = arith.constant 0 : i32
    return %c0_i32, %c0_i32_0 : i32, i32
  }
  func.func @transform_2(%arg0: i32) -> (i32, i32) {
    %c0_i32 = arith.constant 0 : i32
    %c0_i32_0 = arith.constant 0 : i32
    %c0_i32_1 = arith.constant 0 : i32
    return %c0_i32, %c0_i32_0 : i32, i32
  }
  func.func @transform_3(%arg0: i32) -> (i32, i32) {
    %c0_i32 = arith.constant 0 : i32
    %c0_i32_0 = arith.constant 0 : i32
    %c0_i32_1 = arith.constant 0 : i32
    return %c0_i32, %c0_i32_0 : i32, i32
  }
  func.func @transform_4(%arg0: i32) -> (i32, i32) {
    %c0_i32 = arith.constant 0 : i32
    %c0_i32_0 = arith.constant 0 : i32
    %c0_i32_1 = arith.constant 0 : i32
    return %c0_i32, %c0_i32_0 : i32, i32
  }
}

</mosaic_0001>

<llo_original>
// kernel: tpu_custom_call.1
$region0: #{tpu_custom_call.1}
  #allocation0 [shape = 'u32[]', space=smem, size = 0x4, offset = 0x4, fixed_abs, tag = 'smem constant byte address 0x4 - core index']
  #allocation1 [shape = 'u32[144,128]{1,0:T(1,128)}', space=vmem, size = 0x12000, scoped, tag = 'internal scratch']
  %s0 = inlined_call_operand.hbm [shape: f32[32,64], index: 0, kind: input, shape index: {}]
  %s1 = inlined_call_operand.hbm [shape: f32[64,192], index: 1, kind: input, shape index: {}]
  %s2 = inlined_call_operand.hbm [shape: f32[64,64], index: 2, kind: input, shape index: {}]
  %s3 = inlined_call_operand.vmem [shape: f32[1,64], index: 3, kind: input, shape index: {}]
  %s4 = inlined_call_operand.hbm [shape: f32[32,64], index: 4, kind: output, shape index: {}]
  %s5 = sld [smem:[#allocation0]]
  $region38: #{tpu_custom_call.1} parent=0
    _
  %s7 = ssub.s32 1, %s5
  %s8 = scalar_select 0, %s7, %s5
  $region1: #{tpu_custom_call.1} parent=0
    #allocation2 [shape = 'u8[16384]{0}', space=vmem, size = 0x4000, scoped, tag = 'input window, operand 0, single buffered']
    #allocation3 [shape = 's32[1]{0}', space=sflag, size = 0x4, scoped, tag = 'scoped memory for tpu_custom_call.1']
    #allocation4 [shape = 's32[1]{0}', space=sflag, size = 0x4, scoped, tag = 'scoped memory for tpu_custom_call.1']
    #allocation5 [shape = 'u8[65536]{0}', space=vmem, size = 0x10000, scoped, tag = 'input window, operand 1, single buffered']
    #allocation6 [shape = 's32[1]{0}', space=sflag, size = 0x4, scoped, tag = 'scoped memory for tpu_custom_call.1']
    #allocation7 [shape = 'u8[32768]{0}', space=vmem, size = 0x8000, scoped, tag = 'input window, operand 2, single buffered']
    #allocation8 [shape = 'u8[16384]{0}', space=vmem, size = 0x4000, scoped, tag = 'output window, operand 0, single buffered']
    %9 = vsyncpa [#allocation3], 0
    %10 = vsyncpa [#allocation6], 0
    %11 = vsyncpa [#allocation4], 0
    // Predicated region
    $region2: #{tpu_custom_call.1} parent=1 // pred_check
      _
    $region3: #{tpu_custom_call.1} parent=1 // pred_check_branch
      %13 = sbr.rel (0) target = $region5
    $region4: #{tpu_custom_call.1} parent=1 // pred_region
      %s15 = ssub.s32 512, 512
      %16 = vsyncadd [#allocation3], %s15
      %s17 = sshll.u32 [#allocation2], 4
      %s18 = int_to_ptr.vmem [resolvable:$true] %s17
      %23 = dma.hbm_to_vmem [thread:$0]  %s0, 512, %s18, [#allocation3], 128, 128, 8
    $region5: #{tpu_custom_call.1} parent=1 // pred_fallthru
      _
    // Predicated region
    $region6: #{tpu_custom_call.1} parent=1 // pred_check
      _
    $region7: #{tpu_custom_call.1} parent=1 // pred_check_branch
      %25 = sbr.rel (0) target = $region9
    $region8: #{tpu_custom_call.1} parent=1 // pred_region
      %s27 = ssub.s32 2048, 2048
      %28 = vsyncadd [#allocation6], %s27
      %s29 = sshll.u32 [#allocation5], 4
      %s30 = int_to_ptr.vmem [resolvable:$true] %s29
      %35 = dma.hbm_to_vmem [thread:$0]  %s1, 2048, %s30, [#allocation6], 256, 256, 16
    $region9: #{tpu_custom_call.1} parent=1 // pred_fallthru
      _
    // Predicated region
    $region10: #{tpu_custom_call.1} parent=1 // pred_check
      _
    $region11: #{tpu_custom_call.1} parent=1 // pred_check_branch
      %37 = sbr.rel (0) target = $region13
    $region12: #{tpu_custom_call.1} parent=1 // pred_region
      %s39 = ssub.s32 1024, 1024
      %40 = vsyncadd [#allocation6], %s39
      %s41 = sshll.u32 [#allocation7], 4
      %s42 = int_to_ptr.vmem [resolvable:$true] %s41
      %47 = dma.hbm_to_vmem [thread:$0]  %s2, 1024, %s42, [#allocation6], 128, 128, 8
    $region13: #{tpu_custom_call.1} parent=1 // pred_fallthru
      _
    // Predicated region
    $region14: #{tpu_custom_call.1} parent=1 // pred_check
      _
    $region15: #{tpu_custom_call.1} parent=1 // pred_check_branch
      %49 = sbr.rel (0) target = $region17
    $region16: #{tpu_custom_call.1} parent=1 // pred_region
      _
    $region17: #{tpu_custom_call.1} parent=1 // pred_fallthru
      _
    // Predicated region
    $region18: #{tpu_custom_call.1} parent=1 // pred_check
      _
    $region19: #{tpu_custom_call.1} parent=1 // pred_check_branch
      %51 = sbr.rel (0) target = $region21
    $region20: #{tpu_custom_call.1} parent=1 // pred_region
      %52 = dma.done [#allocation3], 512
    $region21: #{tpu_custom_call.1} parent=1 // pred_fallthru
      _
    // Predicated region
    $region22: #{tpu_custom_call.1} parent=1 // pred_check
      _
    $region23: #{tpu_custom_call.1} parent=1 // pred_check_branch
      %54 = sbr.rel (0) target = $region25
    $region24: #{tpu_custom_call.1} parent=1 // pred_region
      %55 = dma.done [#allocation6], 2048
    $region25: #{tpu_custom_call.1} parent=1 // pred_fallthru
      _
    // Predicated region
    $region26: #{tpu_custom_call.1} parent=1 // pred_check
      _
    $region27: #{tpu_custom_call.1} parent=1 // pred_check_branch
      %57 = sbr.rel (0) target = $region29
    $region28: #{tpu_custom_call.1} parent=1 // pred_region
      %58 = dma.done [#allocation6], 1024
    $region29: #{tpu_custom_call.1} parent=1 // pred_fallthru
      _
    %v59 = vld [vmem:[#allocation2] sm:$0xff]
    %v60 = vld [vmem:[#allocation2 + $0x8] sm:$0xff]
    %v61 = vld [vmem:[#allocation2 + $0x10] sm:$0xff]
    %v62 = vld [vmem:[#allocation2 + $0x18] sm:$0xff]
    %v63 = vld [vmem:[#allocation5] sm:$0xff]
    %v64 = vld [vmem:[#allocation5 + $0x8] sm:$0xff]
    %v65 = vld [vmem:[#allocation5 + $0x10] sm:$0xff]
    %v66 = vld [vmem:[#allocation5 + $0x18] sm:$0xff]
    %v67 = vld [vmem:[#allocation5 + $0x20] sm:$0xff]
    %v68 = vld [vmem:[#allocation5 + $0x28] sm:$0xff]
    %v69 = vld [vmem:[#allocation5 + $0x30] sm:$0xff]
    %v70 = vld [vmem:[#allocation5 + $0x38] sm:$0xff]
    %v71 = vld [vmem:[#allocation5 + $0x40] sm:$0xff]
    %v72 = vld [vmem:[#allocation5 + $0x48] sm:$0xff]
    %v73 = vld [vmem:[#allocation5 + $0x50] sm:$0xff]
    %v74 = vld [vmem:[#allocation5 + $0x58] sm:$0xff]
    %v75 = vld [vmem:[#allocation5 + $0x60] sm:$0xff]
    %v76 = vld [vmem:[#allocation5 + $0x68] sm:$0xff]
    %v77 = vld [vmem:[#allocation5 + $0x70] sm:$0xff]
    %v78 = vld [vmem:[#allocation5 + $0x78] sm:$0xff]
    %vm79 = vcmask 523264
    %v81 = vsel %vm79, %v59, 0
    %v84 = vsel %vm79, %v60, 0
    %v87 = vsel %vm79, %v61, 0
    %v90 = vsel %vm79, %v62, 0
    %92 = vmatprep.subr.mxu0 %v64
    %93 = vmatpush1.msra.mxu0 %v63
    %94 = vmatprep.subr.mxu0 %v66
    %95 = vmatpush1.msra.mxu0 %v65
    %96 = vmatprep.subr.mxu0 %v68
    %97 = vmatpush1.msra.mxu0 %v67
    %98 = vmatprep.subr.mxu0 %v70
    %99 = vmatpush1.msra.mxu0 %v69
    %100 = vmatprep.subr.mxu0 %v72
    %101 = vmatpush1.msra.mxu0 %v71
    %102 = vmatprep.subr.mxu0 %v74
    %103 = vmatpush1.msra.mxu0 %v73
    %104 = vmatprep.subr.mxu0 %v76
    %105 = vmatpush1.msra.mxu0 %v75
    %106 = vmatprep.subr.mxu0 %v78
    %107 = vmatpush1.msra.mxu0 %v77
    %108 = vmatprep.subr.mxu0 0.0
    %109 = vmatpush1.msra.mxu0 0.0
    %110 = vmatprep.subr.mxu0 0.0
    %111 = vmatpush1.msra.mxu0 0.0
    %112 = vmatprep.subr.mxu0 0.0
    %113 = vmatpush1.msra.mxu0 0.0
    %114 = vmatprep.subr.mxu0 0.0
    %115 = vmatpush1.msra.mxu0 0.0
    %116 = vmatprep.subr.mxu0 0.0
    %117 = vmatpush1.msra.mxu0 0.0
    %118 = vmatprep.subr.mxu0 0.0
    %119 = vmatpush1.msra.mxu0 0.0
    %120 = vmatprep.subr.mxu0 0.0
    %121 = vmatpush1.msra.mxu0 0.0
    %122 = vmatprep.subr.mxu0 0.0
    %123 = vmatpush1.msra.mxu0 0.0
    %124 = vmatprep.subr.mxu0 0.0
    %125 = vmatpush1.msra.mxu0 0.0
    %126 = vmatprep.subr.mxu0 0.0
    %127 = vmatpush1.msra.mxu0 0.0
    %128 = vmatprep.subr.mxu0 0.0
    %129 = vmatpush1.msra.mxu0 0.0
    %130 = vmatprep.subr.mxu0 0.0
    %131 = vmatpush1.msra.mxu0 0.0
    %132 = vmatprep.subr.mxu0 0.0
    %133 = vmatpush1.msra.mxu0 0.0
    %134 = vmatprep.subr.mxu0 0.0
    %135 = vmatpush1.msra.mxu0 0.0
    %136 = vmatprep.subr.mxu0 0.0
    %137 = vmatpush1.msra.mxu0 0.0
    %138 = vmatprep.subr.mxu0 0.0
    %139 = vmatpush1.msra.mxu0 0.0
    %140 = vmatprep.subr.mxu0 0.0
    %141 = vmatpush1.msra.mxu0 0.0
    %142 = vmatprep.subr.mxu0 0.0
    %143 = vmatpush1.msra.mxu0 0.0
    %144 = vmatprep.subr.mxu0 0.0
    %145 = vmatpush1.msra.mxu0 0.0
    %146 = vmatprep.subr.mxu0 0.0
    %147 = vmatpush1.msra.mxu0 0.0
    %148 = vmatprep.subr.mxu0 0.0
    %149 = vmatpush1.msra.mxu0 0.0
    %150 = vmatprep.subr.mxu0 0.0
    %151 = vmatpush1.msra.mxu0 0.0
    %152 = vmatprep.subr.mxu0 0.0
    %153 = vmatpush1.msra.mxu0 0.0
    %154 = vmatprep.subr.mxu0 0.0
    %155 = vmatpush1.msra.mxu0 0.0
    %156 = vmatprep.mubr.f32.mxu0 0.0
    %157 = vmatmul.mubr.f32.gmra.mrb[0].mxu0 %v81
    %v158 = vpop.f32.mrb[0].mxu0
    %v159 = vadd.f32 0.0, %v158
    %v160 = vpop.f32.mrb[0].mxu0
    %v161 = vadd.f32 0.0, %v160
    %162 = vmatprep.mubr.f32.mxu0 0.0
    %163 = vmatmul.mubr.f32.gmra.mrb[0].mxu0 %v84
    %v164 = vpop.f32.mrb[0].mxu0
    %v165 = vadd.f32 0.0, %v164
    %v166 = vpop.f32.mrb[0].mxu0
    %v167 = vadd.f32 0.0, %v166
    %168 = vmatprep.mubr.f32.mxu0 0.0
    %169 = vmatmul.mubr.f32.gmra.mrb[0].mxu0 %v87
    %v170 = vpop.f32.mrb[0].mxu0
    %v171 = vadd.f32 0.0, %v170
    %v172 = vpop.f32.mrb[0].mxu0
    %v173 = vadd.f32 0.0, %v172
    %174 = vmatprep.mubr.f32.mxu0 0.0
    %175 = vmatmul.mubr.f32.gmra.mrb[0].mxu0 %v90
    %v176 = vpop.f32.mrb[0].mxu0
    %v177 = vadd.f32 0.0, %v176
    %v178 = vpop.f32.mrb[0].mxu0
    %v179 = vadd.f32 0.0, %v178
    %180 = vdwg.mxu0
    %v181 = vld [vmem:[#allocation7] sm:$0xff]
    %v182 = vld [vmem:[#allocation7 + $0x8] sm:$0xff]
    %v183 = vld [vmem:[#allocation7 + $0x10] sm:$0xff]
    %v184 = vld [vmem:[#allocation7 + $0x18] sm:$0xff]
    %v185 = vld [vmem:[#allocation7 + $0x20] sm:$0xff]
    %v186 = vld [vmem:[#allocation7 + $0x28] sm:$0xff]
    %v187 = vld [vmem:[#allocation7 + $0x30] sm:$0xff]
    %v188 = vld [vmem:[#allocation7 + $0x38] sm:$0xff]
    %v189 = vld [vmem:[%s3] sm:$0x1]
    %v191 = vlaneseq
    %v192 = vshrl.u32 %v191, 7
    %v193 = vsub.s32 0, %v192
    %v194 = vrot.slane %v189, %v193
    %198 = vrot.lane.b32.xlu0 %v159, 64
    %v199 = vpop.permute.xlu0 %198
    %200 = vrot.lane.b32.xlu0 %v165, 64
    %v201 = vpop.permute.xlu0 %200
    %vm202 = vcmask 64512
    %v203 = vsel %vm202, %v159, 0
    %v205 = vsel %vm202, %v165, 0
    %v207 = vsel %vm202, %v199, 0
    %v209 = vsel %vm202, %v201, 0
    %211 = vmatprep.subr.mxu0 0.0
    %212 = vmatpush1.xpose.msra.mxu0 %v207
    %213 = vmatprep.subr.mxu0 0.0
    %214 = vmatpush1.xpose.msra.mxu0 %v209
    %215 = vmatprep.subr.mxu0 0.0
    %216 = vmatpush1.xpose.msra.mxu0 0.0
    %217 = vmatprep.subr.mxu0 0.0
    %218 = vmatpush1.xpose.msra.mxu0 0.0
    %219 = vmatprep.subr.mxu0 0.0
    %220 = vmatpush1.xpose.msra.mxu0 0.0
    %221 = vmatprep.subr.mxu0 0.0
    %222 = vmatpush1.xpose.msra.mxu0 0.0
    %223 = vmatprep.subr.mxu0 0.0
    %224 = vmatpush1.xpose.msra.mxu0 0.0
    %225 = vmatprep.subr.mxu0 0.0
    %226 = vmatpush1.xpose.msra.mxu0 0.0
    %227 = vmatprep.subr.mxu0 0.0
    %228 = vmatpush1.xpose.msra.mxu0 0.0
    %229 = vmatprep.subr.mxu0 0.0
    %230 = vmatpush1.xpose.msra.mxu0 0.0
    %231 = vmatprep.subr.mxu0 0.0
    %232 = vmatpush1.xpose.msra.mxu0 0.0
    %233 = vmatprep.subr.mxu0 0.0
    %234 = vmatpush1.xpose.msra.mxu0 0.0
    %235 = vmatprep.subr.mxu0 0.0
    %236 = vmatpush1.xpose.msra.mxu0 0.0
    %237 = vmatprep.subr.mxu0 0.0
    %238 = vmatpush1.xpose.msra.mxu0 0.0
    %239 = vmatprep.subr.mxu0 0.0
    %240 = vmatpush1.xpose.msra.mxu0 0.0
    %241 = vmatprep.subr.mxu0 0.0
    %242 = vmatpush1.xpose.msra.mxu0 0.0
    %243 = vmatprep.subr.mxu0 0.0
    %244 = vmatpush1.xpose.msra.mxu0 0.0
    %245 = vmatprep.subr.mxu0 0.0
    %246 = vmatpush1.xpose.msra.mxu0 0.0
    %247 = vmatprep.subr.mxu0 0.0
    %248 = vmatpush1.xpose.msra.mxu0 0.0
    %249 = vmatprep.subr.mxu0 0.0
    %250 = vmatpush1.xpose.msra.mxu0 0.0
    %251 = vmatprep.subr.mxu0 0.0
    %252 = vmatpush1.xpose.msra.mxu0 0.0
    %253 = vmatprep.subr.mxu0 0.0
    %254 = vmatpush1.xpose.msra.mxu0 0.0
    %255 = vmatprep.subr.mxu0 0.0
    %256 = vmatpush1.xpose.msra.mxu0 0.0
    %257 = vmatprep.subr.mxu0 0.0
    %258 = vmatpush1.xpose.msra.mxu0 0.0
    %259 = vmatprep.subr.mxu0 0.0
    %260 = vmatpush1.xpose.msra.mxu0 0.0
    %261 = vmatprep.subr.mxu0 0.0
    %262 = vmatpush1.xpose.msra.mxu0 0.0
    %263 = vmatprep.subr.mxu0 0.0
    %264 = vmatpush1.xpose.msra.mxu0 0.0
    %265 = vmatprep.subr.mxu0 0.0
    %266 = vmatpush1.xpose.msra.mxu0 0.0
    %267 = vmatprep.subr.mxu0 0.0
    %268 = vmatpush1.xpose.msra.mxu0 0.0
    %269 = vmatprep.subr.mxu0 0.0
    %270 = vmatpush1.xpose.msra.mxu0 0.0
    %271 = vmatprep.subr.mxu0 0.0
    %272 = vmatpush1.xpose.msra.mxu0 0.0
    %273 = vmatprep.subr.mxu0 0.0
    %274 = vmatpush1.xpose.msra.mxu0 0.0
    %275 = vmatprep.mubr.f32.mxu0 0.0
    %276 = vmatmul.mubr.f32.gmra.mrb[0].mxu0 %v203
    %v277 = vpop.f32.mrb[0].mxu0
    %v278 = vadd.f32 0.0, %v277
    %v279 = vpop.f32.mrb[0].mxu0
    %280 = vmatprep.mubr.f32.mxu0 0.0
    %281 = vmatmul.mubr.f32.gmra.mrb[0].mxu0 %v205
    %v282 = vpop.f32.mrb[0].mxu0
    %v283 = vadd.f32 0.0, %v282
    %v284 = vpop.f32.mrb[0].mxu0
    %285 = vdwg.mxu0
    %288 = vrot.lane.b32.xlu0 %v171, 64
    %v289 = vpop.permute.xlu0 %288
    %290 = vrot.lane.b32.xlu0 %v177, 64
    %v291 = vpop.permute.xlu0 %290
    %v292 = vsel %vm202, %v171, 0
    %v294 = vsel %vm202, %v177, 0
    %v296 = vsel %vm202, %v289, 0
    %v298 = vsel %vm202, %v291, 0
    %300 = vmatprep.subr.mxu0 0.0
    %301 = vmatpush1.xpose.msra.mxu0 %v296
    %302 = vmatprep.subr.mxu0 0.0
    %303 = vmatpush1.xpose.msra.mxu0 %v298
    %304 = vmatprep.subr.mxu0 0.0
    %305 = vmatpush1.xpose.msra.mxu0 0.0
    %306 = vmatprep.subr.mxu0 0.0
    %307 = vmatpush1.xpose.msra.mxu0 0.0
    %308 = vmatprep.subr.mxu0 0.0
    %309 = vmatpush1.xpose.msra.mxu0 0.0
    %310 = vmatprep.subr.mxu0 0.0
    %311 = vmatpush1.xpose.msra.mxu0 0.0
    %312 = vmatprep.subr.mxu0 0.0
    %313 = vmatpush1.xpose.msra.mxu0 0.0
    %314 = vmatprep.subr.mxu0 0.0
    %315 = vmatpush1.xpose.msra.mxu0 0.0
    %316 = vmatprep.subr.mxu0 0.0
    %317 = vmatpush1.xpose.msra.mxu0 0.0
    %318 = vmatprep.subr.mxu0 0.0
    %319 = vmatpush1.xpose.msra.mxu0 0.0
    %320 = vmatprep.subr.mxu0 0.0
    %321 = vmatpush1.xpose.msra.mxu0 0.0
    %322 = vmatprep.subr.mxu0 0.0
    %323 = vmatpush1.xpose.msra.mxu0 0.0
    %324 = vmatprep.subr.mxu0 0.0
    %325 = vmatpush1.xpose.msra.mxu0 0.0
    %326 = vmatprep.subr.mxu0 0.0
    %327 = vmatpush1.xpose.msra.mxu0 0.0
    %328 = vmatprep.subr.mxu0 0.0
    %329 = vmatpush1.xpose.msra.mxu0 0.0
    %330 = vmatprep.subr.mxu0 0.0
    %331 = vmatpush1.xpose.msra.mxu0 0.0
    %332 = vmatprep.subr.mxu0 0.0
    %333 = vmatpush1.xpose.msra.mxu0 0.0
    %334 = vmatprep.subr.mxu0 0.0
    %335 = vmatpush1.xpose.msra.mxu0 0.0
    %336 = vmatprep.subr.mxu0 0.0
    %337 = vmatpush1.xpose.msra.mxu0 0.0
    %338 = vmatprep.subr.mxu0 0.0
    %339 = vmatpush1.xpose.msra.mxu0 0.0
    %340 = vmatprep.subr.mxu0 0.0
    %341 = vmatpush1.xpose.msra.mxu0 0.0
    %342 = vmatprep.subr.mxu0 0.0
    %343 = vmatpush1.xpose.msra.mxu0 0.0
    %344 = vmatprep.subr.mxu0 0.0
    %345 = vmatpush1.xpose.msra.mxu0 0.0
    %346 = vmatprep.subr.mxu0 0.0
    %347 = vmatpush1.xpose.msra.mxu0 0.0
    %348 = vmatprep.subr.mxu0 0.0
    %349 = vmatpush1.xpose.msra.mxu0 0.0
    %350 = vmatprep.subr.mxu0 0.0
    %351 = vmatpush1.xpose.msra.mxu0 0.0
    %352 = vmatprep.subr.mxu0 0.0
    %353 = vmatpush1.xpose.msra.mxu0 0.0
    %354 = vmatprep.subr.mxu0 0.0
    %355 = vmatpush1.xpose.msra.mxu0 0.0
    %356 = vmatprep.subr.mxu0 0.0
    %357 = vmatpush1.xpose.msra.mxu0 0.0
    %358 = vmatprep.subr.mxu0 0.0
    %359 = vmatpush1.xpose.msra.mxu0 0.0
    %360 = vmatprep.subr.mxu0 0.0
    %361 = vmatpush1.xpose.msra.mxu0 0.0
    %362 = vmatprep.subr.mxu0 0.0
    %363 = vmatpush1.xpose.msra.mxu0 0.0
    %364 = vmatprep.mubr.f32.mxu0 0.0
    %365 = vmatmul.mubr.f32.gmra.mrb[0].mxu0 %v292
    %v366 = vpop.f32.mrb[0].mxu0
    %v367 = vadd.f32 0.0, %v366
    %v368 = vpop.f32.mrb[0].mxu0
    %369 = vmatprep.mubr.f32.mxu0 0.0
    %370 = vmatmul.mubr.f32.gmra.mrb[0].mxu0 %v294
    %v371 = vpop.f32.mrb[0].mxu0
    %v372 = vadd.f32 0.0, %v371
    %v373 = vpop.f32.mrb[0].mxu0
    %374 = vdwg.mxu0
    %vm375 = vcmask 130048
    %v376 = vsel %vm375, %v278, -inf
    %377 = vmax.xlane.f32.xlu0 %v376
    %v378 = vpop.xlane.xlu0 %377
    %v379 = vsel %vm375, %v283, -inf
    %380 = vmax.xlane.f32.xlu0 %v379
    %v381 = vpop.xlane.xlu0 %380
    %v382 = vsel %vm375, %v367, -inf
    %383 = vmax.xlane.f32.xlu0 %v382
    %v384 = vpop.xlane.xlu0 %383
    %v385 = vsel %vm375, %v372, -inf
    %386 = vmax.xlane.f32.xlu0 %v385
    %v387 = vpop.xlane.xlu0 %386
    %v388 = vsub.f32 %v278, %v378
    %v389 = vsub.f32 %v283, %v381
    %v390 = vsub.f32 %v367, %v384
    %v391 = vsub.f32 %v372, %v387
    %v392 = vmul.f32 %v388, 1.442695
    %v393 = vpow.pop %v392
    %v394 = vmul.f32 %v389, 1.442695
    %v395 = vpow.pop %v394
    %v396 = vmul.f32 %v390, 1.442695
    %v397 = vpow.pop %v396
    %v398 = vmul.f32 %v391, 1.442695
    %v399 = vpow.pop %v398
    %v400 = vsel %vm375, %v393, 0.0
    %401 = vadd.xlane.f32.xlu0 %v400
    %v402 = vpop.xlane.xlu0 %401
    %v403 = vsel %vm375, %v395, 0.0
    %404 = vadd.xlane.f32.xlu0 %v403
    %v405 = vpop.xlane.xlu0 %404
    %v406 = vsel %vm375, %v397, 0.0
    %407 = vadd.xlane.f32.xlu0 %v406
    %v408 = vpop.xlane.xlu0 %407
    %v409 = vsel %vm375, %v399, 0.0
    %410 = vadd.xlane.f32.xlu0 %v409
    %v411 = vpop.xlane.xlu0 %410
    %v413 = vsel %vm375, %v393, 0
    %v416 = vsel %vm375, %v395, 0
    %418 = vmatprep.subr.mxu0 0.0
    %419 = vmatpush1.msra.mxu0 %v161
    %420 = vmatprep.subr.mxu0 0.0
    %421 = vmatpush1.msra.mxu0 %v167
    %422 = vmatprep.subr.mxu0 0.0
    %423 = vmatpush1.msra.mxu0 0.0
    %424 = vmatprep.subr.mxu0 0.0
    %425 = vmatpush1.msra.mxu0 0.0
    %426 = vmatprep.subr.mxu0 0.0
    %427 = vmatpush1.msra.mxu0 0.0
    %428 = vmatprep.subr.mxu0 0.0
    %429 = vmatpush1.msra.mxu0 0.0
    %430 = vmatprep.subr.mxu0 0.0
    %431 = vmatpush1.msra.mxu0 0.0
    %432 = vmatprep.subr.mxu0 0.0
    %433 = vmatpush1.msra.mxu0 0.0
    %434 = vmatprep.subr.mxu0 0.0
    %435 = vmatpush1.msra.mxu0 0.0
    %436 = vmatprep.subr.mxu0 0.0
    %437 = vmatpush1.msra.mxu0 0.0
    %438 = vmatprep.subr.mxu0 0.0
    %439 = vmatpush1.msra.mxu0 0.0
    %440 = vmatprep.subr.mxu0 0.0
    %441 = vmatpush1.msra.mxu0 0.0
    %442 = vmatprep.subr.mxu0 0.0
    %443 = vmatpush1.msra.mxu0 0.0
    %444 = vmatprep.subr.mxu0 0.0
    %445 = vmatpush1.msra.mxu0 0.0
    %446 = vmatprep.subr.mxu0 0.0
    %447 = vmatpush1.msra.mxu0 0.0
    %448 = vmatprep.subr.mxu0 0.0
    %449 = vmatpush1.msra.mxu0 0.0
    %450 = vmatprep.subr.mxu0 0.0
    %451 = vmatpush1.msra.mxu0 0.0
    %452 = vmatprep.subr.mxu0 0.0
    %453 = vmatpush1.msra.mxu0 0.0
    %454 = vmatprep.subr.mxu0 0.0
    %455 = vmatpush1.msra.mxu0 0.0
    %456 = vmatprep.subr.mxu0 0.0
    %457 = vmatpush1.msra.mxu0 0.0
    %458 = vmatprep.subr.mxu0 0.0
    %459 = vmatpush1.msra.mxu0 0.0
    %460 = vmatprep.subr.mxu0 0.0
    %461 = vmatpush1.msra.mxu0 0.0
    %462 = vmatprep.subr.mxu0 0.0
    %463 = vmatpush1.msra.mxu0 0.0
    %464 = vmatprep.subr.mxu0 0.0
    %465 = vmatpush1.msra.mxu0 0.0
    %466 = vmatprep.subr.mxu0 0.0
    %467 = vmatpush1.msra.mxu0 0.0
    %468 = vmatprep.subr.mxu0 0.0
    %469 = vmatpush1.msra.mxu0 0.0
    %470 = vmatprep.subr.mxu0 0.0
    %471 = vmatpush1.msra.mxu0 0.0
    %472 = vmatprep.subr.mxu0 0.0
    %473 = vmatpush1.msra.mxu0 0.0
    %474 = vmatprep.subr.mxu0 0.0
    %475 = vmatpush1.msra.mxu0 0.0
    %476 = vmatprep.subr.mxu0 0.0
    %477 = vmatpush1.msra.mxu0 0.0
    %478 = vmatprep.subr.mxu0 0.0
    %479 = vmatpush1.msra.mxu0 0.0
    %480 = vmatprep.subr.mxu0 0.0
    %481 = vmatpush1.msra.mxu0 0.0
    %482 = vmatprep.mubr.f32.mxu0 0.0
    %483 = vmatmul.mubr.f32.gmra.mrb[0].mxu0 %v413
    %v484 = vpop.f32.mrb[0].mxu0
    %v485 = vadd.f32 0.0, %v484
    %v486 = vpop.f32.mrb[0].mxu0
    %487 = vmatprep.mubr.f32.mxu0 0.0
    %488 = vmatmul.mubr.f32.gmra.mrb[0].mxu0 %v416
    %v489 = vpop.f32.mrb[0].mxu0
    %v490 = vadd.f32 0.0, %v489
    %v491 = vpop.f32.mrb[0].mxu0
    %492 = vdwg.mxu0
    %v494 = vsel %vm375, %v397, 0
    %v497 = vsel %vm375, %v399, 0
    %499 = vmatprep.subr.mxu0 0.0
    %500 = vmatpush1.msra.mxu0 %v173
    %501 = vmatprep.subr.mxu0 0.0
    %502 = vmatpush1.msra.mxu0 %v179
    %503 = vmatprep.subr.mxu0 0.0
    %504 = vmatpush1.msra.mxu0 0.0
    %505 = vmatprep.subr.mxu0 0.0
    %506 = vmatpush1.msra.mxu0 0.0
    %507 = vmatprep.subr.mxu0 0.0
    %508 = vmatpush1.msra.mxu0 0.0
    %509 = vmatprep.subr.mxu0 0.0
    %510 = vmatpush1.msra.mxu0 0.0
    %511 = vmatprep.subr.mxu0 0.0
    %512 = vmatpush1.msra.mxu0 0.0
    %513 = vmatprep.subr.mxu0 0.0
    %514 = vmatpush1.msra.mxu0 0.0
    %515 = vmatprep.subr.mxu0 0.0
    %516 = vmatpush1.msra.mxu0 0.0
    %517 = vmatprep.subr.mxu0 0.0
    %518 = vmatpush1.msra.mxu0 0.0
    %519 = vmatprep.subr.mxu0 0.0
    %520 = vmatpush1.msra.mxu0 0.0
    %521 = vmatprep.subr.mxu0 0.0
    %522 = vmatpush1.msra.mxu0 0.0
    %523 = vmatprep.subr.mxu0 0.0
    %524 = vmatpush1.msra.mxu0 0.0
    %525 = vmatprep.subr.mxu0 0.0
    %526 = vmatpush1.msra.mxu0 0.0
    %527 = vmatprep.subr.mxu0 0.0
    %528 = vmatpush1.msra.mxu0 0.0
    %529 = vmatprep.subr.mxu0 0.0
    %530 = vmatpush1.msra.mxu0 0.0
    %531 = vmatprep.subr.mxu0 0.0
    %532 = vmatpush1.msra.mxu0 0.0
    %533 = vmatprep.subr.mxu0 0.0
    %534 = vmatpush1.msra.mxu0 0.0
    %535 = vmatprep.subr.mxu0 0.0
    %536 = vmatpush1.msra.mxu0 0.0
    %537 = vmatprep.subr.mxu0 0.0
    %538 = vmatpush1.msra.mxu0 0.0
    %539 = vmatprep.subr.mxu0 0.0
    %540 = vmatpush1.msra.mxu0 0.0
    %541 = vmatprep.subr.mxu0 0.0
    %542 = vmatpush1.msra.mxu0 0.0
    %543 = vmatprep.subr.mxu0 0.0
    %544 = vmatpush1.msra.mxu0 0.0
    %545 = vmatprep.subr.mxu0 0.0
    %546 = vmatpush1.msra.mxu0 0.0
    %547 = vmatprep.subr.mxu0 0.0
    %548 = vmatpush1.msra.mxu0 0.0
    %549 = vmatprep.subr.mxu0 0.0
    %550 = vmatpush1.msra.mxu0 0.0
    %551 = vmatprep.subr.mxu0 0.0
    %552 = vmatpush1.msra.mxu0 0.0
    %553 = vmatprep.subr.mxu0 0.0
    %554 = vmatpush1.msra.mxu0 0.0
    %555 = vmatprep.subr.mxu0 0.0
    %556 = vmatpush1.msra.mxu0 0.0
    %557 = vmatprep.subr.mxu0 0.0
    %558 = vmatpush1.msra.mxu0 0.0
    %559 = vmatprep.subr.mxu0 0.0
    %560 = vmatpush1.msra.mxu0 0.0
    %561 = vmatprep.subr.mxu0 0.0
    %562 = vmatpush1.msra.mxu0 0.0
    %563 = vmatprep.mubr.f32.mxu0 0.0
    %564 = vmatmul.mubr.f32.gmra.mrb[0].mxu0 %v494
    %v565 = vpop.f32.mrb[0].mxu0
    %v566 = vadd.f32 0.0, %v565
    %v567 = vpop.f32.mrb[0].mxu0
    %568 = vmatprep.mubr.f32.mxu0 0.0
    %569 = vmatmul.mubr.f32.gmra.mrb[0].mxu0 %v497
    %v570 = vpop.f32.mrb[0].mxu0
    %v571 = vadd.f32 0.0, %v570
    %v572 = vpop.f32.mrb[0].mxu0
    %573 = vdwg.mxu0
    %v574 = vrcp.pop %v402
    %v575 = vmul.f32 %v485, %v574
    %v576 = vrcp.pop %v405
    %v577 = vmul.f32 %v490, %v576
    %v578 = vrcp.pop %v408
    %v579 = vmul.f32 %v566, %v578
    %v580 = vrcp.pop %v411
    %v581 = vmul.f32 %v571, %v580
    %v583 = vsel %vm202, %v575, 0
    %v586 = vsel %vm202, %v577, 0
    %v589 = vsel %vm202, %v579, 0
    %v592 = vsel %vm202, %v581, 0
    %594 = vmatprep.subr.mxu0 0.0
    %595 = vmatpush1.msra.mxu0 %v181
    %596 = vmatprep.subr.mxu0 0.0
    %597 = vmatpush1.msra.mxu0 0.0
    %598 = vmatprep.subr.mxu0 0.0
    %599 = vmatpush1.msra.mxu0 0.0
    %600 = vmatprep.subr.mxu0 0.0
    %601 = vmatpush1.msra.mxu0 0.0
    %602 = vmatprep.subr.mxu0 0.0
    %603 = vmatpush1.msra.mxu0 0.0
    %604 = vmatprep.subr.mxu0 0.0
    %605 = vmatpush1.msra.mxu0 0.0
    %606 = vmatprep.subr.mxu0 0.0
    %607 = vmatpush1.msra.mxu0 0.0
    %608 = vmatprep.subr.mxu0 0.0
    %609 = vmatpush1.msra.mxu0 0.0
    %610 = vmatprep.subr.mxu0 0.0
    %611 = vmatpush1.msra.mxu0 0.0
    %612 = vmatprep.subr.mxu0 0.0
    %613 = vmatpush1.msra.mxu0 0.0
    %614 = vmatprep.subr.mxu0 0.0
    %615 = vmatpush1.msra.mxu0 0.0
    %616 = vmatprep.subr.mxu0 0.0
    %617 = vmatpush1.msra.mxu0 0.0
    %618 = vmatprep.subr.mxu0 0.0
    %619 = vmatpush1.msra.mxu0 0.0
    %620 = vmatprep.subr.mxu0 0.0
    %621 = vmatpush1.msra.mxu0 0.0
    %622 = vmatprep.subr.mxu0 0.0
    %623 = vmatpush1.msra.mxu0 0.0
    %624 = vmatprep.subr.mxu0 0.0
    %625 = vmatpush1.msra.mxu0 0.0
    %626 = vmatprep.subr.mxu0 0.0
    %627 = vmatpush1.msra.mxu0 0.0
    %628 = vmatprep.subr.mxu0 0.0
    %629 = vmatpush1.msra.mxu0 0.0
    %630 = vmatprep.subr.mxu0 0.0
    %631 = vmatpush1.msra.mxu0 0.0
    %632 = vmatprep.subr.mxu0 0.0
    %633 = vmatpush1.msra.mxu0 0.0
    %634 = vmatprep.subr.mxu0 0.0
    %635 = vmatpush1.msra.mxu0 0.0
    %636 = vmatprep.subr.mxu0 0.0
    %637 = vmatpush1.msra.mxu0 0.0
    %638 = vmatprep.subr.mxu0 0.0
    %639 = vmatpush1.msra.mxu0 0.0
    %640 = vmatprep.subr.mxu0 0.0
    %641 = vmatpush1.msra.mxu0 0.0
    %642 = vmatprep.subr.mxu0 0.0
    %643 = vmatpush1.msra.mxu0 0.0
    %644 = vmatprep.subr.mxu0 0.0
    %645 = vmatpush1.msra.mxu0 0.0
    %646 = vmatprep.subr.mxu0 0.0
    %647 = vmatpush1.msra.mxu0 0.0
    %648 = vmatprep.subr.mxu0 0.0
    %649 = vmatpush1.msra.mxu0 0.0
    %650 = vmatprep.subr.mxu0 0.0
    %651 = vmatpush1.msra.mxu0 0.0
    %652 = vmatprep.subr.mxu0 0.0
    %653 = vmatpush1.msra.mxu0 0.0
    %654 = vmatprep.subr.mxu0 0.0
    %655 = vmatpush1.msra.mxu0 0.0
    %656 = vmatprep.subr.mxu0 0.0
    %657 = vmatpush1.msra.mxu0 0.0
    %658 = vmatprep.mubr.f32.mxu0 0.0
    %659 = vmatmul.mubr.f32.gmra.mrb[0].mxu0 %v583
    %v660 = vpop.f32.mrb[0].mxu0
    %v661 = vadd.f32 0.0, %v660
    %v662 = vpop.f32.mrb[0].mxu0
    %663 = vmatprep.mubr.f32.mxu0 0.0
    %664 = vmatmul.mubr.f32.gmra.mrb[0].mxu0 %v586
    %v665 = vpop.f32.mrb[0].mxu0
    %v666 = vadd.f32 0.0, %v665
    %v667 = vpop.f32.mrb[0].mxu0
    %668 = vmatprep.mubr.f32.mxu0 0.0
    %669 = vmatmul.mubr.f32.gmra.mrb[0].mxu0 %v589
    %v670 = vpop.f32.mrb[0].mxu0
    %v671 = vadd.f32 0.0, %v670
    %v672 = vpop.f32.mrb[0].mxu0
    %673 = vmatprep.mubr.f32.mxu0 0.0
    %674 = vmatmul.mubr.f32.gmra.mrb[0].mxu0 %v592
    %v675 = vpop.f32.mrb[0].mxu0
    %v676 = vadd.f32 0.0, %v675
    %v677 = vpop.f32.mrb[0].mxu0
    %678 = vdwg.mxu0
    %v679 = vadd.f32 %v194, %v661
    %v680 = vadd.f32 %v194, %v666
    %v681 = vadd.f32 %v194, %v671
    %v682 = vadd.f32 %v194, %v676
    %683 = vrot.lane.b32.xlu0 %v159, 120
    %v684 = vpop.permute.xlu0 %683
    %685 = vrot.lane.b32.xlu0 %v165, 120
    %v686 = vpop.permute.xlu0 %685
    %687 = vrot.lane.b32.xlu0 %v159, 56
    %v688 = vpop.permute.xlu0 %687
    %689 = vrot.lane.b32.xlu0 %v165, 56
    %v690 = vpop.permute.xlu0 %689
    %v691 = vsel %vm202, %v684, 0
    %v693 = vsel %vm202, %v686, 0
    %v695 = vsel %vm202, %v688, 0
    %v697 = vsel %vm202, %v690, 0
    %699 = vmatprep.subr.mxu0 0.0
    %700 = vmatpush1.xpose.msra.mxu0 %v695
    %701 = vmatprep.subr.mxu0 0.0
    %702 = vmatpush1.xpose.msra.mxu0 %v697
    %703 = vmatprep.subr.mxu0 0.0
    %704 = vmatpush1.xpose.msra.mxu0 0.0
    %705 = vmatprep.subr.mxu0 0.0
    %706 = vmatpush1.xpose.msra.mxu0 0.0
    %707 = vmatprep.subr.mxu0 0.0
    %708 = vmatpush1.xpose.msra.mxu0 0.0
    %709 = vmatprep.subr.mxu0 0.0
    %710 = vmatpush1.xpose.msra.mxu0 0.0
    %711 = vmatprep.subr.mxu0 0.0
    %712 = vmatpush1.xpose.msra.mxu0 0.0
    %713 = vmatprep.subr.mxu0 0.0
    %714 = vmatpush1.xpose.msra.mxu0 0.0
    %715 = vmatprep.subr.mxu0 0.0
    %716 = vmatpush1.xpose.msra.mxu0 0.0
    %717 = vmatprep.subr.mxu0 0.0
    %718 = vmatpush1.xpose.msra.mxu0 0.0
    %719 = vmatprep.subr.mxu0 0.0
    %720 = vmatpush1.xpose.msra.mxu0 0.0
    %721 = vmatprep.subr.mxu0 0.0
    %722 = vmatpush1.xpose.msra.mxu0 0.0
    %723 = vmatprep.subr.mxu0 0.0
    %724 = vmatpush1.xpose.msra.mxu0 0.0
    %725 = vmatprep.subr.mxu0 0.0
    %726 = vmatpush1.xpose.msra.mxu0 0.0
    %727 = vmatprep.subr.mxu0 0.0
    %728 = vmatpush1.xpose.msra.mxu0 0.0
    %729 = vmatprep.subr.mxu0 0.0
    %730 = vmatpush1.xpose.msra.mxu0 0.0
    %731 = vmatprep.subr.mxu0 0.0
    %732 = vmatpush1.xpose.msra.mxu0 0.0
    %733 = vmatprep.subr.mxu0 0.0
    %734 = vmatpush1.xpose.msra.mxu0 0.0
    %735 = vmatprep.subr.mxu0 0.0
    %736 = vmatpush1.xpose.msra.mxu0 0.0
    %737 = vmatprep.subr.mxu0 0.0
    %738 = vmatpush1.xpose.msra.mxu0 0.0
    %739 = vmatprep.subr.mxu0 0.0
    %740 = vmatpush1.xpose.msra.mxu0 0.0
    %741 = vmatprep.subr.mxu0 0.0
    %742 = vmatpush1.xpose.msra.mxu0 0.0
    %743 = vmatprep.subr.mxu0 0.0
    %744 = vmatpush1.xpose.msra.mxu0 0.0
    %745 = vmatprep.subr.mxu0 0.0
    %746 = vmatpush1.xpose.msra.mxu0 0.0
    %747 = vmatprep.subr.mxu0 0.0
    %748 = vmatpush1.xpose.msra.mxu0 0.0
    %749 = vmatprep.subr.mxu0 0.0
    %750 = vmatpush1.xpose.msra.mxu0 0.0
    %751 = vmatprep.subr.mxu0 0.0
    %752 = vmatpush1.xpose.msra.mxu0 0.0
    %753 = vmatprep.subr.mxu0 0.0
    %754 = vmatpush1.xpose.msra.mxu0 0.0
    %755 = vmatprep.subr.mxu0 0.0
    %756 = vmatpush1.xpose.msra.mxu0 0.0
    %757 = vmatprep.subr.mxu0 0.0
    %758 = vmatpush1.xpose.msra.mxu0 0.0
    %759 = vmatprep.subr.mxu0 0.0
    %760 = vmatpush1.xpose.msra.mxu0 0.0
    %761 = vmatprep.subr.mxu0 0.0
    %762 = vmatpush1.xpose.msra.mxu0 0.0
    %763 = vmatprep.mubr.f32.mxu0 0.0
    %764 = vmatmul.mubr.f32.gmra.mrb[0].mxu0 %v691
    %v765 = vpop.f32.mrb[0].mxu0
    %v766 = vadd.f32 0.0, %v765
    %v767 = vpop.f32.mrb[0].mxu0
    %768 = vmatprep.mubr.f32.mxu0 0.0
    %769 = vmatmul.mubr.f32.gmra.mrb[0].mxu0 %v693
    %v770 = vpop.f32.mrb[0].mxu0
    %v771 = vadd.f32 0.0, %v770
    %v772 = vpop.f32.mrb[0].mxu0
    %773 = vdwg.mxu0
    %774 = vrot.lane.b32.xlu0 %v171, 120
    %v775 = vpop.permute.xlu0 %774
    %776 = vrot.lane.b32.xlu0 %v177, 120
    %v777 = vpop.permute.xlu0 %776
    %778 = vrot.lane.b32.xlu0 %v171, 56
    %v779 = vpop.permute.xlu0 %778
    %780 = vrot.lane.b32.xlu0 %v177, 56
    %v781 = vpop.permute.xlu0 %780
    %v782 = vsel %vm202, %v775, 0
    %v784 = vsel %vm202, %v777, 0
    %v786 = vsel %vm202, %v779, 0
    %v788 = vsel %vm202, %v781, 0
    %790 = vmatprep.subr.mxu0 0.0
    %791 = vmatpush1.xpose.msra.mxu0 %v786
    %792 = vmatprep.subr.mxu0 0.0
    %793 = vmatpush1.xpose.msra.mxu0 %v788
    %794 = vmatprep.subr.mxu0 0.0
    %795 = vmatpush1.xpose.msra.mxu0 0.0
    %796 = vmatprep.subr.mxu0 0.0
    %797 = vmatpush1.xpose.msra.mxu0 0.0
    %798 = vmatprep.subr.mxu0 0.0
    %799 = vmatpush1.xpose.msra.mxu0 0.0
    %800 = vmatprep.subr.mxu0 0.0
    %801 = vmatpush1.xpose.msra.mxu0 0.0
    %802 = vmatprep.subr.mxu0 0.0
    %803 = vmatpush1.xpose.msra.mxu0 0.0
    %804 = vmatprep.subr.mxu0 0.0
    %805 = vmatpush1.xpose.msra.mxu0 0.0
    %806 = vmatprep.subr.mxu0 0.0
    %807 = vmatpush1.xpose.msra.mxu0 0.0
    %808 = vmatprep.subr.mxu0 0.0
    %809 = vmatpush1.xpose.msra.mxu0 0.0
    %810 = vmatprep.subr.mxu0 0.0
    %811 = vmatpush1.xpose.msra.mxu0 0.0
    %812 = vmatprep.subr.mxu0 0.0
    %813 = vmatpush1.xpose.msra.mxu0 0.0
    %814 = vmatprep.subr.mxu0 0.0
    %815 = vmatpush1.xpose.msra.mxu0 0.0
    %816 = vmatprep.subr.mxu0 0.0
    %817 = vmatpush1.xpose.msra.mxu0 0.0
    %818 = vmatprep.subr.mxu0 0.0
    %819 = vmatpush1.xpose.msra.mxu0 0.0
    %820 = vmatprep.subr.mxu0 0.0
    %821 = vmatpush1.xpose.msra.mxu0 0.0
    %822 = vmatprep.subr.mxu0 0.0
    %823 = vmatpush1.xpose.msra.mxu0 0.0
    %824 = vmatprep.subr.mxu0 0.0
    %825 = vmatpush1.xpose.msra.mxu0 0.0
    %826 = vmatprep.subr.mxu0 0.0
    %827 = vmatpush1.xpose.msra.mxu0 0.0
    %828 = vmatprep.subr.mxu0 0.0
    %829 = vmatpush1.xpose.msra.mxu0 0.0
    %830 = vmatprep.subr.mxu0 0.0
    %831 = vmatpush1.xpose.msra.mxu0 0.0
    %832 = vmatprep.subr.mxu0 0.0
    %833 = vmatpush1.xpose.msra.mxu0 0.0
    %834 = vmatprep.subr.mxu0 0.0
    %835 = vmatpush1.xpose.msra.mxu0 0.0
    %836 = vmatprep.subr.mxu0 0.0
    %837 = vmatpush1.xpose.msra.mxu0 0.0
    %838 = vmatprep.subr.mxu0 0.0
    %839 = vmatpush1.xpose.msra.mxu0 0.0
    %840 = vmatprep.subr.mxu0 0.0
    %841 = vmatpush1.xpose.msra.mxu0 0.0
    %842 = vmatprep.subr.mxu0 0.0
    %843 = vmatpush1.xpose.msra.mxu0 0.0
    %844 = vmatprep.subr.mxu0 0.0
    %845 = vmatpush1.xpose.msra.mxu0 0.0
    %846 = vmatprep.subr.mxu0 0.0
    %847 = vmatpush1.xpose.msra.mxu0 0.0
    %848 = vmatprep.subr.mxu0 0.0
    %849 = vmatpush1.xpose.msra.mxu0 0.0
    %850 = vmatprep.subr.mxu0 0.0
    %851 = vmatpush1.xpose.msra.mxu0 0.0
    %852 = vmatprep.subr.mxu0 0.0
    %853 = vmatpush1.xpose.msra.mxu0 0.0
    %854 = vmatprep.mubr.f32.mxu0 0.0
    %855 = vmatmul.mubr.f32.gmra.mrb[0].mxu0 %v782
    %v856 = vpop.f32.mrb[0].mxu0
    %v857 = vadd.f32 0.0, %v856
    %v858 = vpop.f32.mrb[0].mxu0
    %859 = vmatprep.mubr.f32.mxu0 0.0
    %860 = vmatmul.mubr.f32.gmra.mrb[0].mxu0 %v784
    %v861 = vpop.f32.mrb[0].mxu0
    %v862 = vadd.f32 0.0, %v861
    %v863 = vpop.f32.mrb[0].mxu0
    %864 = vdwg.mxu0
    %v865 = vsel %vm375, %v766, -inf
    %866 = vmax.xlane.f32.xlu0 %v865
    %v867 = vpop.xlane.xlu0 %866
    %v868 = vsel %vm375, %v771, -inf
    %869 = vmax.xlane.f32.xlu0 %v868
    %v870 = vpop.xlane.xlu0 %869
    %v871 = vsel %vm375, %v857, -inf
    %872 = vmax.xlane.f32.xlu0 %v871
    %v873 = vpop.xlane.xlu0 %872
    %v874 = vsel %vm375, %v862, -inf
    %875 = vmax.xlane.f32.xlu0 %v874
    %v876 = vpop.xlane.xlu0 %875
    %v877 = vsub.f32 %v766, %v867
    %v878 = vsub.f32 %v771, %v870
    %v879 = vsub.f32 %v857, %v873
    %v880 = vsub.f32 %v862, %v876
    %v881 = vmul.f32 %v877, 1.442695
    %v882 = vpow.pop %v881
    %v883 = vmul.f32 %v878, 1.442695
    %v884 = vpow.pop %v883
    %v885 = vmul.f32 %v879, 1.442695
    %v886 = vpow.pop %v885
    %v887 = vmul.f32 %v880, 1.442695
    %v888 = vpow.pop %v887
    %v889 = vsel %vm375, %v882, 0.0
    %890 = vadd.xlane.f32.xlu0 %v889
    %v891 = vpop.xlane.xlu0 %890
    %v892 = vsel %vm375, %v884, 0.0
    %893 = vadd.xlane.f32.xlu0 %v892
    %v894 = vpop.xlane.xlu0 %893
    %v895 = vsel %vm375, %v886, 0.0
    %896 = vadd.xlane.f32.xlu0 %v895
    %v897 = vpop.xlane.xlu0 %896
    %v898 = vsel %vm375, %v888, 0.0
    %899 = vadd.xlane.f32.xlu0 %v898
    %v900 = vpop.xlane.xlu0 %899
    %903 = vrot.lane.b32.xlu0 %v161, 120
    %v904 = vpop.permute.xlu0 %903
    %905 = vrot.lane.b32.xlu0 %v167, 120
    %v906 = vpop.permute.xlu0 %905
    %v910 = vsel %vm375, %v882, 0
    %v913 = vsel %vm375, %v884, 0
    %915 = vmatprep.subr.mxu0 0.0
    %916 = vmatpush1.msra.mxu0 %v904
    %917 = vmatprep.subr.mxu0 0.0
    %918 = vmatpush1.msra.mxu0 %v906
    %919 = vmatprep.subr.mxu0 0.0
    %920 = vmatpush1.msra.mxu0 0.0
    %921 = vmatprep.subr.mxu0 0.0
    %922 = vmatpush1.msra.mxu0 0.0
    %923 = vmatprep.subr.mxu0 0.0
    %924 = vmatpush1.msra.mxu0 0.0
    %925 = vmatprep.subr.mxu0 0.0
    %926 = vmatpush1.msra.mxu0 0.0
    %927 = vmatprep.subr.mxu0 0.0
    %928 = vmatpush1.msra.mxu0 0.0
    %929 = vmatprep.subr.mxu0 0.0
    %930 = vmatpush1.msra.mxu0 0.0
    %931 = vmatprep.subr.mxu0 0.0
    %932 = vmatpush1.msra.mxu0 0.0
    %933 = vmatprep.subr.mxu0 0.0
    %934 = vmatpush1.msra.mxu0 0.0
    %935 = vmatprep.subr.mxu0 0.0
    %936 = vmatpush1.msra.mxu0 0.0
    %937 = vmatprep.subr.mxu0 0.0
    %938 = vmatpush1.msra.mxu0 0.0
    %939 = vmatprep.subr.mxu0 0.0
    %940 = vmatpush1.msra.mxu0 0.0
    %941 = vmatprep.subr.mxu0 0.0
    %942 = vmatpush1.msra.mxu0 0.0
    %943 = vmatprep.subr.mxu0 0.0
    %944 = vmatpush1.msra.mxu0 0.0
    %945 = vmatprep.subr.mxu0 0.0
    %946 = vmatpush1.msra.mxu0 0.0
    %947 = vmatprep.subr.mxu0 0.0
    %948 = vmatpush1.msra.mxu0 0.0
    %949 = vmatprep.subr.mxu0 0.0
    %950 = vmatpush1.msra.mxu0 0.0
    %951 = vmatprep.subr.mxu0 0.0
    %952 = vmatpush1.msra.mxu0 0.0
    %953 = vmatprep.subr.mxu0 0.0
    %954 = vmatpush1.msra.mxu0 0.0
    %955 = vmatprep.subr.mxu0 0.0
    %956 = vmatpush1.msra.mxu0 0.0
    %957 = vmatprep.subr.mxu0 0.0
    %958 = vmatpush1.msra.mxu0 0.0
    %959 = vmatprep.subr.mxu0 0.0
    %960 = vmatpush1.msra.mxu0 0.0
    %961 = vmatprep.subr.mxu0 0.0
    %962 = vmatpush1.msra.mxu0 0.0
    %963 = vmatprep.subr.mxu0 0.0
    %964 = vmatpush1.msra.mxu0 0.0
    %965 = vmatprep.subr.mxu0 0.0
    %966 = vmatpush1.msra.mxu0 0.0
    %967 = vmatprep.subr.mxu0 0.0
    %968 = vmatpush1.msra.mxu0 0.0
    %969 = vmatprep.subr.mxu0 0.0
    %970 = vmatpush1.msra.mxu0 0.0
    %971 = vmatprep.subr.mxu0 0.0
    %972 = vmatpush1.msra.mxu0 0.0
    %973 = vmatprep.subr.mxu0 0.0
    %974 = vmatpush1.msra.mxu0 0.0
    %975 = vmatprep.subr.mxu0 0.0
    %976 = vmatpush1.msra.mxu0 0.0
    %977 = vmatprep.subr.mxu0 0.0
    %978 = vmatpush1.msra.mxu0 0.0
    %979 = vmatprep.mubr.f32.mxu0 0.0
    %980 = vmatmul.mubr.f32.gmra.mrb[0].mxu0 %v910
    %v981 = vpop.f32.mrb[0].mxu0
    %v982 = vadd.f32 0.0, %v981
    %v983 = vpop.f32.mrb[0].mxu0
    %984 = vmatprep.mubr.f32.mxu0 0.0
    %985 = vmatmul.mubr.f32.gmra.mrb[0].mxu0 %v913
    %v986 = vpop.f32.mrb[0].mxu0
    %v987 = vadd.f32 0.0, %v986
    %v988 = vpop.f32.mrb[0].mxu0
    %989 = vdwg.mxu0
    %992 = vrot.lane.b32.xlu0 %v173, 120
    %v993 = vpop.permute.xlu0 %992
    %994 = vrot.lane.b32.xlu0 %v179, 120
    %v995 = vpop.permute.xlu0 %994
    %v999 = vsel %vm375, %v886, 0
    %v1002 = vsel %vm375, %v888, 0
    %1004 = vmatprep.subr.mxu0 0.0
    %1005 = vmatpush1.msra.mxu0 %v993
    %1006 = vmatprep.subr.mxu0 0.0
    %1007 = vmatpush1.msra.mxu0 %v995
    %1008 = vmatprep.subr.mxu0 0.0
    %1009 = vmatpush1.msra.mxu0 0.0
    %1010 = vmatprep.subr.mxu0 0.0
    %1011 = vmatpush1.msra.mxu0 0.0
    %1012 = vmatprep.subr.mxu0 0.0
    %1013 = vmatpush1.msra.mxu0 0.0
    %1014 = vmatprep.subr.mxu0 0.0
    %1015 = vmatpush1.msra.mxu0 0.0
    %1016 = vmatprep.subr.mxu0 0.0
    %1017 = vmatpush1.msra.mxu0 0.0
    %1018 = vmatprep.subr.mxu0 0.0
    %1019 = vmatpush1.msra.mxu0 0.0
    %1020 = vmatprep.subr.mxu0 0.0
    %1021 = vmatpush1.msra.mxu0 0.0
    %1022 = vmatprep.subr.mxu0 0.0
    %1023 = vmatpush1.msra.mxu0 0.0
    %1024 = vmatprep.subr.mxu0 0.0
    %1025 = vmatpush1.msra.mxu0 0.0
    %1026 = vmatprep.subr.mxu0 0.0
    %1027 = vmatpush1.msra.mxu0 0.0
    %1028 = vmatprep.subr.mxu0 0.0
    %1029 = vmatpush1.msra.mxu0 0.0
    %1030 = vmatprep.subr.mxu0 0.0
    %1031 = vmatpush1.msra.mxu0 0.0
    %1032 = vmatprep.subr.mxu0 0.0
    %1033 = vmatpush1.msra.mxu0 0.0
    %1034 = vmatprep.subr.mxu0 0.0
    %1035 = vmatpush1.msra.mxu0 0.0
    %1036 = vmatprep.subr.mxu0 0.0
    %1037 = vmatpush1.msra.mxu0 0.0
    %1038 = vmatprep.subr.mxu0 0.0
    %1039 = vmatpush1.msra.mxu0 0.0
    %1040 = vmatprep.subr.mxu0 0.0
    %1041 = vmatpush1.msra.mxu0 0.0
    %1042 = vmatprep.subr.mxu0 0.0
    %1043 = vmatpush1.msra.mxu0 0.0
    %1044 = vmatprep.subr.mxu0 0.0
    %1045 = vmatpush1.msra.mxu0 0.0
    %1046 = vmatprep.subr.mxu0 0.0
    %1047 = vmatpush1.msra.mxu0 0.0
    %1048 = vmatprep.subr.mxu0 0.0
    %1049 = vmatpush1.msra.mxu0 0.0
    %1050 = vmatprep.subr.mxu0 0.0
    %1051 = vmatpush1.msra.mxu0 0.0
    %1052 = vmatprep.subr.mxu0 0.0
    %1053 = vmatpush1.msra.mxu0 0.0
    %1054 = vmatprep.subr.mxu0 0.0
    %1055 = vmatpush1.msra.mxu0 0.0
    %1056 = vmatprep.subr.mxu0 0.0
    %1057 = vmatpush1.msra.mxu0 0.0
    %1058 = vmatprep.subr.mxu0 0.0
    %1059 = vmatpush1.msra.mxu0 0.0
    %1060 = vmatprep.subr.mxu0 0.0
    %1061 = vmatpush1.msra.mxu0 0.0
    %1062 = vmatprep.subr.mxu0 0.0
    %1063 = vmatpush1.msra.mxu0 0.0
    %1064 = vmatprep.subr.mxu0 0.0
    %1065 = vmatpush1.msra.mxu0 0.0
    %1066 = vmatprep.subr.mxu0 0.0
    %1067 = vmatpush1.msra.mxu0 0.0
    %1068 = vmatprep.mubr.f32.mxu0 0.0
    %1069 = vmatmul.mubr.f32.gmra.mrb[0].mxu0 %v999
    %v1070 = vpop.f32.mrb[0].mxu0
    %v1071 = vadd.f32 0.0, %v1070
    %v1072 = vpop.f32.mrb[0].mxu0
    %1073 = vmatprep.mubr.f32.mxu0 0.0
    %1074 = vmatmul.mubr.f32.gmra.mrb[0].mxu0 %v1002
    %v1075 = vpop.f32.mrb[0].mxu0
    %v1076 = vadd.f32 0.0, %v1075
    %v1077 = vpop.f32.mrb[0].mxu0
    %1078 = vdwg.mxu0
    %v1079 = vrcp.pop %v891
    %v1080 = vmul.f32 %v982, %v1079
    %v1081 = vrcp.pop %v894
    %v1082 = vmul.f32 %v987, %v1081
    %v1083 = vrcp.pop %v897
    %v1084 = vmul.f32 %v1071, %v1083
    %v1085 = vrcp.pop %v900
    %v1086 = vmul.f32 %v1076, %v1085
    %v1088 = vsel %vm202, %v1080, 0
    %v1091 = vsel %vm202, %v1082, 0
    %v1094 = vsel %vm202, %v1084, 0
    %v1097 = vsel %vm202, %v1086, 0
    %1099 = vmatprep.subr.mxu0 0.0
    %1100 = vmatpush1.msra.mxu0 %v182
    %1101 = vmatprep.subr.mxu0 0.0
    %1102 = vmatpush1.msra.mxu0 0.0
    %1103 = vmatprep.subr.mxu0 0.0
    %1104 = vmatpush1.msra.mxu0 0.0
    %1105 = vmatprep.subr.mxu0 0.0
    %1106 = vmatpush1.msra.mxu0 0.0
    %1107 = vmatprep.subr.mxu0 0.0
    %1108 = vmatpush1.msra.mxu0 0.0
    %1109 = vmatprep.subr.mxu0 0.0
    %1110 = vmatpush1.msra.mxu0 0.0
    %1111 = vmatprep.subr.mxu0 0.0
    %1112 = vmatpush1.msra.mxu0 0.0
    %1113 = vmatprep.subr.mxu0 0.0
    %1114 = vmatpush1.msra.mxu0 0.0
    %1115 = vmatprep.subr.mxu0 0.0
    %1116 = vmatpush1.msra.mxu0 0.0
    %1117 = vmatprep.subr.mxu0 0.0
    %1118 = vmatpush1.msra.mxu0 0.0
    %1119 = vmatprep.subr.mxu0 0.0
    %1120 = vmatpush1.msra.mxu0 0.0
    %1121 = vmatprep.subr.mxu0 0.0
    %1122 = vmatpush1.msra.mxu0 0.0
    %1123 = vmatprep.subr.mxu0 0.0
    %1124 = vmatpush1.msra.mxu0 0.0
    %1125 = vmatprep.subr.mxu0 0.0
    %1126 = vmatpush1.msra.mxu0 0.0
    %1127 = vmatprep.subr.mxu0 0.0
    %1128 = vmatpush1.msra.mxu0 0.0
    %1129 = vmatprep.subr.mxu0 0.0
    %1130 = vmatpush1.msra.mxu0 0.0
    %1131 = vmatprep.subr.mxu0 0.0
    %1132 = vmatpush1.msra.mxu0 0.0
    %1133 = vmatprep.subr.mxu0 0.0
    %1134 = vmatpush1.msra.mxu0 0.0
    %1135 = vmatprep.subr.mxu0 0.0
    %1136 = vmatpush1.msra.mxu0 0.0
    %1137 = vmatprep.subr.mxu0 0.0
    %1138 = vmatpush1.msra.mxu0 0.0
    %1139 = vmatprep.subr.mxu0 0.0
    %1140 = vmatpush1.msra.mxu0 0.0
    %1141 = vmatprep.subr.mxu0 0.0
    %1142 = vmatpush1.msra.mxu0 0.0
    %1143 = vmatprep.subr.mxu0 0.0
    %1144 = vmatpush1.msra.mxu0 0.0
    %1145 = vmatprep.subr.mxu0 0.0
    %1146 = vmatpush1.msra.mxu0 0.0
    %1147 = vmatprep.subr.mxu0 0.0
    %1148 = vmatpush1.msra.mxu0 0.0
    %1149 = vmatprep.subr.mxu0 0.0
    %1150 = vmatpush1.msra.mxu0 0.0
    %1151 = vmatprep.subr.mxu0 0.0
    %1152 = vmatpush1.msra.mxu0 0.0
    %1153 = vmatprep.subr.mxu0 0.0
    %1154 = vmatpush1.msra.mxu0 0.0
    %1155 = vmatprep.subr.mxu0 0.0
    %1156 = vmatpush1.msra.mxu0 0.0
    %1157 = vmatprep.subr.mxu0 0.0
    %1158 = vmatpush1.msra.mxu0 0.0
    %1159 = vmatprep.subr.mxu0 0.0
    %1160 = vmatpush1.msra.mxu0 0.0
    %1161 = vmatprep.subr.mxu0 0.0
    %1162 = vmatpush1.msra.mxu0 0.0
    %1163 = vmatprep.mubr.f32.mxu0 0.0
    %1164 = vmatmul.mubr.f32.gmra.mrb[0].mxu0 %v1088
    %v1165 = vpop.f32.mrb[0].mxu0
    %v1166 = vadd.f32 0.0, %v1165
    %v1167 = vpop.f32.mrb[0].mxu0
    %1168 = vmatprep.mubr.f32.mxu0 0.0
    %1169 = vmatmul.mubr.f32.gmra.mrb[0].mxu0 %v1091
    %v1170 = vpop.f32.mrb[0].mxu0
    %v1171 = vadd.f32 0.0, %v1170
    %v1172 = vpop.f32.mrb[0].mxu0
    %1173 = vmatprep.mubr.f32.mxu0 0.0
    %1174 = vmatmul.mubr.f32.gmra.mrb[0].mxu0 %v1094
    %v1175 = vpop.f32.mrb[0].mxu0
    %v1176 = vadd.f32 0.0, %v1175
    %v1177 = vpop.f32.mrb[0].mxu0
    %1178 = vmatprep.mubr.f32.mxu0 0.0
    %1179 = vmatmul.mubr.f32.gmra.mrb[0].mxu0 %v1097
    %v1180 = vpop.f32.mrb[0].mxu0
    %v1181 = vadd.f32 0.0, %v1180
    %v1182 = vpop.f32.mrb[0].mxu0
    %1183 = vdwg.mxu0
    %v1184 = vadd.f32 %v679, %v1166
    %v1185 = vadd.f32 %v680, %v1171
    %v1186 = vadd.f32 %v681, %v1176
    %v1187 = vadd.f32 %v682, %v1181
    %1188 = vrot.lane.b32.xlu0 %v159, 112
    %v1189 = vpop.permute.xlu0 %1188
    %1190 = vrot.lane.b32.xlu0 %v165, 112
    %v1191 = vpop.permute.xlu0 %1190
    %1192 = vrot.lane.b32.xlu0 %v159, 48
    %v1193 = vpop.permute.xlu0 %1192
    %1194 = vrot.lane.b32.xlu0 %v165, 48
    %v1195 = vpop.permute.xlu0 %1194
    %v1196 = vsel %vm202, %v1189, 0
    %v1198 = vsel %vm202, %v1191, 0
    %v1200 = vsel %vm202, %v1193, 0
    %v1202 = vsel %vm202, %v1195, 0
    %1204 = vmatprep.subr.mxu0 0.0
    %1205 = vmatpush1.xpose.msra.mxu0 %v1200
    %1206 = vmatprep.subr.mxu0 0.0
    %1207 = vmatpush1.xpose.msra.mxu0 %v1202
    %1208 = vmatprep.subr.mxu0 0.0
    %1209 = vmatpush1.xpose.msra.mxu0 0.0
    %1210 = vmatprep.subr.mxu0 0.0
    %1211 = vmatpush1.xpose.msra.mxu0 0.0
    %1212 = vmatprep.subr.mxu0 0.0
    %1213 = vmatpush1.xpose.msra.mxu0 0.0
    %1214 = vmatprep.subr.mxu0 0.0
    %1215 = vmatpush1.xpose.msra.mxu0 0.0
    %1216 = vmatprep.subr.mxu0 0.0
    %1217 = vmatpush1.xpose.msra.mxu0 0.0
    %1218 = vmatprep.subr.mxu0 0.0
    %1219 = vmatpush1.xpose.msra.mxu0 0.0
    %1220 = vmatprep.subr.mxu0 0.0
    %1221 = vmatpush1.xpose.msra.mxu0 0.0
    %1222 = vmatprep.subr.mxu0 0.0
    %1223 = vmatpush1.xpose.msra.mxu0 0.0
    %1224 = vmatprep.subr.mxu0 0.0
    %1225 = vmatpush1.xpose.msra.mxu0 0.0
    %1226 = vmatprep.subr.mxu0 0.0
    %1227 = vmatpush1.xpose.msra.mxu0 0.0
    %1228 = vmatprep.subr.mxu0 0.0
    %1229 = vmatpush1.xpose.msra.mxu0 0.0
    %1230 = vmatprep.subr.mxu0 0.0
    %1231 = vmatpush1.xpose.msra.mxu0 0.0
    %1232 = vmatprep.subr.mxu0 0.0
    %1233 = vmatpush1.xpose.msra.mxu0 0.0
    %1234 = vmatprep.subr.mxu0 0.0
    %1235 = vmatpush1.xpose.msra.mxu0 0.0
    %1236 = vmatprep.subr.mxu0 0.0
    %1237 = vmatpush1.xpose.msra.mxu0 0.0
    %1238 = vmatprep.subr.mxu0 0.0
    %1239 = vmatpush1.xpose.msra.mxu0 0.0
    %1240 = vmatprep.subr.mxu0 0.0
    %1241 = vmatpush1.xpose.msra.mxu0 0.0
    %1242 = vmatprep.subr.mxu0 0.0
    %1243 = vmatpush1.xpose.msra.mxu0 0.0
    %1244 = vmatprep.subr.mxu0 0.0
    %1245 = vmatpush1.xpose.msra.mxu0 0.0
    %1246 = vmatprep.subr.mxu0 0.0
    %1247 = vmatpush1.xpose.msra.mxu0 0.0
    %1248 = vmatprep.subr.mxu0 0.0
    %1249 = vmatpush1.xpose.msra.mxu0 0.0
    %1250 = vmatprep.subr.mxu0 0.0
    %1251 = vmatpush1.xpose.msra.mxu0 0.0
    %1252 = vmatprep.subr.mxu0 0.0
    %1253 = vmatpush1.xpose.msra.mxu0 0.0
    %1254 = vmatprep.subr.mxu0 0.0
    %1255 = vmatpush1.xpose.msra.mxu0 0.0
    %1256 = vmatprep.subr.mxu0 0.0
    %1257 = vmatpush1.xpose.msra.mxu0 0.0
    %1258 = vmatprep.subr.mxu0 0.0
    %1259 = vmatpush1.xpose.msra.mxu0 0.0
    %1260 = vmatprep.subr.mxu0 0.0
    %1261 = vmatpush1.xpose.msra.mxu0 0.0
    %1262 = vmatprep.subr.mxu0 0.0
    %1263 = vmatpush1.xpose.msra.mxu0 0.0
    %1264 = vmatprep.subr.mxu0 0.0
    %1265 = vmatpush1.xpose.msra.mxu0 0.0
    %1266 = vmatprep.subr.mxu0 0.0
    %1267 = vmatpush1.xpose.msra.mxu0 0.0
    %1268 = vmatprep.mubr.f32.mxu0 0.0
    %1269 = vmatmul.mubr.f32.gmra.mrb[0].mxu0 %v1196
    %v1270 = vpop.f32.mrb[0].mxu0
    %v1271 = vadd.f32 0.0, %v1270
    %v1272 = vpop.f32.mrb[0].mxu0
    %1273 = vmatprep.mubr.f32.mxu0 0.0
    %1274 = vmatmul.mubr.f32.gmra.mrb[0].mxu0 %v1198
    %v1275 = vpop.f32.mrb[0].mxu0
    %v1276 = vadd.f32 0.0, %v1275
    %v1277 = vpop.f32.mrb[0].mxu0
    %1278 = vdwg.mxu0
    %1279 = vrot.lane.b32.xlu0 %v171, 112
    %v1280 = vpop.permute.xlu0 %1279
    %1281 = vrot.lane.b32.xlu0 %v177, 112
    %v1282 = vpop.permute.xlu0 %1281
    %1283 = vrot.lane.b32.xlu0 %v171, 48
    %v1284 = vpop.permute.xlu0 %1283
    %1285 = vrot.lane.b32.xlu0 %v177, 48
    %v1286 = vpop.permute.xlu0 %1285
    %v1287 = vsel %vm202, %v1280, 0
    %v1289 = vsel %vm202, %v1282, 0
    %v1291 = vsel %vm202, %v1284, 0
    %v1293 = vsel %vm202, %v1286, 0
    %1295 = vmatprep.subr.mxu0 0.0
    %1296 = vmatpush1.xpose.msra.mxu0 %v1291
    %1297 = vmatprep.subr.mxu0 0.0
    %1298 = vmatpush1.xpose.msra.mxu0 %v1293
    %1299 = vmatprep.subr.mxu0 0.0
    %1300 = vmatpush1.xpose.msra.mxu0 0.0
    %1301 = vmatprep.subr.mxu0 0.0
    %1302 = vmatpush1.xpose.msra.mxu0 0.0
    %1303 = vmatprep.subr.mxu0 0.0
    %1304 = vmatpush1.xpose.msra.mxu0 0.0
    %1305 = vmatprep.subr.mxu0 0.0
    %1306 = vmatpush1.xpose.msra.mxu0 0.0
    %1307 = vmatprep.subr.mxu0 0.0
    %1308 = vmatpush1.xpose.msra.mxu0 0.0
    %1309 = vmatprep.subr.mxu0 0.0
    %1310 = vmatpush1.xpose.msra.mxu0 0.0
    %1311 = vmatprep.subr.mxu0 0.0
    %1312 = vmatpush1.xpose.msra.mxu0 0.0
    %1313 = vmatprep.subr.mxu0 0.0
    %1314 = vmatpush1.xpose.msra.mxu0 0.0
    %1315 = vmatprep.subr.mxu0 0.0
    %1316 = vmatpush1.xpose.msra.mxu0 0.0
    %1317 = vmatprep.subr.mxu0 0.0
    %1318 = vmatpush1.xpose.msra.mxu0 0.0
    %1319 = vmatprep.subr.mxu0 0.0
    %1320 = vmatpush1.xpose.msra.mxu0 0.0
    %1321 = vmatprep.subr.mxu0 0.0
    %1322 = vmatpush1.xpose.msra.mxu0 0.0
    %1323 = vmatprep.subr.mxu0 0.0
    %1324 = vmatpush1.xpose.msra.mxu0 0.0
    %1325 = vmatprep.subr.mxu0 0.0
    %1326 = vmatpush1.xpose.msra.mxu0 0.0
    %1327 = vmatprep.subr.mxu0 0.0
    %1328 = vmatpush1.xpose.msra.mxu0 0.0
    %1329 = vmatprep.subr.mxu0 0.0
    %1330 = vmatpush1.xpose.msra.mxu0 0.0
    %1331 = vmatprep.subr.mxu0 0.0
    %1332 = vmatpush1.xpose.msra.mxu0 0.0
    %1333 = vmatprep.subr.mxu0 0.0
    %1334 = vmatpush1.xpose.msra.mxu0 0.0
    %1335 = vmatprep.subr.mxu0 0.0
    %1336 = vmatpush1.xpose.msra.mxu0 0.0
    %1337 = vmatprep.subr.mxu0 0.0
    %1338 = vmatpush1.xpose.msra.mxu0 0.0
    %1339 = vmatprep.subr.mxu0 0.0
    %1340 = vmatpush1.xpose.msra.mxu0 0.0
    %1341 = vmatprep.subr.mxu0 0.0
    %1342 = vmatpush1.xpose.msra.mxu0 0.0
    %1343 = vmatprep.subr.mxu0 0.0
    %1344 = vmatpush1.xpose.msra.mxu0 0.0
    %1345 = vmatprep.subr.mxu0 0.0
    %1346 = vmatpush1.xpose.msra.mxu0 0.0
    %1347 = vmatprep.subr.mxu0 0.0
    %1348 = vmatpush1.xpose.msra.mxu0 0.0
    %1349 = vmatprep.subr.mxu0 0.0
    %1350 = vmatpush1.xpose.msra.mxu0 0.0
    %1351 = vmatprep.subr.mxu0 0.0
    %1352 = vmatpush1.xpose.msra.mxu0 0.0
    %1353 = vmatprep.subr.mxu0 0.0
    %1354 = vmatpush1.xpose.msra.mxu0 0.0
    %1355 = vmatprep.subr.mxu0 0.0
    %1356 = vmatpush1.xpose.msra.mxu0 0.0
    %1357 = vmatprep.subr.mxu0 0.0
    %1358 = vmatpush1.xpose.msra.mxu0 0.0
    %1359 = vmatprep.mubr.f32.mxu0 0.0
    %1360 = vmatmul.mubr.f32.gmra.mrb[0].mxu0 %v1287
    %v1361 = vpop.f32.mrb[0].mxu0
    %v1362 = vadd.f32 0.0, %v1361
    %v1363 = vpop.f32.mrb[0].mxu0
    %1364 = vmatprep.mubr.f32.mxu0 0.0
    %1365 = vmatmul.mubr.f32.gmra.mrb[0].mxu0 %v1289
    %v1366 = vpop.f32.mrb[0].mxu0
    %v1367 = vadd.f32 0.0, %v1366
    %v1368 = vpop.f32.mrb[0].mxu0
    %1369 = vdwg.mxu0
    %v1370 = vsel %vm375, %v1271, -inf
    %1371 = vmax.xlane.f32.xlu0 %v1370
    %v1372 = vpop.xlane.xlu0 %1371
    %v1373 = vsel %vm375, %v1276, -inf
    %1374 = vmax.xlane.f32.xlu0 %v1373
    %v1375 = vpop.xlane.xlu0 %1374
    %v1376 = vsel %vm375, %v1362, -inf
    %1377 = vmax.xlane.f32.xlu0 %v1376
    %v1378 = vpop.xlane.xlu0 %1377
    %v1379 = vsel %vm375, %v1367, -inf
    %1380 = vmax.xlane.f32.xlu0 %v1379
    %v1381 = vpop.xlane.xlu0 %1380
    %v1382 = vsub.f32 %v1271, %v1372
    %v1383 = vsub.f32 %v1276, %v1375
    %v1384 = vsub.f32 %v1362, %v1378
    %v1385 = vsub.f32 %v1367, %v1381
    %v1386 = vmul.f32 %v1382, 1.442695
    %v1387 = vpow.pop %v1386
    %v1388 = vmul.f32 %v1383, 1.442695
    %v1389 = vpow.pop %v1388
    %v1390 = vmul.f32 %v1384, 1.442695
    %v1391 = vpow.pop %v1390
    %v1392 = vmul.f32 %v1385, 1.442695
    %v1393 = vpow.pop %v1392
    %v1394 = vsel %vm375, %v1387, 0.0
    %1395 = vadd.xlane.f32.xlu0 %v1394
    %v1396 = vpop.xlane.xlu0 %1395
    %v1397 = vsel %vm375, %v1389, 0.0
    %1398 = vadd.xlane.f32.xlu0 %v1397
    %v1399 = vpop.xlane.xlu0 %1398
    %v1400 = vsel %vm375, %v1391, 0.0
    %1401 = vadd.xlane.f32.xlu0 %v1400
    %v1402 = vpop.xlane.xlu0 %1401
    %v1403 = vsel %vm375, %v1393, 0.0
    %1404 = vadd.xlane.f32.xlu0 %v1403
    %v1405 = vpop.xlane.xlu0 %1404
    %1406 = vrot.lane.b32.xlu0 %v161, 112
    %v1407 = vpop.permute.xlu0 %1406
    %1408 = vrot.lane.b32.xlu0 %v167, 112
    %v1409 = vpop.permute.xlu0 %1408
    %v1413 = vsel %vm375, %v1387, 0
    %v1416 = vsel %vm375, %v1389, 0
    %1418 = vmatprep.subr.mxu0 0.0
    %1419 = vmatpush1.msra.mxu0 %v1407
    %1420 = vmatprep.subr.mxu0 0.0
    %1421 = vmatpush1.msra.mxu0 %v1409
    %1422 = vmatprep.subr.mxu0 0.0
    %1423 = vmatpush1.msra.mxu0 0.0
    %1424 = vmatprep.subr.mxu0 0.0
    %1425 = vmatpush1.msra.mxu0 0.0
    %1426 = vmatprep.subr.mxu0 0.0
    %1427 = vmatpush1.msra.mxu0 0.0
    %1428 = vmatprep.subr.mxu0 0.0
    %1429 = vmatpush1.msra.mxu0 0.0
    %1430 = vmatprep.subr.mxu0 0.0
    %1431 = vmatpush1.msra.mxu0 0.0
    %1432 = vmatprep.subr.mxu0 0.0
    %1433 = vmatpush1.msra.mxu0 0.0
    %1434 = vmatprep.subr.mxu0 0.0
    %1435 = vmatpush1.msra.mxu0 0.0
    %1436 = vmatprep.subr.mxu0 0.0
    %1437 = vmatpush1.msra.mxu0 0.0
    %1438 = vmatprep.subr.mxu0 0.0
    %1439 = vmatpush1.msra.mxu0 0.0
    %1440 = vmatprep.subr.mxu0 0.0
    %1441 = vmatpush1.msra.mxu0 0.0
    %1442 = vmatprep.subr.mxu0 0.0
    %1443 = vmatpush1.msra.mxu0 0.0
    %1444 = vmatprep.subr.mxu0 0.0
    %1445 = vmatpush1.msra.mxu0 0.0
    %1446 = vmatprep.subr.mxu0 0.0
    %1447 = vmatpush1.msra.mxu0 0.0
    %1448 = vmatprep.subr.mxu0 0.0
    %1449 = vmatpush1.msra.mxu0 0.0
    %1450 = vmatprep.subr.mxu0 0.0
    %1451 = vmatpush1.msra.mxu0 0.0
    %1452 = vmatprep.subr.mxu0 0.0
    %1453 = vmatpush1.msra.mxu0 0.0
    %1454 = vmatprep.subr.mxu0 0.0
    %1455 = vmatpush1.msra.mxu0 0.0
    %1456 = vmatprep.subr.mxu0 0.0
    %1457 = vmatpush1.msra.mxu0 0.0
    %1458 = vmatprep.subr.mxu0 0.0
    %1459 = vmatpush1.msra.mxu0 0.0
    %1460 = vmatprep.subr.mxu0 0.0
    %1461 = vmatpush1.msra.mxu0 0.0
    %1462 = vmatprep.subr.mxu0 0.0
    %1463 = vmatpush1.msra.mxu0 0.0
    %1464 = vmatprep.subr.mxu0 0.0
    %1465 = vmatpush1.msra.mxu0 0.0
    %1466 = vmatprep.subr.mxu0 0.0
    %1467 = vmatpush1.msra.mxu0 0.0
    %1468 = vmatprep.subr.mxu0 0.0
    %1469 = vmatpush1.msra.mxu0 0.0
    %1470 = vmatprep.subr.mxu0 0.0
    %1471 = vmatpush1.msra.mxu0 0.0
    %1472 = vmatprep.subr.mxu0 0.0
    %1473 = vmatpush1.msra.mxu0 0.0
    %1474 = vmatprep.subr.mxu0 0.0
    %1475 = vmatpush1.msra.mxu0 0.0
    %1476 = vmatprep.subr.mxu0 0.0
    %1477 = vmatpush1.msra.mxu0 0.0
    %1478 = vmatprep.subr.mxu0 0.0
    %1479 = vmatpush1.msra.mxu0 0.0
    %1480 = vmatprep.subr.mxu0 0.0
    %1481 = vmatpush1.msra.mxu0 0.0
    %1482 = vmatprep.mubr.f32.mxu0 0.0
    %1483 = vmatmul.mubr.f32.gmra.mrb[0].mxu0 %v1413
    %v1484 = vpop.f32.mrb[0].mxu0
    %v1485 = vadd.f32 0.0, %v1484
    %v1486 = vpop.f32.mrb[0].mxu0
    %1487 = vmatprep.mubr.f32.mxu0 0.0
    %1488 = vmatmul.mubr.f32.gmra.mrb[0].mxu0 %v1416
    %v1489 = vpop.f32.mrb[0].mxu0
    %v1490 = vadd.f32 0.0, %v1489
    %v1491 = vpop.f32.mrb[0].mxu0
    %1492 = vdwg.mxu0
    %1493 = vrot.lane.b32.xlu0 %v173, 112
    %v1494 = vpop.permute.xlu0 %1493
    %1495 = vrot.lane.b32.xlu0 %v179, 112
    %v1496 = vpop.permute.xlu0 %1495
    %v1500 = vsel %vm375, %v1391, 0
    %v1503 = vsel %vm375, %v1393, 0
    %1505 = vmatprep.subr.mxu0 0.0
    %1506 = vmatpush1.msra.mxu0 %v1494
    %1507 = vmatprep.subr.mxu0 0.0
    %1508 = vmatpush1.msra.mxu0 %v1496
    %1509 = vmatprep.subr.mxu0 0.0
    %1510 = vmatpush1.msra.mxu0 0.0
    %1511 = vmatprep.subr.mxu0 0.0
    %1512 = vmatpush1.msra.mxu0 0.0
    %1513 = vmatprep.subr.mxu0 0.0
    %1514 = vmatpush1.msra.mxu0 0.0
    %1515 = vmatprep.subr.mxu0 0.0
    %1516 = vmatpush1.msra.mxu0 0.0
    %1517 = vmatprep.subr.mxu0 0.0
    %1518 = vmatpush1.msra.mxu0 0.0
    %1519 = vmatprep.subr.mxu0 0.0
    %1520 = vmatpush1.msra.mxu0 0.0
    %1521 = vmatprep.subr.mxu0 0.0
    %1522 = vmatpush1.msra.mxu0 0.0
    %1523 = vmatprep.subr.mxu0 0.0
    %1524 = vmatpush1.msra.mxu0 0.0
    %1525 = vmatprep.subr.mxu0 0.0
    %1526 = vmatpush1.msra.mxu0 0.0
    %1527 = vmatprep.subr.mxu0 0.0
    %1528 = vmatpush1.msra.mxu0 0.0
    %1529 = vmatprep.subr.mxu0 0.0
    %1530 = vmatpush1.msra.mxu0 0.0
    %1531 = vmatprep.subr.mxu0 0.0
    %1532 = vmatpush1.msra.mxu0 0.0
    %1533 = vmatprep.subr.mxu0 0.0
    %1534 = vmatpush1.msra.mxu0 0.0
    %1535 = vmatprep.subr.mxu0 0.0
    %1536 = vmatpush1.msra.mxu0 0.0
    %1537 = vmatprep.subr.mxu0 0.0
    %1538 = vmatpush1.msra.mxu0 0.0
    %1539 = vmatprep.subr.mxu0 0.0
    %1540 = vmatpush1.msra.mxu0 0.0
    %1541 = vmatprep.subr.mxu0 0.0
    %1542 = vmatpush1.msra.mxu0 0.0
    %1543 = vmatprep.subr.mxu0 0.0
    %1544 = vmatpush1.msra.mxu0 0.0
    %1545 = vmatprep.subr.mxu0 0.0
    %1546 = vmatpush1.msra.mxu0 0.0
    %1547 = vmatprep.subr.mxu0 0.0
    %1548 = vmatpush1.msra.mxu0 0.0
    %1549 = vmatprep.subr.mxu0 0.0
    %1550 = vmatpush1.msra.mxu0 0.0
    %1551 = vmatprep.subr.mxu0 0.0
    %1552 = vmatpush1.msra.mxu0 0.0
    %1553 = vmatprep.subr.mxu0 0.0
    %1554 = vmatpush1.msra.mxu0 0.0
    %1555 = vmatprep.subr.mxu0 0.0
    %1556 = vmatpush1.msra.mxu0 0.0
    %1557 = vmatprep.subr.mxu0 0.0
    %1558 = vmatpush1.msra.mxu0 0.0
    %1559 = vmatprep.subr.mxu0 0.0
    %1560 = vmatpush1.msra.mxu0 0.0
    %1561 = vmatprep.subr.mxu0 0.0
    %1562 = vmatpush1.msra.mxu0 0.0
    %1563 = vmatprep.subr.mxu0 0.0
    %1564 = vmatpush1.msra.mxu0 0.0
    %1565 = vmatprep.subr.mxu0 0.0
    %1566 = vmatpush1.msra.mxu0 0.0
    %1567 = vmatprep.subr.mxu0 0.0
    %1568 = vmatpush1.msra.mxu0 0.0
    %1569 = vmatprep.mubr.f32.mxu0 0.0
    %1570 = vmatmul.mubr.f32.gmra.mrb[0].mxu0 %v1500
    %v1571 = vpop.f32.mrb[0].mxu0
    %v1572 = vadd.f32 0.0, %v1571
    %v1573 = vpop.f32.mrb[0].mxu0
    %1574 = vmatprep.mubr.f32.mxu0 0.0
    %1575 = vmatmul.mubr.f32.gmra.mrb[0].mxu0 %v1503
    %v1576 = vpop.f32.mrb[0].mxu0
    %v1577 = vadd.f32 0.0, %v1576
    %v1578 = vpop.f32.mrb[0].mxu0
    %1579 = vdwg.mxu0
    %v1580 = vrcp.pop %v1396
    %v1581 = vmul.f32 %v1485, %v1580
    %v1582 = vrcp.pop %v1399
    %v1583 = vmul.f32 %v1490, %v1582
    %v1584 = vrcp.pop %v1402
    %v1585 = vmul.f32 %v1572, %v1584
    %v1586 = vrcp.pop %v1405
    %v1587 = vmul.f32 %v1577, %v1586
    %v1589 = vsel %vm202, %v1581, 0
    %v1592 = vsel %vm202, %v1583, 0
    %v1595 = vsel %vm202, %v1585, 0
    %v1598 = vsel %vm202, %v1587, 0
    %1600 = vmatprep.subr.mxu0 0.0
    %1601 = vmatpush1.msra.mxu0 %v183
    %1602 = vmatprep.subr.mxu0 0.0
    %1603 = vmatpush1.msra.mxu0 0.0
    %1604 = vmatprep.subr.mxu0 0.0
    %1605 = vmatpush1.msra.mxu0 0.0
    %1606 = vmatprep.subr.mxu0 0.0
    %1607 = vmatpush1.msra.mxu0 0.0
    %1608 = vmatprep.subr.mxu0 0.0
    %1609 = vmatpush1.msra.mxu0 0.0
    %1610 = vmatprep.subr.mxu0 0.0
    %1611 = vmatpush1.msra.mxu0 0.0
    %1612 = vmatprep.subr.mxu0 0.0
    %1613 = vmatpush1.msra.mxu0 0.0
    %1614 = vmatprep.subr.mxu0 0.0
    %1615 = vmatpush1.msra.mxu0 0.0
    %1616 = vmatprep.subr.mxu0 0.0
    %1617 = vmatpush1.msra.mxu0 0.0
    %1618 = vmatprep.subr.mxu0 0.0
    %1619 = vmatpush1.msra.mxu0 0.0
    %1620 = vmatprep.subr.mxu0 0.0
    %1621 = vmatpush1.msra.mxu0 0.0
    %1622 = vmatprep.subr.mxu0 0.0
    %1623 = vmatpush1.msra.mxu0 0.0
    %1624 = vmatprep.subr.mxu0 0.0
    %1625 = vmatpush1.msra.mxu0 0.0
    %1626 = vmatprep.subr.mxu0 0.0
    %1627 = vmatpush1.msra.mxu0 0.0
    %1628 = vmatprep.subr.mxu0 0.0
    %1629 = vmatpush1.msra.mxu0 0.0
    %1630 = vmatprep.subr.mxu0 0.0
    %1631 = vmatpush1.msra.mxu0 0.0
    %1632 = vmatprep.subr.mxu0 0.0
    %1633 = vmatpush1.msra.mxu0 0.0
    %1634 = vmatprep.subr.mxu0 0.0
    %1635 = vmatpush1.msra.mxu0 0.0
    %1636 = vmatprep.subr.mxu0 0.0
    %1637 = vmatpush1.msra.mxu0 0.0
    %1638 = vmatprep.subr.mxu0 0.0
    %1639 = vmatpush1.msra.mxu0 0.0
    %1640 = vmatprep.subr.mxu0 0.0
    %1641 = vmatpush1.msra.mxu0 0.0
    %1642 = vmatprep.subr.mxu0 0.0
    %1643 = vmatpush1.msra.mxu0 0.0
    %1644 = vmatprep.subr.mxu0 0.0
    %1645 = vmatpush1.msra.mxu0 0.0
    %1646 = vmatprep.subr.mxu0 0.0
    %1647 = vmatpush1.msra.mxu0 0.0
    %1648 = vmatprep.subr.mxu0 0.0
    %1649 = vmatpush1.msra.mxu0 0.0
    %1650 = vmatprep.subr.mxu0 0.0
    %1651 = vmatpush1.msra.mxu0 0.0
    %1652 = vmatprep.subr.mxu0 0.0
    %1653 = vmatpush1.msra.mxu0 0.0
    %1654 = vmatprep.subr.mxu0 0.0
    %1655 = vmatpush1.msra.mxu0 0.0
    %1656 = vmatprep.subr.mxu0 0.0
    %1657 = vmatpush1.msra.mxu0 0.0
    %1658 = vmatprep.subr.mxu0 0.0
    %1659 = vmatpush1.msra.mxu0 0.0
    %1660 = vmatprep.subr.mxu0 0.0
    %1661 = vmatpush1.msra.mxu0 0.0
    %1662 = vmatprep.subr.mxu0 0.0
    %1663 = vmatpush1.msra.mxu0 0.0
    %1664 = vmatprep.mubr.f32.mxu0 0.0
    %1665 = vmatmul.mubr.f32.gmra.mrb[0].mxu0 %v1589
    %v1666 = vpop.f32.mrb[0].mxu0
    %v1667 = vadd.f32 0.0, %v1666
    %v1668 = vpop.f32.mrb[0].mxu0
    %1669 = vmatprep.mubr.f32.mxu0 0.0
    %1670 = vmatmul.mubr.f32.gmra.mrb[0].mxu0 %v1592
    %v1671 = vpop.f32.mrb[0].mxu0
    %v1672 = vadd.f32 0.0, %v1671
    %v1673 = vpop.f32.mrb[0].mxu0
    %1674 = vmatprep.mubr.f32.mxu0 0.0
    %1675 = vmatmul.mubr.f32.gmra.mrb[0].mxu0 %v1595
    %v1676 = vpop.f32.mrb[0].mxu0
    %v1677 = vadd.f32 0.0, %v1676
    %v1678 = vpop.f32.mrb[0].mxu0
    %1679 = vmatprep.mubr.f32.mxu0 0.0
    %1680 = vmatmul.mubr.f32.gmra.mrb[0].mxu0 %v1598
    %v1681 = vpop.f32.mrb[0].mxu0
    %v1682 = vadd.f32 0.0, %v1681
    %v1683 = vpop.f32.mrb[0].mxu0
    %1684 = vdwg.mxu0
    %v1685 = vadd.f32 %v1184, %v1667
    %v1686 = vadd.f32 %v1185, %v1672
    %v1687 = vadd.f32 %v1186, %v1677
    %v1688 = vadd.f32 %v1187, %v1682
    %1689 = vrot.lane.b32.xlu0 %v159, 104
    %v1690 = vpop.permute.xlu0 %1689
    %1691 = vrot.lane.b32.xlu0 %v165, 104
    %v1692 = vpop.permute.xlu0 %1691
    %1693 = vrot.lane.b32.xlu0 %v159, 40
    %v1694 = vpop.permute.xlu0 %1693
    %1695 = vrot.lane.b32.xlu0 %v165, 40
    %v1696 = vpop.permute.xlu0 %1695
    %v1697 = vsel %vm202, %v1690, 0
    %v1699 = vsel %vm202, %v1692, 0
    %v1701 = vsel %vm202, %v1694, 0
    %v1703 = vsel %vm202, %v1696, 0
    %1705 = vmatprep.subr.mxu0 0.0
    %1706 = vmatpush1.xpose.msra.mxu0 %v1701
    %1707 = vmatprep.subr.mxu0 0.0
    %1708 = vmatpush1.xpose.msra.mxu0 %v1703
    %1709 = vmatprep.subr.mxu0 0.0
    %1710 = vmatpush1.xpose.msra.mxu0 0.0
    %1711 = vmatprep.subr.mxu0 0.0
    %1712 = vmatpush1.xpose.msra.mxu0 0.0
    %1713 = vmatprep.subr.mxu0 0.0
    %1714 = vmatpush1.xpose.msra.mxu0 0.0
    %1715 = vmatprep.subr.mxu0 0.0
    %1716 = vmatpush1.xpose.msra.mxu0 0.0
    %1717 = vmatprep.subr.mxu0 0.0
    %1718 = vmatpush1.xpose.msra.mxu0 0.0
    %1719 = vmatprep.subr.mxu0 0.0
    %1720 = vmatpush1.xpose.msra.mxu0 0.0
    %1721 = vmatprep.subr.mxu0 0.0
    %1722 = vmatpush1.xpose.msra.mxu0 0.0
    %1723 = vmatprep.subr.mxu0 0.0
    %1724 = vmatpush1.xpose.msra.mxu0 0.0
    %1725 = vmatprep.subr.mxu0 0.0
    %1726 = vmatpush1.xpose.msra.mxu0 0.0
    %1727 = vmatprep.subr.mxu0 0.0
    %1728 = vmatpush1.xpose.msra.mxu0 0.0
    %1729 = vmatprep.subr.mxu0 0.0
    %1730 = vmatpush1.xpose.msra.mxu0 0.0
    %1731 = vmatprep.subr.mxu0 0.0
    %1732 = vmatpush1.xpose.msra.mxu0 0.0
    %1733 = vmatprep.subr.mxu0 0.0
    %1734 = vmatpush1.xpose.msra.mxu0 0.0
    %1735 = vmatprep.subr.mxu0 0.0
    %1736 = vmatpush1.xpose.msra.mxu0 0.0
    %1737 = vmatprep.subr.mxu0 0.0
    %1738 = vmatpush1.xpose.msra.mxu0 0.0
    %1739 = vmatprep.subr.mxu0 0.0
    %1740 = vmatpush1.xpose.msra.mxu0 0.0
    %1741 = vmatprep.subr.mxu0 0.0
    %1742 = vmatpush1.xpose.msra.mxu0 0.0
    %1743 = vmatprep.subr.mxu0 0.0
    %1744 = vmatpush1.xpose.msra.mxu0 0.0
    %1745 = vmatprep.subr.mxu0 0.0
    %1746 = vmatpush1.xpose.msra.mxu0 0.0
    %1747 = vmatprep.subr.mxu0 0.0
    %1748 = vmatpush1.xpose.msra.mxu0 0.0
    %1749 = vmatprep.subr.mxu0 0.0
    %1750 = vmatpush1.xpose.msra.mxu0 0.0
    %1751 = vmatprep.subr.mxu0 0.0
    %1752 = vmatpush1.xpose.msra.mxu0 0.0
    %1753 = vmatprep.subr.mxu0 0.0
    %1754 = vmatpush1.xpose.msra.mxu0 0.0
    %1755 = vmatprep.subr.mxu0 0.0
    %1756 = vmatpush1.xpose.msra.mxu0 0.0
    %1757 = vmatprep.subr.mxu0 0.0
    %1758 = vmatpush1.xpose.msra.mxu0 0.0
    %1759 = vmatprep.subr.mxu0 0.0
    %1760 = vmatpush1.xpose.msra.mxu0 0.0
    %1761 = vmatprep.subr.mxu0 0.0
    %1762 = vmatpush1.xpose.msra.mxu0 0.0
    %1763 = vmatprep.subr.mxu0 0.0
    %1764 = vmatpush1.xpose.msra.mxu0 0.0
    %1765 = vmatprep.subr.mxu0 0.0
    %1766 = vmatpush1.xpose.msra.mxu0 0.0
    %1767 = vmatprep.subr.mxu0 0.0
    %1768 = vmatpush1.xpose.msra.mxu0 0.0
    %1769 = vmatprep.mubr.f32.mxu0 0.0
    %1770 = vmatmul.mubr.f32.gmra.mrb[0].mxu0 %v1697
    %v1771 = vpop.f32.mrb[0].mxu0
    %v1772 = vadd.f32 0.0, %v1771
    %v1773 = vpop.f32.mrb[0].mxu0
    %1774 = vmatprep.mubr.f32.mxu0 0.0
    %1775 = vmatmul.mubr.f32.gmra.mrb[0].mxu0 %v1699
    %v1776 = vpop.f32.mrb[0].mxu0
    %v1777 = vadd.f32 0.0, %v1776
    %v1778 = vpop.f32.mrb[0].mxu0
    %1779 = vdwg.mxu0
    %1780 = vrot.lane.b32.xlu0 %v171, 104
    %v1781 = vpop.permute.xlu0 %1780
    %1782 = vrot.lane.b32.xlu0 %v177, 104
    %v1783 = vpop.permute.xlu0 %1782
    %1784 = vrot.lane.b32.xlu0 %v171, 40
    %v1785 = vpop.permute.xlu0 %1784
    %1786 = vrot.lane.b32.xlu0 %v177, 40
    %v1787 = vpop.permute.xlu0 %1786
    %v1788 = vsel %vm202, %v1781, 0
    %v1790 = vsel %vm202, %v1783, 0
    %v1792 = vsel %vm202, %v1785, 0
    %v1794 = vsel %vm202, %v1787, 0
    %1796 = vmatprep.subr.mxu0 0.0
    %1797 = vmatpush1.xpose.msra.mxu0 %v1792
    %1798 = vmatprep.subr.mxu0 0.0
    %1799 = vmatpush1.xpose.msra.mxu0 %v1794
    %1800 = vmatprep.subr.mxu0 0.0
    %1801 = vmatpush1.xpose.msra.mxu0 0.0
    %1802 = vmatprep.subr.mxu0 0.0
    %1803 = vmatpush1.xpose.msra.mxu0 0.0
    %1804 = vmatprep.subr.mxu0 0.0
    %1805 = vmatpush1.xpose.msra.mxu0 0.0
    %1806 = vmatprep.subr.mxu0 0.0
    %1807 = vmatpush1.xpose.msra.mxu0 0.0
    %1808 = vmatprep.subr.mxu0 0.0
    %1809 = vmatpush1.xpose.msra.mxu0 0.0
    %1810 = vmatprep.subr.mxu0 0.0
    %1811 = vmatpush1.xpose.msra.mxu0 0.0
    %1812 = vmatprep.subr.mxu0 0.0
    %1813 = vmatpush1.xpose.msra.mxu0 0.0
    %1814 = vmatprep.subr.mxu0 0.0
    %1815 = vmatpush1.xpose.msra.mxu0 0.0
    %1816 = vmatprep.subr.mxu0 0.0
    %1817 = vmatpush1.xpose.msra.mxu0 0.0
    %1818 = vmatprep.subr.mxu0 0.0
    %1819 = vmatpush1.xpose.msra.mxu0 0.0
    %1820 = vmatprep.subr.mxu0 0.0
    %1821 = vmatpush1.xpose.msra.mxu0 0.0
    %1822 = vmatprep.subr.mxu0 0.0
    %1823 = vmatpush1.xpose.msra.mxu0 0.0
    %1824 = vmatprep.subr.mxu0 0.0
    %1825 = vmatpush1.xpose.msra.mxu0 0.0
    %1826 = vmatprep.subr.mxu0 0.0
    %1827 = vmatpush1.xpose.msra.mxu0 0.0
    %1828 = vmatprep.subr.mxu0 0.0
    %1829 = vmatpush1.xpose.msra.mxu0 0.0
    %1830 = vmatprep.subr.mxu0 0.0
    %1831 = vmatpush1.xpose.msra.mxu0 0.0
    %1832 = vmatprep.subr.mxu0 0.0
    %1833 = vmatpush1.xpose.msra.mxu0 0.0
    %1834 = vmatprep.subr.mxu0 0.0
    %1835 = vmatpush1.xpose.msra.mxu0 0.0
    %1836 = vmatprep.subr.mxu0 0.0
    %1837 = vmatpush1.xpose.msra.mxu0 0.0
    %1838 = vmatprep.subr.mxu0 0.0
    %1839 = vmatpush1.xpose.msra.mxu0 0.0
    %1840 = vmatprep.subr.mxu0 0.0
    %1841 = vmatpush1.xpose.msra.mxu0 0.0
    %1842 = vmatprep.subr.mxu0 0.0
    %1843 = vmatpush1.xpose.msra.mxu0 0.0
    %1844 = vmatprep.subr.mxu0 0.0
    %1845 = vmatpush1.xpose.msra.mxu0 0.0
    %1846 = vmatprep.subr.mxu0 0.0
    %1847 = vmatpush1.xpose.msra.mxu0 0.0
    %1848 = vmatprep.subr.mxu0 0.0
    %1849 = vmatpush1.xpose.msra.mxu0 0.0
    %1850 = vmatprep.subr.mxu0 0.0
    %1851 = vmatpush1.xpose.msra.mxu0 0.0
    %1852 = vmatprep.subr.mxu0 0.0
    %1853 = vmatpush1.xpose.msra.mxu0 0.0
    %1854 = vmatprep.subr.mxu0 0.0
    %1855 = vmatpush1.xpose.msra.mxu0 0.0
    %1856 = vmatprep.subr.mxu0 0.0
    %1857 = vmatpush1.xpose.msra.mxu0 0.0
    %1858 = vmatprep.subr.mxu0 0.0
    %1859 = vmatpush1.xpose.msra.mxu0 0.0
    %1860 = vmatprep.mubr.f32.mxu0 0.0
    %1861 = vmatmul.mubr.f32.gmra.mrb[0].mxu0 %v1788
    %v1862 = vpop.f32.mrb[0].mxu0
    %v1863 = vadd.f32 0.0, %v1862
    %v1864 = vpop.f32.mrb[0].mxu0
    %1865 = vmatprep.mubr.f32.mxu0 0.0
    %1866 = vmatmul.mubr.f32.gmra.mrb[0].mxu0 %v1790
    %v1867 = vpop.f32.mrb[0].mxu0
    %v1868 = vadd.f32 0.0, %v1867
    %v1869 = vpop.f32.mrb[0].mxu0
    %1870 = vdwg.mxu0
    %v1871 = vsel %vm375, %v1772, -inf
    %1872 = vmax.xlane.f32.xlu0 %v1871
    %v1873 = vpop.xlane.xlu0 %1872
    %v1874 = vsel %vm375, %v1777, -inf
    %1875 = vmax.xlane.f32.xlu0 %v1874
    %v1876 = vpop.xlane.xlu0 %1875
    %v1877 = vsel %vm375, %v1863, -inf
    %1878 = vmax.xlane.f32.xlu0 %v1877
    %v1879 = vpop.xlane.xlu0 %1878
    %v1880 = vsel %vm375, %v1868, -inf
    %1881 = vmax.xlane.f32.xlu0 %v1880
    %v1882 = vpop.xlane.xlu0 %1881
    %v1883 = vsub.f32 %v1772, %v1873
    %v1884 = vsub.f32 %v1777, %v1876
    %v1885 = vsub.f32 %v1863, %v1879
    %v1886 = vsub.f32 %v1868, %v1882
    %v1887 = vmul.f32 %v1883, 1.442695
    %v1888 = vpow.pop %v1887
    %v1889 = vmul.f32 %v1884, 1.442695
    %v1890 = vpow.pop %v1889
    %v1891 = vmul.f32 %v1885, 1.442695
    %v1892 = vpow.pop %v1891
    %v1893 = vmul.f32 %v1886, 1.442695
    %v1894 = vpow.pop %v1893
    %v1895 = vsel %vm375, %v1888, 0.0
    %1896 = vadd.xlane.f32.xlu0 %v1895
    %v1897 = vpop.xlane.xlu0 %1896
    %v1898 = vsel %vm375, %v1890, 0.0
    %1899 = vadd.xlane.f32.xlu0 %v1898
    %v1900 = vpop.xlane.xlu0 %1899
    %v1901 = vsel %vm375, %v1892, 0.0
    %1902 = vadd.xlane.f32.xlu0 %v1901
    %v1903 = vpop.xlane.xlu0 %1902
    %v1904 = vsel %vm375, %v1894, 0.0
    %1905 = vadd.xlane.f32.xlu0 %v1904
    %v1906 = vpop.xlane.xlu0 %1905
    %1907 = vrot.lane.b32.xlu0 %v161, 104
    %v1908 = vpop.permute.xlu0 %1907
    %1909 = vrot.lane.b32.xlu0 %v167, 104
    %v1910 = vpop.permute.xlu0 %1909
    %v1914 = vsel %vm375, %v1888, 0
    %v1917 = vsel %vm375, %v1890, 0
    %1919 = vmatprep.subr.mxu0 0.0
    %1920 = vmatpush1.msra.mxu0 %v1908
    %1921 = vmatprep.subr.mxu0 0.0
    %1922 = vmatpush1.msra.mxu0 %v1910
    %1923 = vmatprep.subr.mxu0 0.0
    %1924 = vmatpush1.msra.mxu0 0.0
    %1925 = vmatprep.subr.mxu0 0.0
    %1926 = vmatpush1.msra.mxu0 0.0
    %1927 = vmatprep.subr.mxu0 0.0
    %1928 = vmatpush1.msra.mxu0 0.0
    %1929 = vmatprep.subr.mxu0 0.0
    %1930 = vmatpush1.msra.mxu0 0.0
    %1931 = vmatprep.subr.mxu0 0.0
    %1932 = vmatpush1.msra.mxu0 0.0
    %1933 = vmatprep.subr.mxu0 0.0
    %1934 = vmatpush1.msra.mxu0 0.0
    %1935 = vmatprep.subr.mxu0 0.0
    %1936 = vmatpush1.msra.mxu0 0.0
    %1937 = vmatprep.subr.mxu0 0.0
    %1938 = vmatpush1.msra.mxu0 0.0
    %1939 = vmatprep.subr.mxu0 0.0
    %1940 = vmatpush1.msra.mxu0 0.0
    %1941 = vmatprep.subr.mxu0 0.0
    %1942 = vmatpush1.msra.mxu0 0.0
    %1943 = vmatprep.subr.mxu0 0.0
    %1944 = vmatpush1.msra.mxu0 0.0
    %1945 = vmatprep.subr.mxu0 0.0
    %1946 = vmatpush1.msra.mxu0 0.0
    %1947 = vmatprep.subr.mxu0 0.0
    %1948 = vmatpush1.msra.mxu0 0.0
    %1949 = vmatprep.subr.mxu0 0.0
    %1950 = vmatpush1.msra.mxu0 0.0
    %1951 = vmatprep.subr.mxu0 0.0
    %1952 = vmatpush1.msra.mxu0 0.0
    %1953 = vmatprep.subr.mxu0 0.0
    %1954 = vmatpush1.msra.mxu0 0.0
    %1955 = vmatprep.subr.mxu0 0.0
    %1956 = vmatpush1.msra.mxu0 0.0
    %1957 = vmatprep.subr.mxu0 0.0
    %1958 = vmatpush1.msra.mxu0 0.0
    %1959 = vmatprep.subr.mxu0 0.0
    %1960 = vmatpush1.msra.mxu0 0.0
    %1961 = vmatprep.subr.mxu0 0.0
    %1962 = vmatpush1.msra.mxu0 0.0
    %1963 = vmatprep.subr.mxu0 0.0
    %1964 = vmatpush1.msra.mxu0 0.0
    %1965 = vmatprep.subr.mxu0 0.0
    %1966 = vmatpush1.msra.mxu0 0.0
    %1967 = vmatprep.subr.mxu0 0.0
    %1968 = vmatpush1.msra.mxu0 0.0
    %1969 = vmatprep.subr.mxu0 0.0
    %1970 = vmatpush1.msra.mxu0 0.0
    %1971 = vmatprep.subr.mxu0 0.0
    %1972 = vmatpush1.msra.mxu0 0.0
    %1973 = vmatprep.subr.mxu0 0.0
    %1974 = vmatpush1.msra.mxu0 0.0
    %1975 = vmatprep.subr.mxu0 0.0
    %1976 = vmatpush1.msra.mxu0 0.0
    %1977 = vmatprep.subr.mxu0 0.0
    %1978 = vmatpush1.msra.mxu0 0.0
    %1979 = vmatprep.subr.mxu0 0.0
    %1980 = vmatpush1.msra.mxu0 0.0
    %1981 = vmatprep.subr.mxu0 0.0
    %1982 = vmatpush1.msra.mxu0 0.0
    %1983 = vmatprep.mubr.f32.mxu0 0.0
    %1984 = vmatmul.mubr.f32.gmra.mrb[0].mxu0 %v1914
    %v1985 = vpop.f32.mrb[0].mxu0
    %v1986 = vadd.f32 0.0, %v1985
    %v1987 = vpop.f32.mrb[0].mxu0
    %1988 = vmatprep.mubr.f32.mxu0 0.0
    %1989 = vmatmul.mubr.f32.gmra.mrb[0].mxu0 %v1917
    %v1990 = vpop.f32.mrb[0].mxu0
    %v1991 = vadd.f32 0.0, %v1990
    %v1992 = vpop.f32.mrb[0].mxu0
    %1993 = vdwg.mxu0
    %1994 = vrot.lane.b32.xlu0 %v173, 104
    %v1995 = vpop.permute.xlu0 %1994
    %1996 = vrot.lane.b32.xlu0 %v179, 104
    %v1997 = vpop.permute.xlu0 %1996
    %v2001 = vsel %vm375, %v1892, 0
    %v2004 = vsel %vm375, %v1894, 0
    %2006 = vmatprep.subr.mxu0 0.0
    %2007 = vmatpush1.msra.mxu0 %v1995
    %2008 = vmatprep.subr.mxu0 0.0
    %2009 = vmatpush1.msra.mxu0 %v1997
    %2010 = vmatprep.subr.mxu0 0.0
    %2011 = vmatpush1.msra.mxu0 0.0
    %2012 = vmatprep.subr.mxu0 0.0
    %2013 = vmatpush1.msra.mxu0 0.0
    %2014 = vmatprep.subr.mxu0 0.0
    %2015 = vmatpush1.msra.mxu0 0.0
    %2016 = vmatprep.subr.mxu0 0.0
    %2017 = vmatpush1.msra.mxu0 0.0
    %2018 = vmatprep.subr.mxu0 0.0
    %2019 = vmatpush1.msra.mxu0 0.0
    %2020 = vmatprep.subr.mxu0 0.0
    %2021 = vmatpush1.msra.mxu0 0.0
    %2022 = vmatprep.subr.mxu0 0.0
    %2023 = vmatpush1.msra.mxu0 0.0
    %2024 = vmatprep.subr.mxu0 0.0
    %2025 = vmatpush1.msra.mxu0 0.0
    %2026 = vmatprep.subr.mxu0 0.0
    %2027 = vmatpush1.msra.mxu0 0.0
    %2028 = vmatprep.subr.mxu0 0.0
    %2029 = vmatpush1.msra.mxu0 0.0
    %2030 = vmatprep.subr.mxu0 0.0
    %2031 = vmatpush1.msra.mxu0 0.0
    %2032 = vmatprep.subr.mxu0 0.0
    %2033 = vmatpush1.msra.mxu0 0.0
    %2034 = vmatprep.subr.mxu0 0.0
    %2035 = vmatpush1.msra.mxu0 0.0
    %2036 = vmatprep.subr.mxu0 0.0
    %2037 = vmatpush1.msra.mxu0 0.0
    %2038 = vmatprep.subr.mxu0 0.0
    %2039 = vmatpush1.msra.mxu0 0.0
    %2040 = vmatprep.subr.mxu0 0.0
    %2041 = vmatpush1.msra.mxu0 0.0
    %2042 = vmatprep.subr.mxu0 0.0
    %2043 = vmatpush1.msra.mxu0 0.0
    %2044 = vmatprep.subr.mxu0 0.0
    %2045 = vmatpush1.msra.mxu0 0.0
    %2046 = vmatprep.subr.mxu0 0.0
    %2047 = vmatpush1.msra.mxu0 0.0
    %2048 = vmatprep.subr.mxu0 0.0
    %2049 = vmatpush1.msra.mxu0 0.0
    %2050 = vmatprep.subr.mxu0 0.0
    %2051 = vmatpush1.msra.mxu0 0.0
    %2052 = vmatprep.subr.mxu0 0.0
    %2053 = vmatpush1.msra.mxu0 0.0
    %2054 = vmatprep.subr.mxu0 0.0
    %2055 = vmatpush1.msra.mxu0 0.0
    %2056 = vmatprep.subr.mxu0 0.0
    %2057 = vmatpush1.msra.mxu0 0.0
    %2058 = vmatprep.subr.mxu0 0.0
    %2059 = vmatpush1.msra.mxu0 0.0
    %2060 = vmatprep.subr.mxu0 0.0
    %2061 = vmatpush1.msra.mxu0 0.0
    %2062 = vmatprep.subr.mxu0 0.0
    %2063 = vmatpush1.msra.mxu0 0.0
    %2064 = vmatprep.subr.mxu0 0.0
    %2065 = vmatpush1.msra.mxu0 0.0
    %2066 = vmatprep.subr.mxu0 0.0
    %2067 = vmatpush1.msra.mxu0 0.0
    %2068 = vmatprep.subr.mxu0 0.0
    %2069 = vmatpush1.msra.mxu0 0.0
    %2070 = vmatprep.mubr.f32.mxu0 0.0
    %2071 = vmatmul.mubr.f32.gmra.mrb[0].mxu0 %v2001
    %v2072 = vpop.f32.mrb[0].mxu0
    %v2073 = vadd.f32 0.0, %v2072
    %v2074 = vpop.f32.mrb[0].mxu0
    %2075 = vmatprep.mubr.f32.mxu0 0.0
    %2076 = vmatmul.mubr.f32.gmra.mrb[0].mxu0 %v2004
    %v2077 = vpop.f32.mrb[0].mxu0
    %v2078 = vadd.f32 0.0, %v2077
    %v2079 = vpop.f32.mrb[0].mxu0
    %2080 = vdwg.mxu0
    %v2081 = vrcp.pop %v1897
    %v2082 = vmul.f32 %v1986, %v2081
    %v2083 = vrcp.pop %v1900
    %v2084 = vmul.f32 %v1991, %v2083
    %v2085 = vrcp.pop %v1903
    %v2086 = vmul.f32 %v2073, %v2085
    %v2087 = vrcp.pop %v1906
    %v2088 = vmul.f32 %v2078, %v2087
    %v2090 = vsel %vm202, %v2082, 0
    %v2093 = vsel %vm202, %v2084, 0
    %v2096 = vsel %vm202, %v2086, 0
    %v2099 = vsel %vm202, %v2088, 0
    %2101 = vmatprep.subr.mxu0 0.0
    %2102 = vmatpush1.msra.mxu0 %v184
    %2103 = vmatprep.subr.mxu0 0.0
    %2104 = vmatpush1.msra.mxu0 0.0
    %2105 = vmatprep.subr.mxu0 0.0
    %2106 = vmatpush1.msra.mxu0 0.0
    %2107 = vmatprep.subr.mxu0 0.0
    %2108 = vmatpush1.msra.mxu0 0.0
    %2109 = vmatprep.subr.mxu0 0.0
    %2110 = vmatpush1.msra.mxu0 0.0
    %2111 = vmatprep.subr.mxu0 0.0
    %2112 = vmatpush1.msra.mxu0 0.0
    %2113 = vmatprep.subr.mxu0 0.0
    %2114 = vmatpush1.msra.mxu0 0.0
    %2115 = vmatprep.subr.mxu0 0.0
    %2116 = vmatpush1.msra.mxu0 0.0
    %2117 = vmatprep.subr.mxu0 0.0
    %2118 = vmatpush1.msra.mxu0 0.0
    %2119 = vmatprep.subr.mxu0 0.0
    %2120 = vmatpush1.msra.mxu0 0.0
    %2121 = vmatprep.subr.mxu0 0.0
    %2122 = vmatpush1.msra.mxu0 0.0
    %2123 = vmatprep.subr.mxu0 0.0
    %2124 = vmatpush1.msra.mxu0 0.0
    %2125 = vmatprep.subr.mxu0 0.0
    %2126 = vmatpush1.msra.mxu0 0.0
    %2127 = vmatprep.subr.mxu0 0.0
    %2128 = vmatpush1.msra.mxu0 0.0
    %2129 = vmatprep.subr.mxu0 0.0
    %2130 = vmatpush1.msra.mxu0 0.0
    %2131 = vmatprep.subr.mxu0 0.0
    %2132 = vmatpush1.msra.mxu0 0.0
    %2133 = vmatprep.subr.mxu0 0.0
    %2134 = vmatpush1.msra.mxu0 0.0
    %2135 = vmatprep.subr.mxu0 0.0
    %2136 = vmatpush1.msra.mxu0 0.0
    %2137 = vmatprep.subr.mxu0 0.0
    %2138 = vmatpush1.msra.mxu0 0.0
    %2139 = vmatprep.subr.mxu0 0.0
    %2140 = vmatpush1.msra.mxu0 0.0
    %2141 = vmatprep.subr.mxu0 0.0
    %2142 = vmatpush1.msra.mxu0 0.0
    %2143 = vmatprep.subr.mxu0 0.0
    %2144 = vmatpush1.msra.mxu0 0.0
    %2145 = vmatprep.subr.mxu0 0.0
    %2146 = vmatpush1.msra.mxu0 0.0
    %2147 = vmatprep.subr.mxu0 0.0
    %2148 = vmatpush1.msra.mxu0 0.0
    %2149 = vmatprep.subr.mxu0 0.0
    %2150 = vmatpush1.msra.mxu0 0.0
    %2151 = vmatprep.subr.mxu0 0.0
    %2152 = vmatpush1.msra.mxu0 0.0
    %2153 = vmatprep.subr.mxu0 0.0
    %2154 = vmatpush1.msra.mxu0 0.0
    %2155 = vmatprep.subr.mxu0 0.0
    %2156 = vmatpush1.msra.mxu0 0.0
    %2157 = vmatprep.subr.mxu0 0.0
    %2158 = vmatpush1.msra.mxu0 0.0
    %2159 = vmatprep.subr.mxu0 0.0
    %2160 = vmatpush1.msra.mxu0 0.0
    %2161 = vmatprep.subr.mxu0 0.0
    %2162 = vmatpush1.msra.mxu0 0.0
    %2163 = vmatprep.subr.mxu0 0.0
    %2164 = vmatpush1.msra.mxu0 0.0
    %2165 = vmatprep.mubr.f32.mxu0 0.0
    %2166 = vmatmul.mubr.f32.gmra.mrb[0].mxu0 %v2090
    %v2167 = vpop.f32.mrb[0].mxu0
    %v2168 = vadd.f32 0.0, %v2167
    %v2169 = vpop.f32.mrb[0].mxu0
    %2170 = vmatprep.mubr.f32.mxu0 0.0
    %2171 = vmatmul.mubr.f32.gmra.mrb[0].mxu0 %v2093
    %v2172 = vpop.f32.mrb[0].mxu0
    %v2173 = vadd.f32 0.0, %v2172
    %v2174 = vpop.f32.mrb[0].mxu0
    %2175 = vmatprep.mubr.f32.mxu0 0.0
    %2176 = vmatmul.mubr.f32.gmra.mrb[0].mxu0 %v2096
    %v2177 = vpop.f32.mrb[0].mxu0
    %v2178 = vadd.f32 0.0, %v2177
    %v2179 = vpop.f32.mrb[0].mxu0
    %2180 = vmatprep.mubr.f32.mxu0 0.0
    %2181 = vmatmul.mubr.f32.gmra.mrb[0].mxu0 %v2099
    %v2182 = vpop.f32.mrb[0].mxu0
    %v2183 = vadd.f32 0.0, %v2182
    %v2184 = vpop.f32.mrb[0].mxu0
    %2185 = vdwg.mxu0
    %v2186 = vadd.f32 %v1685, %v2168
    %v2187 = vadd.f32 %v1686, %v2173
    %v2188 = vadd.f32 %v1687, %v2178
    %v2189 = vadd.f32 %v1688, %v2183
    %2190 = vrot.lane.b32.xlu0 %v159, 96
    %v2191 = vpop.permute.xlu0 %2190
    %2192 = vrot.lane.b32.xlu0 %v165, 96
    %v2193 = vpop.permute.xlu0 %2192
    %2194 = vrot.lane.b32.xlu0 %v159, 32
    %v2195 = vpop.permute.xlu0 %2194
    %2196 = vrot.lane.b32.xlu0 %v165, 32
    %v2197 = vpop.permute.xlu0 %2196
    %v2198 = vsel %vm202, %v2191, 0
    %v2200 = vsel %vm202, %v2193, 0
    %v2202 = vsel %vm202, %v2195, 0
    %v2204 = vsel %vm202, %v2197, 0
    %2206 = vmatprep.subr.mxu0 0.0
    %2207 = vmatpush1.xpose.msra.mxu0 %v2202
    %2208 = vmatprep.subr.mxu0 0.0
    %2209 = vmatpush1.xpose.msra.mxu0 %v2204
    %2210 = vmatprep.subr.mxu0 0.0
    %2211 = vmatpush1.xpose.msra.mxu0 0.0
    %2212 = vmatprep.subr.mxu0 0.0
    %2213 = vmatpush1.xpose.msra.mxu0 0.0
    %2214 = vmatprep.subr.mxu0 0.0
    %2215 = vmatpush1.xpose.msra.mxu0 0.0
    %2216 = vmatprep.subr.mxu0 0.0
    %2217 = vmatpush1.xpose.msra.mxu0 0.0
    %2218 = vmatprep.subr.mxu0 0.0
    %2219 = vmatpush1.xpose.msra.mxu0 0.0
    %2220 = vmatprep.subr.mxu0 0.0
    %2221 = vmatpush1.xpose.msra.mxu0 0.0
    %2222 = vmatprep.subr.mxu0 0.0
    %2223 = vmatpush1.xpose.msra.mxu0 0.0
    %2224 = vmatprep.subr.mxu0 0.0
    %2225 = vmatpush1.xpose.msra.mxu0 0.0
    %2226 = vmatprep.subr.mxu0 0.0
    %2227 = vmatpush1.xpose.msra.mxu0 0.0
    %2228 = vmatprep.subr.mxu0 0.0
    %2229 = vmatpush1.xpose.msra.mxu0 0.0
    %2230 = vmatprep.subr.mxu0 0.0
    %2231 = vmatpush1.xpose.msra.mxu0 0.0
    %2232 = vmatprep.subr.mxu0 0.0
    %2233 = vmatpush1.xpose.msra.mxu0 0.0
    %2234 = vmatprep.subr.mxu0 0.0
    %2235 = vmatpush1.xpose.msra.mxu0 0.0
    %2236 = vmatprep.subr.mxu0 0.0
    %2237 = vmatpush1.xpose.msra.mxu0 0.0
    %2238 = vmatprep.subr.mxu0 0.0
    %2239 = vmatpush1.xpose.msra.mxu0 0.0
    %2240 = vmatprep.subr.mxu0 0.0
    %2241 = vmatpush1.xpose.msra.mxu0 0.0
    %2242 = vmatprep.subr.mxu0 0.0
    %2243 = vmatpush1.xpose.msra.mxu0 0.0
    %2244 = vmatprep.subr.mxu0 0.0
    %2245 = vmatpush1.xpose.msra.mxu0 0.0
    %2246 = vmatprep.subr.mxu0 0.0
    %2247 = vmatpush1.xpose.msra.mxu0 0.0
    %2248 = vmatprep.subr.mxu0 0.0
    %2249 = vmatpush1.xpose.msra.mxu0 0.0
    %2250 = vmatprep.subr.mxu0 0.0
    %2251 = vmatpush1.xpose.msra.mxu0 0.0
    %2252 = vmatprep.subr.mxu0 0.0
    %2253 = vmatpush1.xpose.msra.mxu0 0.0
    %2254 = vmatprep.subr.mxu0 0.0
    %2255 = vmatpush1.xpose.msra.mxu0 0.0
    %2256 = vmatprep.subr.mxu0 0.0
    %2257 = vmatpush1.xpose.msra.mxu0 0.0
    %2258 = vmatprep.subr.mxu0 0.0
    %2259 = vmatpush1.xpose.msra.mxu0 0.0
    %2260 = vmatprep.subr.mxu0 0.0
    %2261 = vmatpush1.xpose.msra.mxu0 0.0
    %2262 = vmatprep.subr.mxu0 0.0
    %2263 = vmatpush1.xpose.msra.mxu0 0.0
    %2264 = vmatprep.subr.mxu0 0.0
    %2265 = vmatpush1.xpose.msra.mxu0 0.0
    %2266 = vmatprep.subr.mxu0 0.0
    %2267 = vmatpush1.xpose.msra.mxu0 0.0
    %2268 = vmatprep.subr.mxu0 0.0
    %2269 = vmatpush1.xpose.msra.mxu0 0.0
    %2270 = vmatprep.mubr.f32.mxu0 0.0
    %2271 = vmatmul.mubr.f32.gmra.mrb[0].mxu0 %v2198
    %v2272 = vpop.f32.mrb[0].mxu0
    %v2273 = vadd.f32 0.0, %v2272
    %v2274 = vpop.f32.mrb[0].mxu0
    %2275 = vmatprep.mubr.f32.mxu0 0.0
    %2276 = vmatmul.mubr.f32.gmra.mrb[0].mxu0 %v2200
    %v2277 = vpop.f32.mrb[0].mxu0
    %v2278 = vadd.f32 0.0, %v2277
    %v2279 = vpop.f32.mrb[0].mxu0
    %2280 = vdwg.mxu0
    %2281 = vrot.lane.b32.xlu0 %v171, 96
    %v2282 = vpop.permute.xlu0 %2281
    %2283 = vrot.lane.b32.xlu0 %v177, 96
    %v2284 = vpop.permute.xlu0 %2283
    %2285 = vrot.lane.b32.xlu0 %v171, 32
    %v2286 = vpop.permute.xlu0 %2285
    %2287 = vrot.lane.b32.xlu0 %v177, 32
    %v2288 = vpop.permute.xlu0 %2287
    %v2289 = vsel %vm202, %v2282, 0
    %v2291 = vsel %vm202, %v2284, 0
    %v2293 = vsel %vm202, %v2286, 0
    %v2295 = vsel %vm202, %v2288, 0
    %2297 = vmatprep.subr.mxu0 0.0
    %2298 = vmatpush1.xpose.msra.mxu0 %v2293
    %2299 = vmatprep.subr.mxu0 0.0
    %2300 = vmatpush1.xpose.msra.mxu0 %v2295
    %2301 = vmatprep.subr.mxu0 0.0
    %2302 = vmatpush1.xpose.msra.mxu0 0.0
    %2303 = vmatprep.subr.mxu0 0.0
    %2304 = vmatpush1.xpose.msra.mxu0 0.0
    %2305 = vmatprep.subr.mxu0 0.0
    %2306 = vmatpush1.xpose.msra.mxu0 0.0
    %2307 = vmatprep.subr.mxu0 0.0
    %2308 = vmatpush1.xpose.msra.mxu0 0.0
    %2309 = vmatprep.subr.mxu0 0.0
    %2310 = vmatpush1.xpose.msra.mxu0 0.0
    %2311 = vmatprep.subr.mxu0 0.0
    %2312 = vmatpush1.xpose.msra.mxu0 0.0
    %2313 = vmatprep.subr.mxu0 0.0
    %2314 = vmatpush1.xpose.msra.mxu0 0.0
    %2315 = vmatprep.subr.mxu0 0.0
    %2316 = vmatpush1.xpose.msra.mxu0 0.0
    %2317 = vmatprep.subr.mxu0 0.0
    %2318 = vmatpush1.xpose.msra.mxu0 0.0
    %2319 = vmatprep.subr.mxu0 0.0
    %2320 = vmatpush1.xpose.msra.mxu0 0.0
    %2321 = vmatprep.subr.mxu0 0.0
    %2322 = vmatpush1.xpose.msra.mxu0 0.0
    %2323 = vmatprep.subr.mxu0 0.0
    %2324 = vmatpush1.xpose.msra.mxu0 0.0
    %2325 = vmatprep.subr.mxu0 0.0
    %2326 = vmatpush1.xpose.msra.mxu0 0.0
    %2327 = vmatprep.subr.mxu0 0.0
    %2328 = vmatpush1.xpose.msra.mxu0 0.0
    %2329 = vmatprep.subr.mxu0 0.0
    %2330 = vmatpush1.xpose.msra.mxu0 0.0
    %2331 = vmatprep.subr.mxu0 0.0
    %2332 = vmatpush1.xpose.msra.mxu0 0.0
    %2333 = vmatprep.subr.mxu0 0.0
    %2334 = vmatpush1.xpose.msra.mxu0 0.0
    %2335 = vmatprep.subr.mxu0 0.0
    %2336 = vmatpush1.xpose.msra.mxu0 0.0
    %2337 = vmatprep.subr.mxu0 0.0
    %2338 = vmatpush1.xpose.msra.mxu0 0.0
    %2339 = vmatprep.subr.mxu0 0.0
    %2340 = vmatpush1.xpose.msra.mxu0 0.0
    %2341 = vmatprep.subr.mxu0 0.0
    %2342 = vmatpush1.xpose.msra.mxu0 0.0
    %2343 = vmatprep.subr.mxu0 0.0
    %2344 = vmatpush1.xpose.msra.mxu0 0.0
    %2345 = vmatprep.subr.mxu0 0.0
    %2346 = vmatpush1.xpose.msra.mxu0 0.0
    %2347 = vmatprep.subr.mxu0 0.0
    %2348 = vmatpush1.xpose.msra.mxu0 0.0
    %2349 = vmatprep.subr.mxu0 0.0
    %2350 = vmatpush1.xpose.msra.mxu0 0.0
    %2351 = vmatprep.subr.mxu0 0.0
    %2352 = vmatpush1.xpose.msra.mxu0 0.0
    %2353 = vmatprep.subr.mxu0 0.0
    %2354 = vmatpush1.xpose.msra.mxu0 0.0
    %2355 = vmatprep.subr.mxu0 0.0
    %2356 = vmatpush1.xpose.msra.mxu0 0.0
    %2357 = vmatprep.subr.mxu0 0.0
    %2358 = vmatpush1.xpose.msra.mxu0 0.0
    %2359 = vmatprep.subr.mxu0 0.0
    %2360 = vmatpush1.xpose.msra.mxu0 0.0
    %2361 = vmatprep.mubr.f32.mxu0 0.0
    %2362 = vmatmul.mubr.f32.gmra.mrb[0].mxu0 %v2289
    %v2363 = vpop.f32.mrb[0].mxu0
    %v2364 = vadd.f32 0.0, %v2363
    %v2365 = vpop.f32.mrb[0].mxu0
    %2366 = vmatprep.mubr.f32.mxu0 0.0
    %2367 = vmatmul.mubr.f32.gmra.mrb[0].mxu0 %v2291
    %v2368 = vpop.f32.mrb[0].mxu0
    %v2369 = vadd.f32 0.0, %v2368
    %v2370 = vpop.f32.mrb[0].mxu0
    %2371 = vdwg.mxu0
    %v2372 = vsel %vm375, %v2273, -inf
    %2373 = vmax.xlane.f32.xlu0 %v2372
    %v2374 = vpop.xlane.xlu0 %2373
    %v2375 = vsel %vm375, %v2278, -inf
    %2376 = vmax.xlane.f32.xlu0 %v2375
    %v2377 = vpop.xlane.xlu0 %2376
    %v2378 = vsel %vm375, %v2364, -inf
    %2379 = vmax.xlane.f32.xlu0 %v2378
    %v2380 = vpop.xlane.xlu0 %2379
    %v2381 = vsel %vm375, %v2369, -inf
    %2382 = vmax.xlane.f32.xlu0 %v2381
    %v2383 = vpop.xlane.xlu0 %2382
    %v2384 = vsub.f32 %v2273, %v2374
    %v2385 = vsub.f32 %v2278, %v2377
    %v2386 = vsub.f32 %v2364, %v2380
    %v2387 = vsub.f32 %v2369, %v2383
    %v2388 = vmul.f32 %v2384, 1.442695
    %v2389 = vpow.pop %v2388
    %v2390 = vmul.f32 %v2385, 1.442695
    %v2391 = vpow.pop %v2390
    %v2392 = vmul.f32 %v2386, 1.442695
    %v2393 = vpow.pop %v2392
    %v2394 = vmul.f32 %v2387, 1.442695
    %v2395 = vpow.pop %v2394
    %v2396 = vsel %vm375, %v2389, 0.0
    %2397 = vadd.xlane.f32.xlu0 %v2396
    %v2398 = vpop.xlane.xlu0 %2397
    %v2399 = vsel %vm375, %v2391, 0.0
    %2400 = vadd.xlane.f32.xlu0 %v2399
    %v2401 = vpop.xlane.xlu0 %2400
    %v2402 = vsel %vm375, %v2393, 0.0
    %2403 = vadd.xlane.f32.xlu0 %v2402
    %v2404 = vpop.xlane.xlu0 %2403
    %v2405 = vsel %vm375, %v2395, 0.0
    %2406 = vadd.xlane.f32.xlu0 %v2405
    %v2407 = vpop.xlane.xlu0 %2406
    %2408 = vrot.lane.b32.xlu0 %v161, 96
    %v2409 = vpop.permute.xlu0 %2408
    %2410 = vrot.lane.b32.xlu0 %v167, 96
    %v2411 = vpop.permute.xlu0 %2410
    %v2415 = vsel %vm375, %v2389, 0
    %v2418 = vsel %vm375, %v2391, 0
    %2420 = vmatprep.subr.mxu0 0.0
    %2421 = vmatpush1.msra.mxu0 %v2409
    %2422 = vmatprep.subr.mxu0 0.0
    %2423 = vmatpush1.msra.mxu0 %v2411
    %2424 = vmatprep.subr.mxu0 0.0
    %2425 = vmatpush1.msra.mxu0 0.0
    %2426 = vmatprep.subr.mxu0 0.0
    %2427 = vmatpush1.msra.mxu0 0.0
    %2428 = vmatprep.subr.mxu0 0.0
    %2429 = vmatpush1.msra.mxu0 0.0
    %2430 = vmatprep.subr.mxu0 0.0
    %2431 = vmatpush1.msra.mxu0 0.0
    %2432 = vmatprep.subr.mxu0 0.0
    %2433 = vmatpush1.msra.mxu0 0.0
    %2434 = vmatprep.subr.mxu0 0.0
    %2435 = vmatpush1.msra.mxu0 0.0
    %2436 = vmatprep.subr.mxu0 0.0
    %2437 = vmatpush1.msra.mxu0 0.0
    %2438 = vmatprep.subr.mxu0 0.0
    %2439 = vmatpush1.msra.mxu0 0.0
    %2440 = vmatprep.subr.mxu0 0.0
    %2441 = vmatpush1.msra.mxu0 0.0
    %2442 = vmatprep.subr.mxu0 0.0
    %2443 = vmatpush1.msra.mxu0 0.0
    %2444 = vmatprep.subr.mxu0 0.0
    %2445 = vmatpush1.msra.mxu0 0.0
    %2446 = vmatprep.subr.mxu0 0.0
    %2447 = vmatpush1.msra.mxu0 0.0
    %2448 = vmatprep.subr.mxu0 0.0
    %2449 = vmatpush1.msra.mxu0 0.0
    %2450 = vmatprep.subr.mxu0 0.0
    %2451 = vmatpush1.msra.mxu0 0.0
    %2452 = vmatprep.subr.mxu0 0.0
    %2453 = vmatpush1.msra.mxu0 0.0
    %2454 = vmatprep.subr.mxu0 0.0
    %2455 = vmatpush1.msra.mxu0 0.0
    %2456 = vmatprep.subr.mxu0 0.0
    %2457 = vmatpush1.msra.mxu0 0.0
    %2458 = vmatprep.subr.mxu0 0.0
    %2459 = vmatpush1.msra.mxu0 0.0
    %2460 = vmatprep.subr.mxu0 0.0
    %2461 = vmatpush1.msra.mxu0 0.0
    %2462 = vmatprep.subr.mxu0 0.0
    %2463 = vmatpush1.msra.mxu0 0.0
    %2464 = vmatprep.subr.mxu0 0.0
    %2465 = vmatpush1.msra.mxu0 0.0
    %2466 = vmatprep.subr.mxu0 0.0
    %2467 = vmatpush1.msra.mxu0 0.0
    %2468 = vmatprep.subr.mxu0 0.0
    %2469 = vmatpush1.msra.mxu0 0.0
    %2470 = vmatprep.subr.mxu0 0.0
    %2471 = vmatpush1.msra.mxu0 0.0
    %2472 = vmatprep.subr.mxu0 0.0
    %2473 = vmatpush1.msra.mxu0 0.0
    %2474 = vmatprep.subr.mxu0 0.0
    %2475 = vmatpush1.msra.mxu0 0.0
    %2476 = vmatprep.subr.mxu0 0.0
    %2477 = vmatpush1.msra.mxu0 0.0
    %2478 = vmatprep.subr.mxu0 0.0
    %2479 = vmatpush1.msra.mxu0 0.0
    %2480 = vmatprep.subr.mxu0 0.0
    %2481 = vmatpush1.msra.mxu0 0.0
    %2482 = vmatprep.subr.mxu0 0.0
    %2483 = vmatpush1.msra.mxu0 0.0
    %2484 = vmatprep.mubr.f32.mxu0 0.0
    %2485 = vmatmul.mubr.f32.gmra.mrb[0].mxu0 %v2415
    %v2486 = vpop.f32.mrb[0].mxu0
    %v2487 = vadd.f32 0.0, %v2486
    %v2488 = vpop.f32.mrb[0].mxu0
    %2489 = vmatprep.mubr.f32.mxu0 0.0
    %2490 = vmatmul.mubr.f32.gmra.mrb[0].mxu0 %v2418
    %v2491 = vpop.f32.mrb[0].mxu0
    %v2492 = vadd.f32 0.0, %v2491
    %v2493 = vpop.f32.mrb[0].mxu0
    %2494 = vdwg.mxu0
    %2495 = vrot.lane.b32.xlu0 %v173, 96
    %v2496 = vpop.permute.xlu0 %2495
    %2497 = vrot.lane.b32.xlu0 %v179, 96
    %v2498 = vpop.permute.xlu0 %2497
    %v2502 = vsel %vm375, %v2393, 0
    %v2505 = vsel %vm375, %v2395, 0
    %2507 = vmatprep.subr.mxu0 0.0
    %2508 = vmatpush1.msra.mxu0 %v2496
    %2509 = vmatprep.subr.mxu0 0.0
    %2510 = vmatpush1.msra.mxu0 %v2498
    %2511 = vmatprep.subr.mxu0 0.0
    %2512 = vmatpush1.msra.mxu0 0.0
    %2513 = vmatprep.subr.mxu0 0.0
    %2514 = vmatpush1.msra.mxu0 0.0
    %2515 = vmatprep.subr.mxu0 0.0
    %2516 = vmatpush1.msra.mxu0 0.0
    %2517 = vmatprep.subr.mxu0 0.0
    %2518 = vmatpush1.msra.mxu0 0.0
    %2519 = vmatprep.subr.mxu0 0.0
    %2520 = vmatpush1.msra.mxu0 0.0
    %2521 = vmatprep.subr.mxu0 0.0
    %2522 = vmatpush1.msra.mxu0 0.0
    %2523 = vmatprep.subr.mxu0 0.0
    %2524 = vmatpush1.msra.mxu0 0.0
    %2525 = vmatprep.subr.mxu0 0.0
    %2526 = vmatpush1.msra.mxu0 0.0
    %2527 = vmatprep.subr.mxu0 0.0
    %2528 = vmatpush1.msra.mxu0 0.0
    %2529 = vmatprep.subr.mxu0 0.0
    %2530 = vmatpush1.msra.mxu0 0.0
    %2531 = vmatprep.subr.mxu0 0.0
    %2532 = vmatpush1.msra.mxu0 0.0
    %2533 = vmatprep.subr.mxu0 0.0
    %2534 = vmatpush1.msra.mxu0 0.0
    %2535 = vmatprep.subr.mxu0 0.0
    %2536 = vmatpush1.msra.mxu0 0.0
    %2537 = vmatprep.subr.mxu0 0.0
    %2538 = vmatpush1.msra.mxu0 0.0
    %2539 = vmatprep.subr.mxu0 0.0
    %2540 = vmatpush1.msra.mxu0 0.0
    %2541 = vmatprep.subr.mxu0 0.0
    %2542 = vmatpush1.msra.mxu0 0.0
    %2543 = vmatprep.subr.mxu0 0.0
    %2544 = vmatpush1.msra.mxu0 0.0
    %2545 = vmatprep.subr.mxu0 0.0
    %2546 = vmatpush1.msra.mxu0 0.0
    %2547 = vmatprep.subr.mxu0 0.0
    %2548 = vmatpush1.msra.mxu0 0.0
    %2549 = vmatprep.subr.mxu0 0.0
    %2550 = vmatpush1.msra.mxu0 0.0
    %2551 = vmatprep.subr.mxu0 0.0
    %2552 = vmatpush1.msra.mxu0 0.0
    %2553 = vmatprep.subr.mxu0 0.0
    %2554 = vmatpush1.msra.mxu0 0.0
    %2555 = vmatprep.subr.mxu0 0.0
    %2556 = vmatpush1.msra.mxu0 0.0
    %2557 = vmatprep.subr.mxu0 0.0
    %2558 = vmatpush1.msra.mxu0 0.0
    %2559 = vmatprep.subr.mxu0 0.0
    %2560 = vmatpush1.msra.mxu0 0.0
    %2561 = vmatprep.subr.mxu0 0.0
    %2562 = vmatpush1.msra.mxu0 0.0
    %2563 = vmatprep.subr.mxu0 0.0
    %2564 = vmatpush1.msra.mxu0 0.0
    %2565 = vmatprep.subr.mxu0 0.0
    %2566 = vmatpush1.msra.mxu0 0.0
    %2567 = vmatprep.subr.mxu0 0.0
    %2568 = vmatpush1.msra.mxu0 0.0
    %2569 = vmatprep.subr.mxu0 0.0
    %2570 = vmatpush1.msra.mxu0 0.0
    %2571 = vmatprep.mubr.f32.mxu0 0.0
    %2572 = vmatmul.mubr.f32.gmra.mrb[0].mxu0 %v2502
    %v2573 = vpop.f32.mrb[0].mxu0
    %v2574 = vadd.f32 0.0, %v2573
    %v2575 = vpop.f32.mrb[0].mxu0
    %2576 = vmatprep.mubr.f32.mxu0 0.0
    %2577 = vmatmul.mubr.f32.gmra.mrb[0].mxu0 %v2505
    %v2578 = vpop.f32.mrb[0].mxu0
    %v2579 = vadd.f32 0.0, %v2578
    %v2580 = vpop.f32.mrb[0].mxu0
    %2581 = vdwg.mxu0
    %v2582 = vrcp.pop %v2398
    %v2583 = vmul.f32 %v2487, %v2582
    %v2584 = vrcp.pop %v2401
    %v2585 = vmul.f32 %v2492, %v2584
    %v2586 = vrcp.pop %v2404
    %v2587 = vmul.f32 %v2574, %v2586
    %v2588 = vrcp.pop %v2407
    %v2589 = vmul.f32 %v2579, %v2588
    %v2591 = vsel %vm202, %v2583, 0
    %v2594 = vsel %vm202, %v2585, 0
    %v2597 = vsel %vm202, %v2587, 0
    %v2600 = vsel %vm202, %v2589, 0
    %2602 = vmatprep.subr.mxu0 0.0
    %2603 = vmatpush1.msra.mxu0 %v185
    %2604 = vmatprep.subr.mxu0 0.0
    %2605 = vmatpush1.msra.mxu0 0.0
    %2606 = vmatprep.subr.mxu0 0.0
    %2607 = vmatpush1.msra.mxu0 0.0
    %2608 = vmatprep.subr.mxu0 0.0
    %2609 = vmatpush1.msra.mxu0 0.0
    %2610 = vmatprep.subr.mxu0 0.0
    %2611 = vmatpush1.msra.mxu0 0.0
    %2612 = vmatprep.subr.mxu0 0.0
    %2613 = vmatpush1.msra.mxu0 0.0
    %2614 = vmatprep.subr.mxu0 0.0
    %2615 = vmatpush1.msra.mxu0 0.0
    %2616 = vmatprep.subr.mxu0 0.0
    %2617 = vmatpush1.msra.mxu0 0.0
    %2618 = vmatprep.subr.mxu0 0.0
    %2619 = vmatpush1.msra.mxu0 0.0
    %2620 = vmatprep.subr.mxu0 0.0
    %2621 = vmatpush1.msra.mxu0 0.0
    %2622 = vmatprep.subr.mxu0 0.0
    %2623 = vmatpush1.msra.mxu0 0.0
    %2624 = vmatprep.subr.mxu0 0.0
    %2625 = vmatpush1.msra.mxu0 0.0
    %2626 = vmatprep.subr.mxu0 0.0
    %2627 = vmatpush1.msra.mxu0 0.0
    %2628 = vmatprep.subr.mxu0 0.0
    %2629 = vmatpush1.msra.mxu0 0.0
    %2630 = vmatprep.subr.mxu0 0.0
    %2631 = vmatpush1.msra.mxu0 0.0
    %2632 = vmatprep.subr.mxu0 0.0
    %2633 = vmatpush1.msra.mxu0 0.0
    %2634 = vmatprep.subr.mxu0 0.0
    %2635 = vmatpush1.msra.mxu0 0.0
    %2636 = vmatprep.subr.mxu0 0.0
    %2637 = vmatpush1.msra.mxu0 0.0
    %2638 = vmatprep.subr.mxu0 0.0
    %2639 = vmatpush1.msra.mxu0 0.0
    %2640 = vmatprep.subr.mxu0 0.0
    %2641 = vmatpush1.msra.mxu0 0.0
    %2642 = vmatprep.subr.mxu0 0.0
    %2643 = vmatpush1.msra.mxu0 0.0
    %2644 = vmatprep.subr.mxu0 0.0
    %2645 = vmatpush1.msra.mxu0 0.0
    %2646 = vmatprep.subr.mxu0 0.0
    %2647 = vmatpush1.msra.mxu0 0.0
    %2648 = vmatprep.subr.mxu0 0.0
    %2649 = vmatpush1.msra.mxu0 0.0
    %2650 = vmatprep.subr.mxu0 0.0
    %2651 = vmatpush1.msra.mxu0 0.0
    %2652 = vmatprep.subr.mxu0 0.0
    %2653 = vmatpush1.msra.mxu0 0.0
    %2654 = vmatprep.subr.mxu0 0.0
    %2655 = vmatpush1.msra.mxu0 0.0
    %2656 = vmatprep.subr.mxu0 0.0
    %2657 = vmatpush1.msra.mxu0 0.0
    %2658 = vmatprep.subr.mxu0 0.0
    %2659 = vmatpush1.msra.mxu0 0.0
    %2660 = vmatprep.subr.mxu0 0.0
    %2661 = vmatpush1.msra.mxu0 0.0
    %2662 = vmatprep.subr.mxu0 0.0
    %2663 = vmatpush1.msra.mxu0 0.0
    %2664 = vmatprep.subr.mxu0 0.0
    %2665 = vmatpush1.msra.mxu0 0.0
    %2666 = vmatprep.mubr.f32.mxu0 0.0
    %2667 = vmatmul.mubr.f32.gmra.mrb[0].mxu0 %v2591
    %v2668 = vpop.f32.mrb[0].mxu0
    %v2669 = vadd.f32 0.0, %v2668
    %v2670 = vpop.f32.mrb[0].mxu0
    %2671 = vmatprep.mubr.f32.mxu0 0.0
    %2672 = vmatmul.mubr.f32.gmra.mrb[0].mxu0 %v2594
    %v2673 = vpop.f32.mrb[0].mxu0
    %v2674 = vadd.f32 0.0, %v2673
    %v2675 = vpop.f32.mrb[0].mxu0
    %2676 = vmatprep.mubr.f32.mxu0 0.0
    %2677 = vmatmul.mubr.f32.gmra.mrb[0].mxu0 %v2597
    %v2678 = vpop.f32.mrb[0].mxu0
    %v2679 = vadd.f32 0.0, %v2678
    %v2680 = vpop.f32.mrb[0].mxu0
    %2681 = vmatprep.mubr.f32.mxu0 0.0
    %2682 = vmatmul.mubr.f32.gmra.mrb[0].mxu0 %v2600
    %v2683 = vpop.f32.mrb[0].mxu0
    %v2684 = vadd.f32 0.0, %v2683
    %v2685 = vpop.f32.mrb[0].mxu0
    %2686 = vdwg.mxu0
    %v2687 = vadd.f32 %v2186, %v2669
    %v2688 = vadd.f32 %v2187, %v2674
    %v2689 = vadd.f32 %v2188, %v2679
    %v2690 = vadd.f32 %v2189, %v2684
    %2691 = vrot.lane.b32.xlu0 %v159, 88
    %v2692 = vpop.permute.xlu0 %2691
    %2693 = vrot.lane.b32.xlu0 %v165, 88
    %v2694 = vpop.permute.xlu0 %2693
    %2695 = vrot.lane.b32.xlu0 %v159, 24
    %v2696 = vpop.permute.xlu0 %2695
    %2697 = vrot.lane.b32.xlu0 %v165, 24
    %v2698 = vpop.permute.xlu0 %2697
    %v2699 = vsel %vm202, %v2692, 0
    %v2701 = vsel %vm202, %v2694, 0
    %v2703 = vsel %vm202, %v2696, 0
    %v2705 = vsel %vm202, %v2698, 0
    %2707 = vmatprep.subr.mxu0 0.0
    %2708 = vmatpush1.xpose.msra.mxu0 %v2703
    %2709 = vmatprep.subr.mxu0 0.0
    %2710 = vmatpush1.xpose.msra.mxu0 %v2705
    %2711 = vmatprep.subr.mxu0 0.0
    %2712 = vmatpush1.xpose.msra.mxu0 0.0
    %2713 = vmatprep.subr.mxu0 0.0
    %2714 = vmatpush1.xpose.msra.mxu0 0.0
    %2715 = vmatprep.subr.mxu0 0.0
    %2716 = vmatpush1.xpose.msra.mxu0 0.0
    %2717 = vmatprep.subr.mxu0 0.0
    %2718 = vmatpush1.xpose.msra.mxu0 0.0
    %2719 = vmatprep.subr.mxu0 0.0
    %2720 = vmatpush1.xpose.msra.mxu0 0.0
    %2721 = vmatprep.subr.mxu0 0.0
    %2722 = vmatpush1.xpose.msra.mxu0 0.0
    %2723 = vmatprep.subr.mxu0 0.0
    %2724 = vmatpush1.xpose.msra.mxu0 0.0
    %2725 = vmatprep.subr.mxu0 0.0
    %2726 = vmatpush1.xpose.msra.mxu0 0.0
    %2727 = vmatprep.subr.mxu0 0.0
    %2728 = vmatpush1.xpose.msra.mxu0 0.0
    %2729 = vmatprep.subr.mxu0 0.0
    %2730 = vmatpush1.xpose.msra.mxu0 0.0
    %2731 = vmatprep.subr.mxu0 0.0
    %2732 = vmatpush1.xpose.msra.mxu0 0.0
    %2733 = vmatprep.subr.mxu0 0.0
    %2734 = vmatpush1.xpose.msra.mxu0 0.0
    %2735 = vmatprep.subr.mxu0 0.0
    %2736 = vmatpush1.xpose.msra.mxu0 0.0
    %2737 = vmatprep.subr.mxu0 0.0
    %2738 = vmatpush1.xpose.msra.mxu0 0.0
    %2739 = vmatprep.subr.mxu0 0.0
    %2740 = vmatpush1.xpose.msra.mxu0 0.0
    %2741 = vmatprep.subr.mxu0 0.0
    %2742 = vmatpush1.xpose.msra.mxu0 0.0
    %2743 = vmatprep.subr.mxu0 0.0
    %2744 = vmatpush1.xpose.msra.mxu0 0.0
    %2745 = vmatprep.subr.mxu0 0.0
    %2746 = vmatpush1.xpose.msra.mxu0 0.0
    %2747 = vmatprep.subr.mxu0 0.0
    %2748 = vmatpush1.xpose.msra.mxu0 0.0
    %2749 = vmatprep.subr.mxu0 0.0
    %2750 = vmatpush1.xpose.msra.mxu0 0.0
    %2751 = vmatprep.subr.mxu0 0.0
    %2752 = vmatpush1.xpose.msra.mxu0 0.0
    %2753 = vmatprep.subr.mxu0 0.0
    %2754 = vmatpush1.xpose.msra.mxu0 0.0
    %2755 = vmatprep.subr.mxu0 0.0
    %2756 = vmatpush1.xpose.msra.mxu0 0.0
    %2757 = vmatprep.subr.mxu0 0.0
    %2758 = vmatpush1.xpose.msra.mxu0 0.0
    %2759 = vmatprep.subr.mxu0 0.0
    %2760 = vmatpush1.xpose.msra.mxu0 0.0
    %2761 = vmatprep.subr.mxu0 0.0
    %2762 = vmatpush1.xpose.msra.mxu0 0.0
    %2763 = vmatprep.subr.mxu0 0.0
    %2764 = vmatpush1.xpose.msra.mxu0 0.0
    %2765 = vmatprep.subr.mxu0 0.0
    %2766 = vmatpush1.xpose.msra.mxu0 0.0
    %2767 = vmatprep.subr.mxu0 0.0
    %2768 = vmatpush1.xpose.msra.mxu0 0.0
    %2769 = vmatprep.subr.mxu0 0.0
    %2770 = vmatpush1.xpose.msra.mxu0 0.0
    %2771 = vmatprep.mubr.f32.mxu0 0.0
    %2772 = vmatmul.mubr.f32.gmra.mrb[0].mxu0 %v2699
    %v2773 = vpop.f32.mrb[0].mxu0
    %v2774 = vadd.f32 0.0, %v2773
    %v2775 = vpop.f32.mrb[0].mxu0
    %2776 = vmatprep.mubr.f32.mxu0 0.0
    %2777 = vmatmul.mubr.f32.gmra.mrb[0].mxu0 %v2701
    %v2778 = vpop.f32.mrb[0].mxu0
    %v2779 = vadd.f32 0.0, %v2778
    %v2780 = vpop.f32.mrb[0].mxu0
    %2781 = vdwg.mxu0
    %2782 = vrot.lane.b32.xlu0 %v171, 88
    %v2783 = vpop.permute.xlu0 %2782
    %2784 = vrot.lane.b32.xlu0 %v177, 88
    %v2785 = vpop.permute.xlu0 %2784
    %2786 = vrot.lane.b32.xlu0 %v171, 24
    %v2787 = vpop.permute.xlu0 %2786
    %2788 = vrot.lane.b32.xlu0 %v177, 24
    %v2789 = vpop.permute.xlu0 %2788
    %v2790 = vsel %vm202, %v2783, 0
    %v2792 = vsel %vm202, %v2785, 0
    %v2794 = vsel %vm202, %v2787, 0
    %v2796 = vsel %vm202, %v2789, 0
    %2798 = vmatprep.subr.mxu0 0.0
    %2799 = vmatpush1.xpose.msra.mxu0 %v2794
    %2800 = vmatprep.subr.mxu0 0.0
    %2801 = vmatpush1.xpose.msra.mxu0 %v2796
    %2802 = vmatprep.subr.mxu0 0.0
    %2803 = vmatpush1.xpose.msra.mxu0 0.0
    %2804 = vmatprep.subr.mxu0 0.0
    %2805 = vmatpush1.xpose.msra.mxu0 0.0
    %2806 = vmatprep.subr.mxu0 0.0
    %2807 = vmatpush1.xpose.msra.mxu0 0.0
    %2808 = vmatprep.subr.mxu0 0.0
    %2809 = vmatpush1.xpose.msra.mxu0 0.0
    %2810 = vmatprep.subr.mxu0 0.0
    %2811 = vmatpush1.xpose.msra.mxu0 0.0
    %2812 = vmatprep.subr.mxu0 0.0
    %2813 = vmatpush1.xpose.msra.mxu0 0.0
    %2814 = vmatprep.subr.mxu0 0.0
    %2815 = vmatpush1.xpose.msra.mxu0 0.0
    %2816 = vmatprep.subr.mxu0 0.0
    %2817 = vmatpush1.xpose.msra.mxu0 0.0
    %2818 = vmatprep.subr.mxu0 0.0
    %2819 = vmatpush1.xpose.msra.mxu0 0.0
    %2820 = vmatprep.subr.mxu0 0.0
    %2821 = vmatpush1.xpose.msra.mxu0 0.0
    %2822 = vmatprep.subr.mxu0 0.0
    %2823 = vmatpush1.xpose.msra.mxu0 0.0
    %2824 = vmatprep.subr.mxu0 0.0
    %2825 = vmatpush1.xpose.msra.mxu0 0.0
    %2826 = vmatprep.subr.mxu0 0.0
    %2827 = vmatpush1.xpose.msra.mxu0 0.0
    %2828 = vmatprep.subr.mxu0 0.0
    %2829 = vmatpush1.xpose.msra.mxu0 0.0
    %2830 = vmatprep.subr.mxu0 0.0
    %2831 = vmatpush1.xpose.msra.mxu0 0.0
    %2832 = vmatprep.subr.mxu0 0.0
    %2833 = vmatpush1.xpose.msra.mxu0 0.0
    %2834 = vmatprep.subr.mxu0 0.0
    %2835 = vmatpush1.xpose.msra.mxu0 0.0
    %2836 = vmatprep.subr.mxu0 0.0
    %2837 = vmatpush1.xpose.msra.mxu0 0.0
    %2838 = vmatprep.subr.mxu0 0.0
    %2839 = vmatpush1.xpose.msra.mxu0 0.0
    %2840 = vmatprep.subr.mxu0 0.0
    %2841 = vmatpush1.xpose.msra.mxu0 0.0
    %2842 = vmatprep.subr.mxu0 0.0
    %2843 = vmatpush1.xpose.msra.mxu0 0.0
    %2844 = vmatprep.subr.mxu0 0.0
    %2845 = vmatpush1.xpose.msra.mxu0 0.0
    %2846 = vmatprep.subr.mxu0 0.0
    %2847 = vmatpush1.xpose.msra.mxu0 0.0
    %2848 = vmatprep.subr.mxu0 0.0
    %2849 = vmatpush1.xpose.msra.mxu0 0.0
    %2850 = vmatprep.subr.mxu0 0.0
    %2851 = vmatpush1.xpose.msra.mxu0 0.0
    %2852 = vmatprep.subr.mxu0 0.0
    %2853 = vmatpush1.xpose.msra.mxu0 0.0
    %2854 = vmatprep.subr.mxu0 0.0
    %2855 = vmatpush1.xpose.msra.mxu0 0.0
    %2856 = vmatprep.subr.mxu0 0.0
    %2857 = vmatpush1.xpose.msra.mxu0 0.0
    %2858 = vmatprep.subr.mxu0 0.0
    %2859 = vmatpush1.xpose.msra.mxu0 0.0
    %2860 = vmatprep.subr.mxu0 0.0
    %2861 = vmatpush1.xpose.msra.mxu0 0.0
    %2862 = vmatprep.mubr.f32.mxu0 0.0
    %2863 = vmatmul.mubr.f32.gmra.mrb[0].mxu0 %v2790
    %v2864 = vpop.f32.mrb[0].mxu0
    %v2865 = vadd.f32 0.0, %v2864
    %v2866 = vpop.f32.mrb[0].mxu0
    %2867 = vmatprep.mubr.f32.mxu0 0.0
    %2868 = vmatmul.mubr.f32.gmra.mrb[0].mxu0 %v2792
    %v2869 = vpop.f32.mrb[0].mxu0
    %v2870 = vadd.f32 0.0, %v2869
    %v2871 = vpop.f32.mrb[0].mxu0
    %2872 = vdwg.mxu0
    %v2873 = vsel %vm375, %v2774, -inf
    %2874 = vmax.xlane.f32.xlu0 %v2873
    %v2875 = vpop.xlane.xlu0 %2874
    %v2876 = vsel %vm375, %v2779, -inf
    %2877 = vmax.xlane.f32.xlu0 %v2876
    %v2878 = vpop.xlane.xlu0 %2877
    %v2879 = vsel %vm375, %v2865, -inf
    %2880 = vmax.xlane.f32.xlu0 %v2879
    %v2881 = vpop.xlane.xlu0 %2880
    %v2882 = vsel %vm375, %v2870, -inf
    %2883 = vmax.xlane.f32.xlu0 %v2882
    %v2884 = vpop.xlane.xlu0 %2883
    %v2885 = vsub.f32 %v2774, %v2875
    %v2886 = vsub.f32 %v2779, %v2878
    %v2887 = vsub.f32 %v2865, %v2881
    %v2888 = vsub.f32 %v2870, %v2884
    %v2889 = vmul.f32 %v2885, 1.442695
    %v2890 = vpow.pop %v2889
    %v2891 = vmul.f32 %v2886, 1.442695
    %v2892 = vpow.pop %v2891
    %v2893 = vmul.f32 %v2887, 1.442695
    %v2894 = vpow.pop %v2893
    %v2895 = vmul.f32 %v2888, 1.442695
    %v2896 = vpow.pop %v2895
    %v2897 = vsel %vm375, %v2890, 0.0
    %2898 = vadd.xlane.f32.xlu0 %v2897
    %v2899 = vpop.xlane.xlu0 %2898
    %v2900 = vsel %vm375, %v2892, 0.0
    %2901 = vadd.xlane.f32.xlu0 %v2900
    %v2902 = vpop.xlane.xlu0 %2901
    %v2903 = vsel %vm375, %v2894, 0.0
    %2904 = vadd.xlane.f32.xlu0 %v2903
    %v2905 = vpop.xlane.xlu0 %2904
    %v2906 = vsel %vm375, %v2896, 0.0
    %2907 = vadd.xlane.f32.xlu0 %v2906
    %v2908 = vpop.xlane.xlu0 %2907
    %2909 = vrot.lane.b32.xlu0 %v161, 88
    %v2910 = vpop.permute.xlu0 %2909
    %2911 = vrot.lane.b32.xlu0 %v167, 88
    %v2912 = vpop.permute.xlu0 %2911
    %v2916 = vsel %vm375, %v2890, 0
    %v2919 = vsel %vm375, %v2892, 0
    %2921 = vmatprep.subr.mxu0 0.0
    %2922 = vmatpush1.msra.mxu0 %v2910
    %2923 = vmatprep.subr.mxu0 0.0
    %2924 = vmatpush1.msra.mxu0 %v2912
    %2925 = vmatprep.subr.mxu0 0.0
    %2926 = vmatpush1.msra.mxu0 0.0
    %2927 = vmatprep.subr.mxu0 0.0
    %2928 = vmatpush1.msra.mxu0 0.0
    %2929 = vmatprep.subr.mxu0 0.0
    %2930 = vmatpush1.msra.mxu0 0.0
    %2931 = vmatprep.subr.mxu0 0.0
    %2932 = vmatpush1.msra.mxu0 0.0
    %2933 = vmatprep.subr.mxu0 0.0
    %2934 = vmatpush1.msra.mxu0 0.0
    %2935 = vmatprep.subr.mxu0 0.0
    %2936 = vmatpush1.msra.mxu0 0.0
    %2937 = vmatprep.subr.mxu0 0.0
    %2938 = vmatpush1.msra.mxu0 0.0
    %2939 = vmatprep.subr.mxu0 0.0
    %2940 = vmatpush1.msra.mxu0 0.0
    %2941 = vmatprep.subr.mxu0 0.0
    %2942 = vmatpush1.msra.mxu0 0.0
    %2943 = vmatprep.subr.mxu0 0.0
    %2944 = vmatpush1.msra.mxu0 0.0
    %2945 = vmatprep.subr.mxu0 0.0
    %2946 = vmatpush1.msra.mxu0 0.0
    %2947 = vmatprep.subr.mxu0 0.0
    %2948 = vmatpush1.msra.mxu0 0.0
    %2949 = vmatprep.subr.mxu0 0.0
    %2950 = vmatpush1.msra.mxu0 0.0
    %2951 = vmatprep.subr.mxu0 0.0
    %2952 = vmatpush1.msra.mxu0 0.0
    %2953 = vmatprep.subr.mxu0 0.0
    %2954 = vmatpush1.msra.mxu0 0.0
    %2955 = vmatprep.subr.mxu0 0.0
    %2956 = vmatpush1.msra.mxu0 0.0
    %2957 = vmatprep.subr.mxu0 0.0
    %2958 = vmatpush1.msra.mxu0 0.0
    %2959 = vmatprep.subr.mxu0 0.0
    %2960 = vmatpush1.msra.mxu0 0.0
    %2961 = vmatprep.subr.mxu0 0.0
    %2962 = vmatpush1.msra.mxu0 0.0
    %2963 = vmatprep.subr.mxu0 0.0
    %2964 = vmatpush1.msra.mxu0 0.0
    %2965 = vmatprep.subr.mxu0 0.0
    %2966 = vmatpush1.msra.mxu0 0.0
    %2967 = vmatprep.subr.mxu0 0.0
    %2968 = vmatpush1.msra.mxu0 0.0
    %2969 = vmatprep.subr.mxu0 0.0
    %2970 = vmatpush1.msra.mxu0 0.0
    %2971 = vmatprep.subr.mxu0 0.0
    %2972 = vmatpush1.msra.mxu0 0.0
    %2973 = vmatprep.subr.mxu0 0.0
    %2974 = vmatpush1.msra.mxu0 0.0
    %2975 = vmatprep.subr.mxu0 0.0
    %2976 = vmatpush1.msra.mxu0 0.0
    %2977 = vmatprep.subr.mxu0 0.0
    %2978 = vmatpush1.msra.mxu0 0.0
    %2979 = vmatprep.subr.mxu0 0.0
    %2980 = vmatpush1.msra.mxu0 0.0
    %2981 = vmatprep.subr.mxu0 0.0
    %2982 = vmatpush1.msra.mxu0 0.0
    %2983 = vmatprep.subr.mxu0 0.0
    %2984 = vmatpush1.msra.mxu0 0.0
    %2985 = vmatprep.mubr.f32.mxu0 0.0
    %2986 = vmatmul.mubr.f32.gmra.mrb[0].mxu0 %v2916
    %v2987 = vpop.f32.mrb[0].mxu0
    %v2988 = vadd.f32 0.0, %v2987
    %v2989 = vpop.f32.mrb[0].mxu0
    %2990 = vmatprep.mubr.f32.mxu0 0.0
    %2991 = vmatmul.mubr.f32.gmra.mrb[0].mxu0 %v2919
    %v2992 = vpop.f32.mrb[0].mxu0
    %v2993 = vadd.f32 0.0, %v2992
    %v2994 = vpop.f32.mrb[0].mxu0
    %2995 = vdwg.mxu0
    %2996 = vrot.lane.b32.xlu0 %v173, 88
    %v2997 = vpop.permute.xlu0 %2996
    %2998 = vrot.lane.b32.xlu0 %v179, 88
    %v2999 = vpop.permute.xlu0 %2998
    %v3003 = vsel %vm375, %v2894, 0
    %v3006 = vsel %vm375, %v2896, 0
    %3008 = vmatprep.subr.mxu0 0.0
    %3009 = vmatpush1.msra.mxu0 %v2997
    %3010 = vmatprep.subr.mxu0 0.0
    %3011 = vmatpush1.msra.mxu0 %v2999
    %3012 = vmatprep.subr.mxu0 0.0
    %3013 = vmatpush1.msra.mxu0 0.0
    %3014 = vmatprep.subr.mxu0 0.0
    %3015 = vmatpush1.msra.mxu0 0.0
    %3016 = vmatprep.subr.mxu0 0.0
    %3017 = vmatpush1.msra.mxu0 0.0
    %3018 = vmatprep.subr.mxu0 0.0
    %3019 = vmatpush1.msra.mxu0 0.0
    %3020 = vmatprep.subr.mxu0 0.0
    %3021 = vmatpush1.msra.mxu0 0.0
    %3022 = vmatprep.subr.mxu0 0.0
    %3023 = vmatpush1.msra.mxu0 0.0
    %3024 = vmatprep.subr.mxu0 0.0
    %3025 = vmatpush1.msra.mxu0 0.0
    %3026 = vmatprep.subr.mxu0 0.0
    %3027 = vmatpush1.msra.mxu0 0.0
    %3028 = vmatprep.subr.mxu0 0.0
    %3029 = vmatpush1.msra.mxu0 0.0
    %3030 = vmatprep.subr.mxu0 0.0
    %3031 = vmatpush1.msra.mxu0 0.0
    %3032 = vmatprep.subr.mxu0 0.0
    %3033 = vmatpush1.msra.mxu0 0.0
    %3034 = vmatprep.subr.mxu0 0.0
    %3035 = vmatpush1.msra.mxu0 0.0
    %3036 = vmatprep.subr.mxu0 0.0
    %3037 = vmatpush1.msra.mxu0 0.0
    %3038 = vmatprep.subr.mxu0 0.0
    %3039 = vmatpush1.msra.mxu0 0.0
    %3040 = vmatprep.subr.mxu0 0.0
    %3041 = vmatpush1.msra.mxu0 0.0
    %3042 = vmatprep.subr.mxu0 0.0
    %3043 = vmatpush1.msra.mxu0 0.0
    %3044 = vmatprep.subr.mxu0 0.0
    %3045 = vmatpush1.msra.mxu0 0.0
    %3046 = vmatprep.subr.mxu0 0.0
    %3047 = vmatpush1.msra.mxu0 0.0
    %3048 = vmatprep.subr.mxu0 0.0
    %3049 = vmatpush1.msra.mxu0 0.0
    %3050 = vmatprep.subr.mxu0 0.0
    %3051 = vmatpush1.msra.mxu0 0.0
    %3052 = vmatprep.subr.mxu0 0.0
    %3053 = vmatpush1.msra.mxu0 0.0
    %3054 = vmatprep.subr.mxu0 0.0
    %3055 = vmatpush1.msra.mxu0 0.0
    %3056 = vmatprep.subr.mxu0 0.0
    %3057 = vmatpush1.msra.mxu0 0.0
    %3058 = vmatprep.subr.mxu0 0.0
    %3059 = vmatpush1.msra.mxu0 0.0
    %3060 = vmatprep.subr.mxu0 0.0
    %3061 = vmatpush1.msra.mxu0 0.0
    %3062 = vmatprep.subr.mxu0 0.0
    %3063 = vmatpush1.msra.mxu0 0.0
    %3064 = vmatprep.subr.mxu0 0.0
    %3065 = vmatpush1.msra.mxu0 0.0
    %3066 = vmatprep.subr.mxu0 0.0
    %3067 = vmatpush1.msra.mxu0 0.0
    %3068 = vmatprep.subr.mxu0 0.0
    %3069 = vmatpush1.msra.mxu0 0.0
    %3070 = vmatprep.subr.mxu0 0.0
    %3071 = vmatpush1.msra.mxu0 0.0
    %3072 = vmatprep.mubr.f32.mxu0 0.0
    %3073 = vmatmul.mubr.f32.gmra.mrb[0].mxu0 %v3003
    %v3074 = vpop.f32.mrb[0].mxu0
    %v3075 = vadd.f32 0.0, %v3074
    %v3076 = vpop.f32.mrb[0].mxu0
    %3077 = vmatprep.mubr.f32.mxu0 0.0
    %3078 = vmatmul.mubr.f32.gmra.mrb[0].mxu0 %v3006
    %v3079 = vpop.f32.mrb[0].mxu0
    %v3080 = vadd.f32 0.0, %v3079
    %v3081 = vpop.f32.mrb[0].mxu0
    %3082 = vdwg.mxu0
    %v3083 = vrcp.pop %v2899
    %v3084 = vmul.f32 %v2988, %v3083
    %v3085 = vrcp.pop %v2902
    %v3086 = vmul.f32 %v2993, %v3085
    %v3087 = vrcp.pop %v2905
    %v3088 = vmul.f32 %v3075, %v3087
    %v3089 = vrcp.pop %v2908
    %v3090 = vmul.f32 %v3080, %v3089
    %v3092 = vsel %vm202, %v3084, 0
    %v3095 = vsel %vm202, %v3086, 0
    %v3098 = vsel %vm202, %v3088, 0
    %v3101 = vsel %vm202, %v3090, 0
    %3103 = vmatprep.subr.mxu0 0.0
    %3104 = vmatpush1.msra.mxu0 %v186
    %3105 = vmatprep.subr.mxu0 0.0
    %3106 = vmatpush1.msra.mxu0 0.0
    %3107 = vmatprep.subr.mxu0 0.0
    %3108 = vmatpush1.msra.mxu0 0.0
    %3109 = vmatprep.subr.mxu0 0.0
    %3110 = vmatpush1.msra.mxu0 0.0
    %3111 = vmatprep.subr.mxu0 0.0
    %3112 = vmatpush1.msra.mxu0 0.0
    %3113 = vmatprep.subr.mxu0 0.0
    %3114 = vmatpush1.msra.mxu0 0.0
    %3115 = vmatprep.subr.mxu0 0.0
    %3116 = vmatpush1.msra.mxu0 0.0
    %3117 = vmatprep.subr.mxu0 0.0
    %3118 = vmatpush1.msra.mxu0 0.0
    %3119 = vmatprep.subr.mxu0 0.0
    %3120 = vmatpush1.msra.mxu0 0.0
    %3121 = vmatprep.subr.mxu0 0.0
    %3122 = vmatpush1.msra.mxu0 0.0
    %3123 = vmatprep.subr.mxu0 0.0
    %3124 = vmatpush1.msra.mxu0 0.0
    %3125 = vmatprep.subr.mxu0 0.0
    %3126 = vmatpush1.msra.mxu0 0.0
    %3127 = vmatprep.subr.mxu0 0.0
    %3128 = vmatpush1.msra.mxu0 0.0
    %3129 = vmatprep.subr.mxu0 0.0
    %3130 = vmatpush1.msra.mxu0 0.0
    %3131 = vmatprep.subr.mxu0 0.0
    %3132 = vmatpush1.msra.mxu0 0.0
    %3133 = vmatprep.subr.mxu0 0.0
    %3134 = vmatpush1.msra.mxu0 0.0
    %3135 = vmatprep.subr.mxu0 0.0
    %3136 = vmatpush1.msra.mxu0 0.0
    %3137 = vmatprep.subr.mxu0 0.0
    %3138 = vmatpush1.msra.mxu0 0.0
    %3139 = vmatprep.subr.mxu0 0.0
    %3140 = vmatpush1.msra.mxu0 0.0
    %3141 = vmatprep.subr.mxu0 0.0
    %3142 = vmatpush1.msra.mxu0 0.0
    %3143 = vmatprep.subr.mxu0 0.0
    %3144 = vmatpush1.msra.mxu0 0.0
    %3145 = vmatprep.subr.mxu0 0.0
    %3146 = vmatpush1.msra.mxu0 0.0
    %3147 = vmatprep.subr.mxu0 0.0
    %3148 = vmatpush1.msra.mxu0 0.0
    %3149 = vmatprep.subr.mxu0 0.0
    %3150 = vmatpush1.msra.mxu0 0.0
    %3151 = vmatprep.subr.mxu0 0.0
    %3152 = vmatpush1.msra.mxu0 0.0
    %3153 = vmatprep.subr.mxu0 0.0
    %3154 = vmatpush1.msra.mxu0 0.0
    %3155 = vmatprep.subr.mxu0 0.0
    %3156 = vmatpush1.msra.mxu0 0.0
    %3157 = vmatprep.subr.mxu0 0.0
    %3158 = vmatpush1.msra.mxu0 0.0
    %3159 = vmatprep.subr.mxu0 0.0
    %3160 = vmatpush1.msra.mxu0 0.0
    %3161 = vmatprep.subr.mxu0 0.0
    %3162 = vmatpush1.msra.mxu0 0.0
    %3163 = vmatprep.subr.mxu0 0.0
    %3164 = vmatpush1.msra.mxu0 0.0
    %3165 = vmatprep.subr.mxu0 0.0
    %3166 = vmatpush1.msra.mxu0 0.0
    %3167 = vmatprep.mubr.f32.mxu0 0.0
    %3168 = vmatmul.mubr.f32.gmra.mrb[0].mxu0 %v3092
    %v3169 = vpop.f32.mrb[0].mxu0
    %v3170 = vadd.f32 0.0, %v3169
    %v3171 = vpop.f32.mrb[0].mxu0
    %3172 = vmatprep.mubr.f32.mxu0 0.0
    %3173 = vmatmul.mubr.f32.gmra.mrb[0].mxu0 %v3095
    %v3174 = vpop.f32.mrb[0].mxu0
    %v3175 = vadd.f32 0.0, %v3174
    %v3176 = vpop.f32.mrb[0].mxu0
    %3177 = vmatprep.mubr.f32.mxu0 0.0
    %3178 = vmatmul.mubr.f32.gmra.mrb[0].mxu0 %v3098
    %v3179 = vpop.f32.mrb[0].mxu0
    %v3180 = vadd.f32 0.0, %v3179
    %v3181 = vpop.f32.mrb[0].mxu0
    %3182 = vmatprep.mubr.f32.mxu0 0.0
    %3183 = vmatmul.mubr.f32.gmra.mrb[0].mxu0 %v3101
    %v3184 = vpop.f32.mrb[0].mxu0
    %v3185 = vadd.f32 0.0, %v3184
    %v3186 = vpop.f32.mrb[0].mxu0
    %3187 = vdwg.mxu0
    %v3188 = vadd.f32 %v2687, %v3170
    %v3189 = vadd.f32 %v2688, %v3175
    %v3190 = vadd.f32 %v2689, %v3180
    %v3191 = vadd.f32 %v2690, %v3185
    %3192 = vrot.lane.b32.xlu0 %v159, 80
    %v3193 = vpop.permute.xlu0 %3192
    %3194 = vrot.lane.b32.xlu0 %v165, 80
    %v3195 = vpop.permute.xlu0 %3194
    %3196 = vrot.lane.b32.xlu0 %v159, 16
    %v3197 = vpop.permute.xlu0 %3196
    %3198 = vrot.lane.b32.xlu0 %v165, 16
    %v3199 = vpop.permute.xlu0 %3198
    %v3200 = vsel %vm202, %v3193, 0
    %v3202 = vsel %vm202, %v3195, 0
    %v3204 = vsel %vm202, %v3197, 0
    %v3206 = vsel %vm202, %v3199, 0
    %3208 = vmatprep.subr.mxu0 0.0
    %3209 = vmatpush1.xpose.msra.mxu0 %v3204
    %3210 = vmatprep.subr.mxu0 0.0
    %3211 = vmatpush1.xpose.msra.mxu0 %v3206
    %3212 = vmatprep.subr.mxu0 0.0
    %3213 = vmatpush1.xpose.msra.mxu0 0.0
    %3214 = vmatprep.subr.mxu0 0.0
    %3215 = vmatpush1.xpose.msra.mxu0 0.0
    %3216 = vmatprep.subr.mxu0 0.0
    %3217 = vmatpush1.xpose.msra.mxu0 0.0
    %3218 = vmatprep.subr.mxu0 0.0
    %3219 = vmatpush1.xpose.msra.mxu0 0.0
    %3220 = vmatprep.subr.mxu0 0.0
    %3221 = vmatpush1.xpose.msra.mxu0 0.0
    %3222 = vmatprep.subr.mxu0 0.0
    %3223 = vmatpush1.xpose.msra.mxu0 0.0
    %3224 = vmatprep.subr.mxu0 0.0
    %3225 = vmatpush1.xpose.msra.mxu0 0.0
    %3226 = vmatprep.subr.mxu0 0.0
    %3227 = vmatpush1.xpose.msra.mxu0 0.0
    %3228 = vmatprep.subr.mxu0 0.0
    %3229 = vmatpush1.xpose.msra.mxu0 0.0
    %3230 = vmatprep.subr.mxu0 0.0
    %3231 = vmatpush1.xpose.msra.mxu0 0.0
    %3232 = vmatprep.subr.mxu0 0.0
    %3233 = vmatpush1.xpose.msra.mxu0 0.0
    %3234 = vmatprep.subr.mxu0 0.0
    %3235 = vmatpush1.xpose.msra.mxu0 0.0
    %3236 = vmatprep.subr.mxu0 0.0
    %3237 = vmatpush1.xpose.msra.mxu0 0.0
    %3238 = vmatprep.subr.mxu0 0.0
    %3239 = vmatpush1.xpose.msra.mxu0 0.0
    %3240 = vmatprep.subr.mxu0 0.0
    %3241 = vmatpush1.xpose.msra.mxu0 0.0
    %3242 = vmatprep.subr.mxu0 0.0
    %3243 = vmatpush1.xpose.msra.mxu0 0.0
    %3244 = vmatprep.subr.mxu0 0.0
    %3245 = vmatpush1.xpose.msra.mxu0 0.0
    %3246 = vmatprep.subr.mxu0 0.0
    %3247 = vmatpush1.xpose.msra.mxu0 0.0
    %3248 = vmatprep.subr.mxu0 0.0
    %3249 = vmatpush1.xpose.msra.mxu0 0.0
    %3250 = vmatprep.subr.mxu0 0.0
    %3251 = vmatpush1.xpose.msra.mxu0 0.0
    %3252 = vmatprep.subr.mxu0 0.0
    %3253 = vmatpush1.xpose.msra.mxu0 0.0
    %3254 = vmatprep.subr.mxu0 0.0
    %3255 = vmatpush1.xpose.msra.mxu0 0.0
    %3256 = vmatprep.subr.mxu0 0.0
    %3257 = vmatpush1.xpose.msra.mxu0 0.0
    %3258 = vmatprep.subr.mxu0 0.0
    %3259 = vmatpush1.xpose.msra.mxu0 0.0
    %3260 = vmatprep.subr.mxu0 0.0
    %3261 = vmatpush1.xpose.msra.mxu0 0.0
    %3262 = vmatprep.subr.mxu0 0.0
    %3263 = vmatpush1.xpose.msra.mxu0 0.0
    %3264 = vmatprep.subr.mxu0 0.0
    %3265 = vmatpush1.xpose.msra.mxu0 0.0
    %3266 = vmatprep.subr.mxu0 0.0
    %3267 = vmatpush1.xpose.msra.mxu0 0.0
    %3268 = vmatprep.subr.mxu0 0.0
    %3269 = vmatpush1.xpose.msra.mxu0 0.0
    %3270 = vmatprep.subr.mxu0 0.0
    %3271 = vmatpush1.xpose.msra.mxu0 0.0
    %3272 = vmatprep.mubr.f32.mxu0 0.0
    %3273 = vmatmul.mubr.f32.gmra.mrb[0].mxu0 %v3200
    %v3274 = vpop.f32.mrb[0].mxu0
    %v3275 = vadd.f32 0.0, %v3274
    %v3276 = vpop.f32.mrb[0].mxu0
    %3277 = vmatprep.mubr.f32.mxu0 0.0
    %3278 = vmatmul.mubr.f32.gmra.mrb[0].mxu0 %v3202
    %v3279 = vpop.f32.mrb[0].mxu0
    %v3280 = vadd.f32 0.0, %v3279
    %v3281 = vpop.f32.mrb[0].mxu0
    %3282 = vdwg.mxu0
    %3283 = vrot.lane.b32.xlu0 %v171, 80
    %v3284 = vpop.permute.xlu0 %3283
    %3285 = vrot.lane.b32.xlu0 %v177, 80
    %v3286 = vpop.permute.xlu0 %3285
    %3287 = vrot.lane.b32.xlu0 %v171, 16
    %v3288 = vpop.permute.xlu0 %3287
    %3289 = vrot.lane.b32.xlu0 %v177, 16
    %v3290 = vpop.permute.xlu0 %3289
    %v3291 = vsel %vm202, %v3284, 0
    %v3293 = vsel %vm202, %v3286, 0
    %v3295 = vsel %vm202, %v3288, 0
    %v3297 = vsel %vm202, %v3290, 0
    %3299 = vmatprep.subr.mxu0 0.0
    %3300 = vmatpush1.xpose.msra.mxu0 %v3295
    %3301 = vmatprep.subr.mxu0 0.0
    %3302 = vmatpush1.xpose.msra.mxu0 %v3297
    %3303 = vmatprep.subr.mxu0 0.0
    %3304 = vmatpush1.xpose.msra.mxu0 0.0
    %3305 = vmatprep.subr.mxu0 0.0
    %3306 = vmatpush1.xpose.msra.mxu0 0.0
    %3307 = vmatprep.subr.mxu0 0.0
    %3308 = vmatpush1.xpose.msra.mxu0 0.0
    %3309 = vmatprep.subr.mxu0 0.0
    %3310 = vmatpush1.xpose.msra.mxu0 0.0
    %3311 = vmatprep.subr.mxu0 0.0
    %3312 = vmatpush1.xpose.msra.mxu0 0.0
    %3313 = vmatprep.subr.mxu0 0.0
    %3314 = vmatpush1.xpose.msra.mxu0 0.0
    %3315 = vmatprep.subr.mxu0 0.0
    %3316 = vmatpush1.xpose.msra.mxu0 0.0
    %3317 = vmatprep.subr.mxu0 0.0
    %3318 = vmatpush1.xpose.msra.mxu0 0.0
    %3319 = vmatprep.subr.mxu0 0.0
    %3320 = vmatpush1.xpose.msra.mxu0 0.0
    %3321 = vmatprep.subr.mxu0 0.0
    %3322 = vmatpush1.xpose.msra.mxu0 0.0
    %3323 = vmatprep.subr.mxu0 0.0
    %3324 = vmatpush1.xpose.msra.mxu0 0.0
    %3325 = vmatprep.subr.mxu0 0.0
    %3326 = vmatpush1.xpose.msra.mxu0 0.0
    %3327 = vmatprep.subr.mxu0 0.0
    %3328 = vmatpush1.xpose.msra.mxu0 0.0
    %3329 = vmatprep.subr.mxu0 0.0
    %3330 = vmatpush1.xpose.msra.mxu0 0.0
    %3331 = vmatprep.subr.mxu0 0.0
    %3332 = vmatpush1.xpose.msra.mxu0 0.0
    %3333 = vmatprep.subr.mxu0 0.0
    %3334 = vmatpush1.xpose.msra.mxu0 0.0
    %3335 = vmatprep.subr.mxu0 0.0
    %3336 = vmatpush1.xpose.msra.mxu0 0.0
    %3337 = vmatprep.subr.mxu0 0.0
    %3338 = vmatpush1.xpose.msra.mxu0 0.0
    %3339 = vmatprep.subr.mxu0 0.0
    %3340 = vmatpush1.xpose.msra.mxu0 0.0
    %3341 = vmatprep.subr.mxu0 0.0
    %3342 = vmatpush1.xpose.msra.mxu0 0.0
    %3343 = vmatprep.subr.mxu0 0.0
    %3344 = vmatpush1.xpose.msra.mxu0 0.0
    %3345 = vmatprep.subr.mxu0 0.0
    %3346 = vmatpush1.xpose.msra.mxu0 0.0
    %3347 = vmatprep.subr.mxu0 0.0
    %3348 = vmatpush1.xpose.msra.mxu0 0.0
    %3349 = vmatprep.subr.mxu0 0.0
    %3350 = vmatpush1.xpose.msra.mxu0 0.0
    %3351 = vmatprep.subr.mxu0 0.0
    %3352 = vmatpush1.xpose.msra.mxu0 0.0
    %3353 = vmatprep.subr.mxu0 0.0
    %3354 = vmatpush1.xpose.msra.mxu0 0.0
    %3355 = vmatprep.subr.mxu0 0.0
    %3356 = vmatpush1.xpose.msra.mxu0 0.0
    %3357 = vmatprep.subr.mxu0 0.0
    %3358 = vmatpush1.xpose.msra.mxu0 0.0
    %3359 = vmatprep.subr.mxu0 0.0
    %3360 = vmatpush1.xpose.msra.mxu0 0.0
    %3361 = vmatprep.subr.mxu0 0.0
    %3362 = vmatpush1.xpose.msra.mxu0 0.0
    %3363 = vmatprep.mubr.f32.mxu0 0.0
    %3364 = vmatmul.mubr.f32.gmra.mrb[0].mxu0 %v3291
    %v3365 = vpop.f32.mrb[0].mxu0
    %v3366 = vadd.f32 0.0, %v3365
    %v3367 = vpop.f32.mrb[0].mxu0
    %3368 = vmatprep.mubr.f32.mxu0 0.0
    %3369 = vmatmul.mubr.f32.gmra.mrb[0].mxu0 %v3293
    %v3370 = vpop.f32.mrb[0].mxu0
    %v3371 = vadd.f32 0.0, %v3370
    %v3372 = vpop.f32.mrb[0].mxu0
    %3373 = vdwg.mxu0
    %v3374 = vsel %vm375, %v3275, -inf
    %3375 = vmax.xlane.f32.xlu0 %v3374
    %v3376 = vpop.xlane.xlu0 %3375
    %v3377 = vsel %vm375, %v3280, -inf
    %3378 = vmax.xlane.f32.xlu0 %v3377
    %v3379 = vpop.xlane.xlu0 %3378
    %v3380 = vsel %vm375, %v3366, -inf
    %3381 = vmax.xlane.f32.xlu0 %v3380
    %v3382 = vpop.xlane.xlu0 %3381
    %v3383 = vsel %vm375, %v3371, -inf
    %3384 = vmax.xlane.f32.xlu0 %v3383
    %v3385 = vpop.xlane.xlu0 %3384
    %v3386 = vsub.f32 %v3275, %v3376
    %v3387 = vsub.f32 %v3280, %v3379
    %v3388 = vsub.f32 %v3366, %v3382
    %v3389 = vsub.f32 %v3371, %v3385
    %v3390 = vmul.f32 %v3386, 1.442695
    %v3391 = vpow.pop %v3390
    %v3392 = vmul.f32 %v3387, 1.442695
    %v3393 = vpow.pop %v3392
    %v3394 = vmul.f32 %v3388, 1.442695
    %v3395 = vpow.pop %v3394
    %v3396 = vmul.f32 %v3389, 1.442695
    %v3397 = vpow.pop %v3396
    %v3398 = vsel %vm375, %v3391, 0.0
    %3399 = vadd.xlane.f32.xlu0 %v3398
    %v3400 = vpop.xlane.xlu0 %3399
    %v3401 = vsel %vm375, %v3393, 0.0
    %3402 = vadd.xlane.f32.xlu0 %v3401
    %v3403 = vpop.xlane.xlu0 %3402
    %v3404 = vsel %vm375, %v3395, 0.0
    %3405 = vadd.xlane.f32.xlu0 %v3404
    %v3406 = vpop.xlane.xlu0 %3405
    %v3407 = vsel %vm375, %v3397, 0.0
    %3408 = vadd.xlane.f32.xlu0 %v3407
    %v3409 = vpop.xlane.xlu0 %3408
    %3410 = vrot.lane.b32.xlu0 %v161, 80
    %v3411 = vpop.permute.xlu0 %3410
    %3412 = vrot.lane.b32.xlu0 %v167, 80
    %v3413 = vpop.permute.xlu0 %3412
    %v3417 = vsel %vm375, %v3391, 0
    %v3420 = vsel %vm375, %v3393, 0
    %3422 = vmatprep.subr.mxu0 0.0
    %3423 = vmatpush1.msra.mxu0 %v3411
    %3424 = vmatprep.subr.mxu0 0.0
    %3425 = vmatpush1.msra.mxu0 %v3413
    %3426 = vmatprep.subr.mxu0 0.0
    %3427 = vmatpush1.msra.mxu0 0.0
    %3428 = vmatprep.subr.mxu0 0.0
    %3429 = vmatpush1.msra.mxu0 0.0
    %3430 = vmatprep.subr.mxu0 0.0
    %3431 = vmatpush1.msra.mxu0 0.0
    %3432 = vmatprep.subr.mxu0 0.0
    %3433 = vmatpush1.msra.mxu0 0.0
    %3434 = vmatprep.subr.mxu0 0.0
    %3435 = vmatpush1.msra.mxu0 0.0
    %3436 = vmatprep.subr.mxu0 0.0
    %3437 = vmatpush1.msra.mxu0 0.0
    %3438 = vmatprep.subr.mxu0 0.0
    %3439 = vmatpush1.msra.mxu0 0.0
    %3440 = vmatprep.subr.mxu0 0.0
    %3441 = vmatpush1.msra.mxu0 0.0
    %3442 = vmatprep.subr.mxu0 0.0
    %3443 = vmatpush1.msra.mxu0 0.0
    %3444 = vmatprep.subr.mxu0 0.0
    %3445 = vmatpush1.msra.mxu0 0.0
    %3446 = vmatprep.subr.mxu0 0.0
    %3447 = vmatpush1.msra.mxu0 0.0
    %3448 = vmatprep.subr.mxu0 0.0
    %3449 = vmatpush1.msra.mxu0 0.0
    %3450 = vmatprep.subr.mxu0 0.0
    %3451 = vmatpush1.msra.mxu0 0.0
    %3452 = vmatprep.subr.mxu0 0.0
    %3453 = vmatpush1.msra.mxu0 0.0
    %3454 = vmatprep.subr.mxu0 0.0
    %3455 = vmatpush1.msra.mxu0 0.0
    %3456 = vmatprep.subr.mxu0 0.0
    %3457 = vmatpush1.msra.mxu0 0.0
    %3458 = vmatprep.subr.mxu0 0.0
    %3459 = vmatpush1.msra.mxu0 0.0
    %3460 = vmatprep.subr.mxu0 0.0
    %3461 = vmatpush1.msra.mxu0 0.0
    %3462 = vmatprep.subr.mxu0 0.0
    %3463 = vmatpush1.msra.mxu0 0.0
    %3464 = vmatprep.subr.mxu0 0.0
    %3465 = vmatpush1.msra.mxu0 0.0
    %3466 = vmatprep.subr.mxu0 0.0
    %3467 = vmatpush1.msra.mxu0 0.0
    %3468 = vmatprep.subr.mxu0 0.0
    %3469 = vmatpush1.msra.mxu0 0.0
    %3470 = vmatprep.subr.mxu0 0.0
    %3471 = vmatpush1.msra.mxu0 0.0
    %3472 = vmatprep.subr.mxu0 0.0
    %3473 = vmatpush1.msra.mxu0 0.0
    %3474 = vmatprep.subr.mxu0 0.0
    %3475 = vmatpush1.msra.mxu0 0.0
    %3476 = vmatprep.subr.mxu0 0.0
    %3477 = vmatpush1.msra.mxu0 0.0
    %3478 = vmatprep.subr.mxu0 0.0
    %3479 = vmatpush1.msra.mxu0 0.0
    %3480 = vmatprep.subr.mxu0 0.0
    %3481 = vmatpush1.msra.mxu0 0.0
    %3482 = vmatprep.subr.mxu0 0.0
    %3483 = vmatpush1.msra.mxu0 0.0
    %3484 = vmatprep.subr.mxu0 0.0
    %3485 = vmatpush1.msra.mxu0 0.0
    %3486 = vmatprep.mubr.f32.mxu0 0.0
    %3487 = vmatmul.mubr.f32.gmra.mrb[0].mxu0 %v3417
    %v3488 = vpop.f32.mrb[0].mxu0
    %v3489 = vadd.f32 0.0, %v3488
    %v3490 = vpop.f32.mrb[0].mxu0
    %3491 = vmatprep.mubr.f32.mxu0 0.0
    %3492 = vmatmul.mubr.f32.gmra.mrb[0].mxu0 %v3420
    %v3493 = vpop.f32.mrb[0].mxu0
    %v3494 = vadd.f32 0.0, %v3493
    %v3495 = vpop.f32.mrb[0].mxu0
    %3496 = vdwg.mxu0
    %3497 = vrot.lane.b32.xlu0 %v173, 80
    %v3498 = vpop.permute.xlu0 %3497
    %3499 = vrot.lane.b32.xlu0 %v179, 80
    %v3500 = vpop.permute.xlu0 %3499
    %v3504 = vsel %vm375, %v3395, 0
    %v3507 = vsel %vm375, %v3397, 0
    %3509 = vmatprep.subr.mxu0 0.0
    %3510 = vmatpush1.msra.mxu0 %v3498
    %3511 = vmatprep.subr.mxu0 0.0
    %3512 = vmatpush1.msra.mxu0 %v3500
    %3513 = vmatprep.subr.mxu0 0.0
    %3514 = vmatpush1.msra.mxu0 0.0
    %3515 = vmatprep.subr.mxu0 0.0
    %3516 = vmatpush1.msra.mxu0 0.0
    %3517 = vmatprep.subr.mxu0 0.0
    %3518 = vmatpush1.msra.mxu0 0.0
    %3519 = vmatprep.subr.mxu0 0.0
    %3520 = vmatpush1.msra.mxu0 0.0
    %3521 = vmatprep.subr.mxu0 0.0
    %3522 = vmatpush1.msra.mxu0 0.0
    %3523 = vmatprep.subr.mxu0 0.0
    %3524 = vmatpush1.msra.mxu0 0.0
    %3525 = vmatprep.subr.mxu0 0.0
    %3526 = vmatpush1.msra.mxu0 0.0
    %3527 = vmatprep.subr.mxu0 0.0
    %3528 = vmatpush1.msra.mxu0 0.0
    %3529 = vmatprep.subr.mxu0 0.0
    %3530 = vmatpush1.msra.mxu0 0.0
    %3531 = vmatprep.subr.mxu0 0.0
    %3532 = vmatpush1.msra.mxu0 0.0
    %3533 = vmatprep.subr.mxu0 0.0
    %3534 = vmatpush1.msra.mxu0 0.0
    %3535 = vmatprep.subr.mxu0 0.0
    %3536 = vmatpush1.msra.mxu0 0.0
    %3537 = vmatprep.subr.mxu0 0.0
    %3538 = vmatpush1.msra.mxu0 0.0
    %3539 = vmatprep.subr.mxu0 0.0
    %3540 = vmatpush1.msra.mxu0 0.0
    %3541 = vmatprep.subr.mxu0 0.0
    %3542 = vmatpush1.msra.mxu0 0.0
    %3543 = vmatprep.subr.mxu0 0.0
    %3544 = vmatpush1.msra.mxu0 0.0
    %3545 = vmatprep.subr.mxu0 0.0
    %3546 = vmatpush1.msra.mxu0 0.0
    %3547 = vmatprep.subr.mxu0 0.0
    %3548 = vmatpush1.msra.mxu0 0.0
    %3549 = vmatprep.subr.mxu0 0.0
    %3550 = vmatpush1.msra.mxu0 0.0
    %3551 = vmatprep.subr.mxu0 0.0
    %3552 = vmatpush1.msra.mxu0 0.0
    %3553 = vmatprep.subr.mxu0 0.0
    %3554 = vmatpush1.msra.mxu0 0.0
    %3555 = vmatprep.subr.mxu0 0.0
    %3556 = vmatpush1.msra.mxu0 0.0
    %3557 = vmatprep.subr.mxu0 0.0
    %3558 = vmatpush1.msra.mxu0 0.0
    %3559 = vmatprep.subr.mxu0 0.0
    %3560 = vmatpush1.msra.mxu0 0.0
    %3561 = vmatprep.subr.mxu0 0.0
    %3562 = vmatpush1.msra.mxu0 0.0
    %3563 = vmatprep.subr.mxu0 0.0
    %3564 = vmatpush1.msra.mxu0 0.0
    %3565 = vmatprep.subr.mxu0 0.0
    %3566 = vmatpush1.msra.mxu0 0.0
    %3567 = vmatprep.subr.mxu0 0.0
    %3568 = vmatpush1.msra.mxu0 0.0
    %3569 = vmatprep.subr.mxu0 0.0
    %3570 = vmatpush1.msra.mxu0 0.0
    %3571 = vmatprep.subr.mxu0 0.0
    %3572 = vmatpush1.msra.mxu0 0.0
    %3573 = vmatprep.mubr.f32.mxu0 0.0
    %3574 = vmatmul.mubr.f32.gmra.mrb[0].mxu0 %v3504
    %v3575 = vpop.f32.mrb[0].mxu0
    %v3576 = vadd.f32 0.0, %v3575
    %v3577 = vpop.f32.mrb[0].mxu0
    %3578 = vmatprep.mubr.f32.mxu0 0.0
    %3579 = vmatmul.mubr.f32.gmra.mrb[0].mxu0 %v3507
    %v3580 = vpop.f32.mrb[0].mxu0
    %v3581 = vadd.f32 0.0, %v3580
    %v3582 = vpop.f32.mrb[0].mxu0
    %3583 = vdwg.mxu0
    %v3584 = vrcp.pop %v3400
    %v3585 = vmul.f32 %v3489, %v3584
    %v3586 = vrcp.pop %v3403
    %v3587 = vmul.f32 %v3494, %v3586
    %v3588 = vrcp.pop %v3406
    %v3589 = vmul.f32 %v3576, %v3588
    %v3590 = vrcp.pop %v3409
    %v3591 = vmul.f32 %v3581, %v3590
    %v3593 = vsel %vm202, %v3585, 0
    %v3596 = vsel %vm202, %v3587, 0
    %v3599 = vsel %vm202, %v3589, 0
    %v3602 = vsel %vm202, %v3591, 0
    %3604 = vmatprep.subr.mxu0 0.0
    %3605 = vmatpush1.msra.mxu0 %v187
    %3606 = vmatprep.subr.mxu0 0.0
    %3607 = vmatpush1.msra.mxu0 0.0
    %3608 = vmatprep.subr.mxu0 0.0
    %3609 = vmatpush1.msra.mxu0 0.0
    %3610 = vmatprep.subr.mxu0 0.0
    %3611 = vmatpush1.msra.mxu0 0.0
    %3612 = vmatprep.subr.mxu0 0.0
    %3613 = vmatpush1.msra.mxu0 0.0
    %3614 = vmatprep.subr.mxu0 0.0
    %3615 = vmatpush1.msra.mxu0 0.0
    %3616 = vmatprep.subr.mxu0 0.0
    %3617 = vmatpush1.msra.mxu0 0.0
    %3618 = vmatprep.subr.mxu0 0.0
    %3619 = vmatpush1.msra.mxu0 0.0
    %3620 = vmatprep.subr.mxu0 0.0
    %3621 = vmatpush1.msra.mxu0 0.0
    %3622 = vmatprep.subr.mxu0 0.0
    %3623 = vmatpush1.msra.mxu0 0.0
    %3624 = vmatprep.subr.mxu0 0.0
    %3625 = vmatpush1.msra.mxu0 0.0
    %3626 = vmatprep.subr.mxu0 0.0
    %3627 = vmatpush1.msra.mxu0 0.0
    %3628 = vmatprep.subr.mxu0 0.0
    %3629 = vmatpush1.msra.mxu0 0.0
    %3630 = vmatprep.subr.mxu0 0.0
    %3631 = vmatpush1.msra.mxu0 0.0
    %3632 = vmatprep.subr.mxu0 0.0
    %3633 = vmatpush1.msra.mxu0 0.0
    %3634 = vmatprep.subr.mxu0 0.0
    %3635 = vmatpush1.msra.mxu0 0.0
    %3636 = vmatprep.subr.mxu0 0.0
    %3637 = vmatpush1.msra.mxu0 0.0
    %3638 = vmatprep.subr.mxu0 0.0
    %3639 = vmatpush1.msra.mxu0 0.0
    %3640 = vmatprep.subr.mxu0 0.0
    %3641 = vmatpush1.msra.mxu0 0.0
    %3642 = vmatprep.subr.mxu0 0.0
    %3643 = vmatpush1.msra.mxu0 0.0
    %3644 = vmatprep.subr.mxu0 0.0
    %3645 = vmatpush1.msra.mxu0 0.0
    %3646 = vmatprep.subr.mxu0 0.0
    %3647 = vmatpush1.msra.mxu0 0.0
    %3648 = vmatprep.subr.mxu0 0.0
    %3649 = vmatpush1.msra.mxu0 0.0
    %3650 = vmatprep.subr.mxu0 0.0
    %3651 = vmatpush1.msra.mxu0 0.0
    %3652 = vmatprep.subr.mxu0 0.0
    %3653 = vmatpush1.msra.mxu0 0.0
    %3654 = vmatprep.subr.mxu0 0.0
    %3655 = vmatpush1.msra.mxu0 0.0
    %3656 = vmatprep.subr.mxu0 0.0
    %3657 = vmatpush1.msra.mxu0 0.0
    %3658 = vmatprep.subr.mxu0 0.0
    %3659 = vmatpush1.msra.mxu0 0.0
    %3660 = vmatprep.subr.mxu0 0.0
    %3661 = vmatpush1.msra.mxu0 0.0
    %3662 = vmatprep.subr.mxu0 0.0
    %3663 = vmatpush1.msra.mxu0 0.0
    %3664 = vmatprep.subr.mxu0 0.0
    %3665 = vmatpush1.msra.mxu0 0.0
    %3666 = vmatprep.subr.mxu0 0.0
    %3667 = vmatpush1.msra.mxu0 0.0
    %3668 = vmatprep.mubr.f32.mxu0 0.0
    %3669 = vmatmul.mubr.f32.gmra.mrb[0].mxu0 %v3593
    %v3670 = vpop.f32.mrb[0].mxu0
    %v3671 = vadd.f32 0.0, %v3670
    %v3672 = vpop.f32.mrb[0].mxu0
    %3673 = vmatprep.mubr.f32.mxu0 0.0
    %3674 = vmatmul.mubr.f32.gmra.mrb[0].mxu0 %v3596
    %v3675 = vpop.f32.mrb[0].mxu0
    %v3676 = vadd.f32 0.0, %v3675
    %v3677 = vpop.f32.mrb[0].mxu0
    %3678 = vmatprep.mubr.f32.mxu0 0.0
    %3679 = vmatmul.mubr.f32.gmra.mrb[0].mxu0 %v3599
    %v3680 = vpop.f32.mrb[0].mxu0
    %v3681 = vadd.f32 0.0, %v3680
    %v3682 = vpop.f32.mrb[0].mxu0
    %3683 = vmatprep.mubr.f32.mxu0 0.0
    %3684 = vmatmul.mubr.f32.gmra.mrb[0].mxu0 %v3602
    %v3685 = vpop.f32.mrb[0].mxu0
    %v3686 = vadd.f32 0.0, %v3685
    %v3687 = vpop.f32.mrb[0].mxu0
    %3688 = vdwg.mxu0
    %v3689 = vadd.f32 %v3188, %v3671
    %v3690 = vadd.f32 %v3189, %v3676
    %v3691 = vadd.f32 %v3190, %v3681
    %v3692 = vadd.f32 %v3191, %v3686
    %3693 = vrot.lane.b32.xlu0 %v159, 72
    %v3694 = vpop.permute.xlu0 %3693
    %3695 = vrot.lane.b32.xlu0 %v165, 72
    %v3696 = vpop.permute.xlu0 %3695
    %3697 = vrot.lane.b32.xlu0 %v159, 8
    %v3698 = vpop.permute.xlu0 %3697
    %3699 = vrot.lane.b32.xlu0 %v165, 8
    %v3700 = vpop.permute.xlu0 %3699
    %v3701 = vsel %vm202, %v3694, 0
    %v3703 = vsel %vm202, %v3696, 0
    %v3705 = vsel %vm202, %v3698, 0
    %v3707 = vsel %vm202, %v3700, 0
    %3709 = vmatprep.subr.mxu0 0.0
    %3710 = vmatpush1.xpose.msra.mxu0 %v3705
    %3711 = vmatprep.subr.mxu0 0.0
    %3712 = vmatpush1.xpose.msra.mxu0 %v3707
    %3713 = vmatprep.subr.mxu0 0.0
    %3714 = vmatpush1.xpose.msra.mxu0 0.0
    %3715 = vmatprep.subr.mxu0 0.0
    %3716 = vmatpush1.xpose.msra.mxu0 0.0
    %3717 = vmatprep.subr.mxu0 0.0
    %3718 = vmatpush1.xpose.msra.mxu0 0.0
    %3719 = vmatprep.subr.mxu0 0.0
    %3720 = vmatpush1.xpose.msra.mxu0 0.0
    %3721 = vmatprep.subr.mxu0 0.0
    %3722 = vmatpush1.xpose.msra.mxu0 0.0
    %3723 = vmatprep.subr.mxu0 0.0
    %3724 = vmatpush1.xpose.msra.mxu0 0.0
    %3725 = vmatprep.subr.mxu0 0.0
    %3726 = vmatpush1.xpose.msra.mxu0 0.0
    %3727 = vmatprep.subr.mxu0 0.0
    %3728 = vmatpush1.xpose.msra.mxu0 0.0
    %3729 = vmatprep.subr.mxu0 0.0
    %3730 = vmatpush1.xpose.msra.mxu0 0.0
    %3731 = vmatprep.subr.mxu0 0.0
    %3732 = vmatpush1.xpose.msra.mxu0 0.0
    %3733 = vmatprep.subr.mxu0 0.0
    %3734 = vmatpush1.xpose.msra.mxu0 0.0
    %3735 = vmatprep.subr.mxu0 0.0
    %3736 = vmatpush1.xpose.msra.mxu0 0.0
    %3737 = vmatprep.subr.mxu0 0.0
    %3738 = vmatpush1.xpose.msra.mxu0 0.0
    %3739 = vmatprep.subr.mxu0 0.0
    %3740 = vmatpush1.xpose.msra.mxu0 0.0
    %3741 = vmatprep.subr.mxu0 0.0
    %3742 = vmatpush1.xpose.msra.mxu0 0.0
    %3743 = vmatprep.subr.mxu0 0.0
    %3744 = vmatpush1.xpose.msra.mxu0 0.0
    %3745 = vmatprep.subr.mxu0 0.0
    %3746 = vmatpush1.xpose.msra.mxu0 0.0
    %3747 = vmatprep.subr.mxu0 0.0
    %3748 = vmatpush1.xpose.msra.mxu0 0.0
    %3749 = vmatprep.subr.mxu0 0.0
    %3750 = vmatpush1.xpose.msra.mxu0 0.0
    %3751 = vmatprep.subr.mxu0 0.0
    %3752 = vmatpush1.xpose.msra.mxu0 0.0
    %3753 = vmatprep.subr.mxu0 0.0
    %3754 = vmatpush1.xpose.msra.mxu0 0.0
    %3755 = vmatprep.subr.mxu0 0.0
    %3756 = vmatpush1.xpose.msra.mxu0 0.0
    %3757 = vmatprep.subr.mxu0 0.0
    %3758 = vmatpush1.xpose.msra.mxu0 0.0
    %3759 = vmatprep.subr.mxu0 0.0
    %3760 = vmatpush1.xpose.msra.mxu0 0.0
    %3761 = vmatprep.subr.mxu0 0.0
    %3762 = vmatpush1.xpose.msra.mxu0 0.0
    %3763 = vmatprep.subr.mxu0 0.0
    %3764 = vmatpush1.xpose.msra.mxu0 0.0
    %3765 = vmatprep.subr.mxu0 0.0
    %3766 = vmatpush1.xpose.msra.mxu0 0.0
    %3767 = vmatprep.subr.mxu0 0.0
    %3768 = vmatpush1.xpose.msra.mxu0 0.0
    %3769 = vmatprep.subr.mxu0 0.0
    %3770 = vmatpush1.xpose.msra.mxu0 0.0
    %3771 = vmatprep.subr.mxu0 0.0
    %3772 = vmatpush1.xpose.msra.mxu0 0.0
    %3773 = vmatprep.mubr.f32.mxu0 0.0
    %3774 = vmatmul.mubr.f32.gmra.mrb[0].mxu0 %v3701
    %v3775 = vpop.f32.mrb[0].mxu0
    %v3776 = vadd.f32 0.0, %v3775
    %v3777 = vpop.f32.mrb[0].mxu0
    %3778 = vmatprep.mubr.f32.mxu0 0.0
    %3779 = vmatmul.mubr.f32.gmra.mrb[0].mxu0 %v3703
    %v3780 = vpop.f32.mrb[0].mxu0
    %v3781 = vadd.f32 0.0, %v3780
    %v3782 = vpop.f32.mrb[0].mxu0
    %3783 = vdwg.mxu0
    %3784 = vrot.lane.b32.xlu0 %v171, 72
    %v3785 = vpop.permute.xlu0 %3784
    %3786 = vrot.lane.b32.xlu0 %v177, 72
    %v3787 = vpop.permute.xlu0 %3786
    %3788 = vrot.lane.b32.xlu0 %v171, 8
    %v3789 = vpop.permute.xlu0 %3788
    %3790 = vrot.lane.b32.xlu0 %v177, 8
    %v3791 = vpop.permute.xlu0 %3790
    %v3792 = vsel %vm202, %v3785, 0
    %v3794 = vsel %vm202, %v3787, 0
    %v3796 = vsel %vm202, %v3789, 0
    %v3798 = vsel %vm202, %v3791, 0
    %3800 = vmatprep.subr.mxu0 0.0
    %3801 = vmatpush1.xpose.msra.mxu0 %v3796
    %3802 = vmatprep.subr.mxu0 0.0
    %3803 = vmatpush1.xpose.msra.mxu0 %v3798
    %3804 = vmatprep.subr.mxu0 0.0
    %3805 = vmatpush1.xpose.msra.mxu0 0.0
    %3806 = vmatprep.subr.mxu0 0.0
    %3807 = vmatpush1.xpose.msra.mxu0 0.0
    %3808 = vmatprep.subr.mxu0 0.0
    %3809 = vmatpush1.xpose.msra.mxu0 0.0
    %3810 = vmatprep.subr.mxu0 0.0
    %3811 = vmatpush1.xpose.msra.mxu0 0.0
    %3812 = vmatprep.subr.mxu0 0.0
    %3813 = vmatpush1.xpose.msra.mxu0 0.0
    %3814 = vmatprep.subr.mxu0 0.0
    %3815 = vmatpush1.xpose.msra.mxu0 0.0
    %3816 = vmatprep.subr.mxu0 0.0
    %3817 = vmatpush1.xpose.msra.mxu0 0.0
    %3818 = vmatprep.subr.mxu0 0.0
    %3819 = vmatpush1.xpose.msra.mxu0 0.0
    %3820 = vmatprep.subr.mxu0 0.0
    %3821 = vmatpush1.xpose.msra.mxu0 0.0
    %3822 = vmatprep.subr.mxu0 0.0
    %3823 = vmatpush1.xpose.msra.mxu0 0.0
    %3824 = vmatprep.subr.mxu0 0.0
    %3825 = vmatpush1.xpose.msra.mxu0 0.0
    %3826 = vmatprep.subr.mxu0 0.0
    %3827 = vmatpush1.xpose.msra.mxu0 0.0
    %3828 = vmatprep.subr.mxu0 0.0
    %3829 = vmatpush1.xpose.msra.mxu0 0.0
    %3830 = vmatprep.subr.mxu0 0.0
    %3831 = vmatpush1.xpose.msra.mxu0 0.0
    %3832 = vmatprep.subr.mxu0 0.0
    %3833 = vmatpush1.xpose.msra.mxu0 0.0
    %3834 = vmatprep.subr.mxu0 0.0
    %3835 = vmatpush1.xpose.msra.mxu0 0.0
    %3836 = vmatprep.subr.mxu0 0.0
    %3837 = vmatpush1.xpose.msra.mxu0 0.0
    %3838 = vmatprep.subr.mxu0 0.0
    %3839 = vmatpush1.xpose.msra.mxu0 0.0
    %3840 = vmatprep.subr.mxu0 0.0
    %3841 = vmatpush1.xpose.msra.mxu0 0.0
    %3842 = vmatprep.subr.mxu0 0.0
    %3843 = vmatpush1.xpose.msra.mxu0 0.0
    %3844 = vmatprep.subr.mxu0 0.0
    %3845 = vmatpush1.xpose.msra.mxu0 0.0
    %3846 = vmatprep.subr.mxu0 0.0
    %3847 = vmatpush1.xpose.msra.mxu0 0.0
    %3848 = vmatprep.subr.mxu0 0.0
    %3849 = vmatpush1.xpose.msra.mxu0 0.0
    %3850 = vmatprep.subr.mxu0 0.0
    %3851 = vmatpush1.xpose.msra.mxu0 0.0
    %3852 = vmatprep.subr.mxu0 0.0
    %3853 = vmatpush1.xpose.msra.mxu0 0.0
    %3854 = vmatprep.subr.mxu0 0.0
    %3855 = vmatpush1.xpose.msra.mxu0 0.0
    %3856 = vmatprep.subr.mxu0 0.0
    %3857 = vmatpush1.xpose.msra.mxu0 0.0
    %3858 = vmatprep.subr.mxu0 0.0
    %3859 = vmatpush1.xpose.msra.mxu0 0.0
    %3860 = vmatprep.subr.mxu0 0.0
    %3861 = vmatpush1.xpose.msra.mxu0 0.0
    %3862 = vmatprep.subr.mxu0 0.0
    %3863 = vmatpush1.xpose.msra.mxu0 0.0
    %3864 = vmatprep.mubr.f32.mxu0 0.0
    %3865 = vmatmul.mubr.f32.gmra.mrb[0].mxu0 %v3792
    %v3866 = vpop.f32.mrb[0].mxu0
    %v3867 = vadd.f32 0.0, %v3866
    %v3868 = vpop.f32.mrb[0].mxu0
    %3869 = vmatprep.mubr.f32.mxu0 0.0
    %3870 = vmatmul.mubr.f32.gmra.mrb[0].mxu0 %v3794
    %v3871 = vpop.f32.mrb[0].mxu0
    %v3872 = vadd.f32 0.0, %v3871
    %v3873 = vpop.f32.mrb[0].mxu0
    %3874 = vdwg.mxu0
    %v3875 = vsel %vm375, %v3776, -inf
    %3876 = vmax.xlane.f32.xlu0 %v3875
    %v3877 = vpop.xlane.xlu0 %3876
    %v3878 = vsel %vm375, %v3781, -inf
    %3879 = vmax.xlane.f32.xlu0 %v3878
    %v3880 = vpop.xlane.xlu0 %3879
    %v3881 = vsel %vm375, %v3867, -inf
    %3882 = vmax.xlane.f32.xlu0 %v3881
    %v3883 = vpop.xlane.xlu0 %3882
    %v3884 = vsel %vm375, %v3872, -inf
    %3885 = vmax.xlane.f32.xlu0 %v3884
    %v3886 = vpop.xlane.xlu0 %3885
    %v3887 = vsub.f32 %v3776, %v3877
    %v3888 = vsub.f32 %v3781, %v3880
    %v3889 = vsub.f32 %v3867, %v3883
    %v3890 = vsub.f32 %v3872, %v3886
    %v3891 = vmul.f32 %v3887, 1.442695
    %v3892 = vpow.pop %v3891
    %v3893 = vmul.f32 %v3888, 1.442695
    %v3894 = vpow.pop %v3893
    %v3895 = vmul.f32 %v3889, 1.442695
    %v3896 = vpow.pop %v3895
    %v3897 = vmul.f32 %v3890, 1.442695
    %v3898 = vpow.pop %v3897
    %v3899 = vsel %vm375, %v3892, 0.0
    %3900 = vadd.xlane.f32.xlu0 %v3899
    %v3901 = vpop.xlane.xlu0 %3900
    %v3902 = vsel %vm375, %v3894, 0.0
    %3903 = vadd.xlane.f32.xlu0 %v3902
    %v3904 = vpop.xlane.xlu0 %3903
    %v3905 = vsel %vm375, %v3896, 0.0
    %3906 = vadd.xlane.f32.xlu0 %v3905
    %v3907 = vpop.xlane.xlu0 %3906
    %v3908 = vsel %vm375, %v3898, 0.0
    %3909 = vadd.xlane.f32.xlu0 %v3908
    %v3910 = vpop.xlane.xlu0 %3909
    %3911 = vrot.lane.b32.xlu0 %v161, 72
    %v3912 = vpop.permute.xlu0 %3911
    %3913 = vrot.lane.b32.xlu0 %v167, 72
    %v3914 = vpop.permute.xlu0 %3913
    %v3918 = vsel %vm375, %v3892, 0
    %v3921 = vsel %vm375, %v3894, 0
    %3923 = vmatprep.subr.mxu0 0.0
    %3924 = vmatpush1.msra.mxu0 %v3912
    %3925 = vmatprep.subr.mxu0 0.0
    %3926 = vmatpush1.msra.mxu0 %v3914
    %3927 = vmatprep.subr.mxu0 0.0
    %3928 = vmatpush1.msra.mxu0 0.0
    %3929 = vmatprep.subr.mxu0 0.0
    %3930 = vmatpush1.msra.mxu0 0.0
    %3931 = vmatprep.subr.mxu0 0.0
    %3932 = vmatpush1.msra.mxu0 0.0
    %3933 = vmatprep.subr.mxu0 0.0
    %3934 = vmatpush1.msra.mxu0 0.0
    %3935 = vmatprep.subr.mxu0 0.0
    %3936 = vmatpush1.msra.mxu0 0.0
    %3937 = vmatprep.subr.mxu0 0.0
    %3938 = vmatpush1.msra.mxu0 0.0
    %3939 = vmatprep.subr.mxu0 0.0
    %3940 = vmatpush1.msra.mxu0 0.0
    %3941 = vmatprep.subr.mxu0 0.0
    %3942 = vmatpush1.msra.mxu0 0.0
    %3943 = vmatprep.subr.mxu0 0.0
    %3944 = vmatpush1.msra.mxu0 0.0
    %3945 = vmatprep.subr.mxu0 0.0
    %3946 = vmatpush1.msra.mxu0 0.0
    %3947 = vmatprep.subr.mxu0 0.0
    %3948 = vmatpush1.msra.mxu0 0.0
    %3949 = vmatprep.subr.mxu0 0.0
    %3950 = vmatpush1.msra.mxu0 0.0
    %3951 = vmatprep.subr.mxu0 0.0
    %3952 = vmatpush1.msra.mxu0 0.0
    %3953 = vmatprep.subr.mxu0 0.0
    %3954 = vmatpush1.msra.mxu0 0.0
    %3955 = vmatprep.subr.mxu0 0.0
    %3956 = vmatpush1.msra.mxu0 0.0
    %3957 = vmatprep.subr.mxu0 0.0
    %3958 = vmatpush1.msra.mxu0 0.0
    %3959 = vmatprep.subr.mxu0 0.0
    %3960 = vmatpush1.msra.mxu0 0.0
    %3961 = vmatprep.subr.mxu0 0.0
    %3962 = vmatpush1.msra.mxu0 0.0
    %3963 = vmatprep.subr.mxu0 0.0
    %3964 = vmatpush1.msra.mxu0 0.0
    %3965 = vmatprep.subr.mxu0 0.0
    %3966 = vmatpush1.msra.mxu0 0.0
    %3967 = vmatprep.subr.mxu0 0.0
    %3968 = vmatpush1.msra.mxu0 0.0
    %3969 = vmatprep.subr.mxu0 0.0
    %3970 = vmatpush1.msra.mxu0 0.0
    %3971 = vmatprep.subr.mxu0 0.0
    %3972 = vmatpush1.msra.mxu0 0.0
    %3973 = vmatprep.subr.mxu0 0.0
    %3974 = vmatpush1.msra.mxu0 0.0
    %3975 = vmatprep.subr.mxu0 0.0
    %3976 = vmatpush1.msra.mxu0 0.0
    %3977 = vmatprep.subr.mxu0 0.0
    %3978 = vmatpush1.msra.mxu0 0.0
    %3979 = vmatprep.subr.mxu0 0.0
    %3980 = vmatpush1.msra.mxu0 0.0
    %3981 = vmatprep.subr.mxu0 0.0
    %3982 = vmatpush1.msra.mxu0 0.0
    %3983 = vmatprep.subr.mxu0 0.0
    %3984 = vmatpush1.msra.mxu0 0.0
    %3985 = vmatprep.subr.mxu0 0.0
    %3986 = vmatpush1.msra.mxu0 0.0
    %3987 = vmatprep.mubr.f32.mxu0 0.0
    %3988 = vmatmul.mubr.f32.gmra.mrb[0].mxu0 %v3918
    %v3989 = vpop.f32.mrb[0].mxu0
    %v3990 = vadd.f32 0.0, %v3989
    %v3991 = vpop.f32.mrb[0].mxu0
    %3992 = vmatprep.mubr.f32.mxu0 0.0
    %3993 = vmatmul.mubr.f32.gmra.mrb[0].mxu0 %v3921
    %v3994 = vpop.f32.mrb[0].mxu0
    %v3995 = vadd.f32 0.0, %v3994
    %v3996 = vpop.f32.mrb[0].mxu0
    %3997 = vdwg.mxu0
    %3998 = vrot.lane.b32.xlu0 %v173, 72
    %v3999 = vpop.permute.xlu0 %3998
    %4000 = vrot.lane.b32.xlu0 %v179, 72
    %v4001 = vpop.permute.xlu0 %4000
    %v4005 = vsel %vm375, %v3896, 0
    %v4008 = vsel %vm375, %v3898, 0
    %4010 = vmatprep.subr.mxu0 0.0
    %4011 = vmatpush1.msra.mxu0 %v3999
    %4012 = vmatprep.subr.mxu0 0.0
    %4013 = vmatpush1.msra.mxu0 %v4001
    %4014 = vmatprep.subr.mxu0 0.0
    %4015 = vmatpush1.msra.mxu0 0.0
    %4016 = vmatprep.subr.mxu0 0.0
    %4017 = vmatpush1.msra.mxu0 0.0
    %4018 = vmatprep.subr.mxu0 0.0
    %4019 = vmatpush1.msra.mxu0 0.0
    %4020 = vmatprep.subr.mxu0 0.0
    %4021 = vmatpush1.msra.mxu0 0.0
    %4022 = vmatprep.subr.mxu0 0.0
    %4023 = vmatpush1.msra.mxu0 0.0
    %4024 = vmatprep.subr.mxu0 0.0
    %4025 = vmatpush1.msra.mxu0 0.0
    %4026 = vmatprep.subr.mxu0 0.0
    %4027 = vmatpush1.msra.mxu0 0.0
    %4028 = vmatprep.subr.mxu0 0.0
    %4029 = vmatpush1.msra.mxu0 0.0
    %4030 = vmatprep.subr.mxu0 0.0
    %4031 = vmatpush1.msra.mxu0 0.0
    %4032 = vmatprep.subr.mxu0 0.0
    %4033 = vmatpush1.msra.mxu0 0.0
    %4034 = vmatprep.subr.mxu0 0.0
    %4035 = vmatpush1.msra.mxu0 0.0
    %4036 = vmatprep.subr.mxu0 0.0
    %4037 = vmatpush1.msra.mxu0 0.0
    %4038 = vmatprep.subr.mxu0 0.0
    %4039 = vmatpush1.msra.mxu0 0.0
    %4040 = vmatprep.subr.mxu0 0.0
    %4041 = vmatpush1.msra.mxu0 0.0
    %4042 = vmatprep.subr.mxu0 0.0
    %4043 = vmatpush1.msra.mxu0 0.0
    %4044 = vmatprep.subr.mxu0 0.0
    %4045 = vmatpush1.msra.mxu0 0.0
    %4046 = vmatprep.subr.mxu0 0.0
    %4047 = vmatpush1.msra.mxu0 0.0
    %4048 = vmatprep.subr.mxu0 0.0
    %4049 = vmatpush1.msra.mxu0 0.0
    %4050 = vmatprep.subr.mxu0 0.0
    %4051 = vmatpush1.msra.mxu0 0.0
    %4052 = vmatprep.subr.mxu0 0.0
    %4053 = vmatpush1.msra.mxu0 0.0
    %4054 = vmatprep.subr.mxu0 0.0
    %4055 = vmatpush1.msra.mxu0 0.0
    %4056 = vmatprep.subr.mxu0 0.0
    %4057 = vmatpush1.msra.mxu0 0.0
    %4058 = vmatprep.subr.mxu0 0.0
    %4059 = vmatpush1.msra.mxu0 0.0
    %4060 = vmatprep.subr.mxu0 0.0
    %4061 = vmatpush1.msra.mxu0 0.0
    %4062 = vmatprep.subr.mxu0 0.0
    %4063 = vmatpush1.msra.mxu0 0.0
    %4064 = vmatprep.subr.mxu0 0.0
    %4065 = vmatpush1.msra.mxu0 0.0
    %4066 = vmatprep.subr.mxu0 0.0
    %4067 = vmatpush1.msra.mxu0 0.0
    %4068 = vmatprep.subr.mxu0 0.0
    %4069 = vmatpush1.msra.mxu0 0.0
    %4070 = vmatprep.subr.mxu0 0.0
    %4071 = vmatpush1.msra.mxu0 0.0
    %4072 = vmatprep.subr.mxu0 0.0
    %4073 = vmatpush1.msra.mxu0 0.0
    %4074 = vmatprep.mubr.f32.mxu0 0.0
    %4075 = vmatmul.mubr.f32.gmra.mrb[0].mxu0 %v4005
    %v4076 = vpop.f32.mrb[0].mxu0
    %v4077 = vadd.f32 0.0, %v4076
    %v4078 = vpop.f32.mrb[0].mxu0
    %4079 = vmatprep.mubr.f32.mxu0 0.0
    %4080 = vmatmul.mubr.f32.gmra.mrb[0].mxu0 %v4008
    %v4081 = vpop.f32.mrb[0].mxu0
    %v4082 = vadd.f32 0.0, %v4081
    %v4083 = vpop.f32.mrb[0].mxu0
    %4084 = vdwg.mxu0
    %v4085 = vrcp.pop %v3901
    %v4086 = vmul.f32 %v3990, %v4085
    %v4087 = vrcp.pop %v3904
    %v4088 = vmul.f32 %v3995, %v4087
    %v4089 = vrcp.pop %v3907
    %v4090 = vmul.f32 %v4077, %v4089
    %v4091 = vrcp.pop %v3910
    %v4092 = vmul.f32 %v4082, %v4091
    %v4094 = vsel %vm202, %v4086, 0
    %v4097 = vsel %vm202, %v4088, 0
    %v4100 = vsel %vm202, %v4090, 0
    %v4103 = vsel %vm202, %v4092, 0
    %4105 = vmatprep.subr.mxu0 0.0
    %4106 = vmatpush1.msra.mxu0 %v188
    %4107 = vmatprep.subr.mxu0 0.0
    %4108 = vmatpush1.msra.mxu0 0.0
    %4109 = vmatprep.subr.mxu0 0.0
    %4110 = vmatpush1.msra.mxu0 0.0
    %4111 = vmatprep.subr.mxu0 0.0
    %4112 = vmatpush1.msra.mxu0 0.0
    %4113 = vmatprep.subr.mxu0 0.0
    %4114 = vmatpush1.msra.mxu0 0.0
    %4115 = vmatprep.subr.mxu0 0.0
    %4116 = vmatpush1.msra.mxu0 0.0
    %4117 = vmatprep.subr.mxu0 0.0
    %4118 = vmatpush1.msra.mxu0 0.0
    %4119 = vmatprep.subr.mxu0 0.0
    %4120 = vmatpush1.msra.mxu0 0.0
    %4121 = vmatprep.subr.mxu0 0.0
    %4122 = vmatpush1.msra.mxu0 0.0
    %4123 = vmatprep.subr.mxu0 0.0
    %4124 = vmatpush1.msra.mxu0 0.0
    %4125 = vmatprep.subr.mxu0 0.0
    %4126 = vmatpush1.msra.mxu0 0.0
    %4127 = vmatprep.subr.mxu0 0.0
    %4128 = vmatpush1.msra.mxu0 0.0
    %4129 = vmatprep.subr.mxu0 0.0
    %4130 = vmatpush1.msra.mxu0 0.0
    %4131 = vmatprep.subr.mxu0 0.0
    %4132 = vmatpush1.msra.mxu0 0.0
    %4133 = vmatprep.subr.mxu0 0.0
    %4134 = vmatpush1.msra.mxu0 0.0
    %4135 = vmatprep.subr.mxu0 0.0
    %4136 = vmatpush1.msra.mxu0 0.0
    %4137 = vmatprep.subr.mxu0 0.0
    %4138 = vmatpush1.msra.mxu0 0.0
    %4139 = vmatprep.subr.mxu0 0.0
    %4140 = vmatpush1.msra.mxu0 0.0
    %4141 = vmatprep.subr.mxu0 0.0
    %4142 = vmatpush1.msra.mxu0 0.0
    %4143 = vmatprep.subr.mxu0 0.0
    %4144 = vmatpush1.msra.mxu0 0.0
    %4145 = vmatprep.subr.mxu0 0.0
    %4146 = vmatpush1.msra.mxu0 0.0
    %4147 = vmatprep.subr.mxu0 0.0
    %4148 = vmatpush1.msra.mxu0 0.0
    %4149 = vmatprep.subr.mxu0 0.0
    %4150 = vmatpush1.msra.mxu0 0.0
    %4151 = vmatprep.subr.mxu0 0.0
    %4152 = vmatpush1.msra.mxu0 0.0
    %4153 = vmatprep.subr.mxu0 0.0
    %4154 = vmatpush1.msra.mxu0 0.0
    %4155 = vmatprep.subr.mxu0 0.0
    %4156 = vmatpush1.msra.mxu0 0.0
    %4157 = vmatprep.subr.mxu0 0.0
    %4158 = vmatpush1.msra.mxu0 0.0
    %4159 = vmatprep.subr.mxu0 0.0
    %4160 = vmatpush1.msra.mxu0 0.0
    %4161 = vmatprep.subr.mxu0 0.0
    %4162 = vmatpush1.msra.mxu0 0.0
    %4163 = vmatprep.subr.mxu0 0.0
    %4164 = vmatpush1.msra.mxu0 0.0
    %4165 = vmatprep.subr.mxu0 0.0
    %4166 = vmatpush1.msra.mxu0 0.0
    %4167 = vmatprep.subr.mxu0 0.0
    %4168 = vmatpush1.msra.mxu0 0.0
    %4169 = vmatprep.mubr.f32.mxu0 0.0
    %4170 = vmatmul.mubr.f32.gmra.mrb[0].mxu0 %v4094
    %v4171 = vpop.f32.mrb[0].mxu0
    %v4172 = vadd.f32 0.0, %v4171
    %v4173 = vpop.f32.mrb[0].mxu0
    %4174 = vmatprep.mubr.f32.mxu0 0.0
    %4175 = vmatmul.mubr.f32.gmra.mrb[0].mxu0 %v4097
    %v4176 = vpop.f32.mrb[0].mxu0
    %v4177 = vadd.f32 0.0, %v4176
    %v4178 = vpop.f32.mrb[0].mxu0
    %4179 = vmatprep.mubr.f32.mxu0 0.0
    %4180 = vmatmul.mubr.f32.gmra.mrb[0].mxu0 %v4100
    %v4181 = vpop.f32.mrb[0].mxu0
    %v4182 = vadd.f32 0.0, %v4181
    %v4183 = vpop.f32.mrb[0].mxu0
    %4184 = vmatprep.mubr.f32.mxu0 0.0
    %4185 = vmatmul.mubr.f32.gmra.mrb[0].mxu0 %v4103
    %v4186 = vpop.f32.mrb[0].mxu0
    %v4187 = vadd.f32 0.0, %v4186
    %v4188 = vpop.f32.mrb[0].mxu0
    %4189 = vdwg.mxu0
    %v4190 = vadd.f32 %v3689, %v4172
    %v4191 = vadd.f32 %v3690, %v4177
    %v4192 = vadd.f32 %v3691, %v4182
    %v4193 = vadd.f32 %v3692, %v4187
    %4194 = vst.msk [vmem:[#allocation8] sm:$0xff] %vm79, %v4190
    %4195 = vst.msk [vmem:[#allocation8 + $0x8] sm:$0xff] %vm79, %v4191
    %4196 = vst.msk [vmem:[#allocation8 + $0x10] sm:$0xff] %vm79, %v4192
    %4197 = vst.msk [vmem:[#allocation8 + $0x18] sm:$0xff] %vm79, %v4193
    // Predicated region
    $region30: #{tpu_custom_call.1} parent=1 // pred_check
      _
    $region31: #{tpu_custom_call.1} parent=1 // pred_check_branch
      %4199 = sbr.rel (0) target = $region33
    $region32: #{tpu_custom_call.1} parent=1 // pred_region
      %s4201 = ssub.s32 512, 512
      %4202 = vsyncadd [#allocation4], %s4201
      %s4203 = sshll.u32 [#allocation8], 4
      %s4204 = int_to_ptr.vmem [resolvable:$true] %s4203
      %4209 = dma.vmem_to_hbm [thread:$0]  %s4204, 512, %s4, [#allocation4], 128, 128, 8
    $region33: #{tpu_custom_call.1} parent=1 // pred_fallthru
      _
    // Predicated region
    $region34: #{tpu_custom_call.1} parent=1 // pred_check
      _
    $region35: #{tpu_custom_call.1} parent=1 // pred_check_branch
      %4211 = sbr.rel (0) target = $region37
    $region36: #{tpu_custom_call.1} parent=1 // pred_region
      %4212 = dma.done [#allocation4], 512
    $region37: #{tpu_custom_call.1} parent=1 // pred_fallthru
      _
    %4213 = vsyncpa [#allocation3], 1
    %4214 = vsyncpa [#allocation6], 1
    %4215 = vsyncpa [#allocation4], 1

</llo_original>
